<compile_context>
chip_gen: v7x
topology: tpu7x:2x2x1
jax: 0.10.0
libtpu: 0.0.40
codegen_flags: <defaults>
</compile_context>

<pallas_src>
import numpy as np
import jax
import jax.numpy as jnp
from jax.experimental import pallas as pl
from jax.experimental.pallas import tpu as pltpu


def _round_up(x, m):
    return (x + m - 1) // m * m


def _sigmoid(x):
    return 1.0 / (1.0 + jnp.exp(-x))


def lstm_pool_kernel(seq_ref, seq_e_ref, seq_t_ref, src_ref,
                     w_seq_ref, w_e_ref, w_t_ref, w_hh_ref, b_ref,
                     w1h_ref, w1s_ref, b1_ref, w2_ref, b2_ref,
                     out_ref):
    # seq_ref:   (TB, L, F)   seq_e_ref: (TB, L, E)   seq_t_ref: (TB, L, T)
    # src_ref:   (TB, F)
    # w_seq/w_e/w_t: (F/E/T, 4H)   w_hh: (H, 4H)   b: (1, 4H)
    # w1h/w1s/w2: (H, F)           b1/b2: (1, F)
    # out_ref:   (TB, F)
    tile_b, seq_len, _ = seq_ref.shape
    hidden = w_hh_ref.shape[0]

    w_seq = w_seq_ref[...]
    w_e = w_e_ref[...]
    w_t = w_t_ref[...]
    w_hh = w_hh_ref[...]
    b = b_ref[...]

    h = jnp.zeros((tile_b, hidden), jnp.float32)
    c = jnp.zeros((tile_b, hidden), jnp.float32)

    # Unrolled recurrence over the static sequence length (short fixed trip
    # count -> full visibility for the LLO scheduler).
    for t in range(seq_len):
        gates = (
            jnp.dot(seq_ref[:, t, :], w_seq, preferred_element_type=jnp.float32)
            + jnp.dot(seq_e_ref[:, t, :], w_e, preferred_element_type=jnp.float32)
            + jnp.dot(seq_t_ref[:, t, :], w_t, preferred_element_type=jnp.float32)
            + jnp.dot(h, w_hh, preferred_element_type=jnp.float32)
            + b
        )  # (TB, 4H), PyTorch gate order [i, f, g, o]
        i_g = _sigmoid(gates[:, 0 * hidden:1 * hidden])
        f_g = _sigmoid(gates[:, 1 * hidden:2 * hidden])
        g_g = jnp.tanh(gates[:, 2 * hidden:3 * hidden])
        o_g = _sigmoid(gates[:, 3 * hidden:4 * hidden])
        c = f_g * c + i_g * g_g
        h = o_g * jnp.tanh(c)

    # Fused MergeLayer: fc2(relu(cat([hn, src], 1) @ W1^T + b1)) + b2
    hid = jnp.maximum(
        jnp.dot(h, w1h_ref[...], preferred_element_type=jnp.float32)
        + jnp.dot(src_ref[...], w1s_ref[...], preferred_element_type=jnp.float32)
        + b1_ref[...],
        0.0,
    )
    out_ref[...] = (
        jnp.dot(hid, w2_ref[...], preferred_element_type=jnp.float32) + b2_ref[...]
    ).astype(out_ref.dtype)


def lstm_pool_forward(src, src_t, seq, seq_t, seq_e, mask, params, *, tile_b=128):
    """Pallas LSTMPool forward.  Returns (out, None) like the PyTorch module."""
    # src_t and mask are accepted for API parity but unused by the reference forward.
    del src_t, mask

    B, L, F = seq.shape
    E = seq_e.shape[-1]
    T = seq_t.shape[-1]
    H = F  # hidden_size == feat_dim in LSTMPool

    # --- prepare weights (transposed to [in, out] layout, split per input group) ---
    w_ih_T = params["w_ih_T"].astype(jnp.float32)            # (F+E+T, 4H)
    w_hh_T = params["w_hh_T"].astype(jnp.float32)            # (H, 4H)
    b_lstm = (params["b_ih"] + params["b_hh"]).reshape(1, 4 * H).astype(jnp.float32)
    w_seq = w_ih_T[:F]
    w_e = w_ih_T[F:F + E]
    w_t = w_ih_T[F + E:]

    w1_T = params["w1_T"].astype(jnp.float32)                # (2F, F)
    w1h, w1s = w1_T[:H], w1_T[H:]
    b1 = params["b1"].reshape(1, F).astype(jnp.float32)
    w2 = params["w2_T"].astype(jnp.float32)                  # (F, F)
    b2 = params["b2"].reshape(1, F).astype(jnp.float32)

    # --- tile the batch axis (multiple of 8 sublanes), pad if needed ---
    tile_b = min(tile_b, _round_up(B, 8))
    Bp = _round_up(B, tile_b)
    seq = seq.astype(jnp.float32)
    seq_e = seq_e.astype(jnp.float32)
    seq_t = seq_t.astype(jnp.float32)
    src = src.astype(jnp.float32)
    if Bp != B:
        seq = jnp.pad(seq, ((0, Bp - B), (0, 0), (0, 0)))
        seq_e = jnp.pad(seq_e, ((0, Bp - B), (0, 0), (0, 0)))
        seq_t = jnp.pad(seq_t, ((0, Bp - B), (0, 0), (0, 0)))
        src = jnp.pad(src, ((0, Bp - B), (0, 0)))

    grid = (Bp // tile_b,)

    data_specs = [
        pl.BlockSpec((tile_b, L, F), lambda i: (i, 0, 0)),
        pl.BlockSpec((tile_b, L, E), lambda i: (i, 0, 0)),
        pl.BlockSpec((tile_b, L, T), lambda i: (i, 0, 0)),
        pl.BlockSpec((tile_b, F), lambda i: (i, 0)),
    ]
    weight_args = [w_seq, w_e, w_t, w_hh_T, b_lstm, w1h, w1s, b1, w2, b2]
    weight_specs = [pl.BlockSpec(w.shape, lambda i: (0, 0)) for w in weight_args]

    att = F + E + T
    flops = 2 * Bp * L * (att * 4 * H + H * 4 * H) + 2 * Bp * (2 * F * F + F * F)
    transcendentals = Bp * L * 5 * H                     # 3 sigmoid + 2 tanh per cell
    bytes_accessed = 4 * (Bp * L * att + 2 * Bp * F
                          + att * 4 * H + H * 4 * H + 4 * H + 3 * F * F + 2 * F)

    out = pl.pallas_call(
        lstm_pool_kernel,
        out_shape=jax.ShapeDtypeStruct((Bp, F), jnp.float32),
        grid=grid,
        in_specs=data_specs + weight_specs,
        out_specs=pl.BlockSpec((tile_b, F), lambda i: (i, 0)),
        compiler_params=pltpu.CompilerParams(
            dimension_semantics=("parallel",),
        ),
        cost_estimate=pl.CostEstimate(
            flops=flops,
            transcendentals=transcendentals,
            bytes_accessed=bytes_accessed,
        ),
    )(seq, seq_e, seq_t, src, *weight_args)

    return out[:B], None


# ---------------- pure-JAX reference (same math as the PyTorch forward) ----------------
def lstm_pool_ref(src, seq, seq_t, seq_e, params):
    x = jnp.concatenate([seq, seq_e, seq_t], axis=2)          # (B, L, att)
    B = x.shape[0]
    H = params["w_hh_T"].shape[0]
    w_ih_T = params["w_ih_T"]
    w_hh_T = params["w_hh_T"]
    b = params["b_ih"] + params["b_hh"]

    def step(carry, xt):
        h, c = carry
        gates = xt @ w_ih_T + h @ w_hh_T + b
        i_g = _sigmoid(gates[:, 0 * H:1 * H])
        f_g = _sigmoid(gates[:, 1 * H:2 * H])
        g_g = jnp.tanh(gates[:, 2 * H:3 * H])
        o_g = _sigmoid(gates[:, 3 * H:4 * H])
        c = f_g * c + i_g * g_g
        h = o_g * jnp.tanh(c)
        return (h, c), None

    h0 = jnp.zeros((B, H), jnp.float32)
    c0 = jnp.zeros((B, H), jnp.float32)
    (hn, _), _ = jax.lax.scan(step, (h0, c0), jnp.swapaxes(x, 0, 1))

    xm = jnp.concatenate([hn, src], axis=1)
    hid = jnp.maximum(xm @ params["w1_T"] + params["b1"], 0.0)
    return hid @ params["w2_T"] + params["b2"]


if __name__ == "__main__":
    B, L = 8, 8
    feat_dim, edge_dim, time_dim = 32, 16, 16
    H = feat_dim
    att = feat_dim + edge_dim + time_dim

    key = jax.random.PRNGKey(0)
    ks = jax.random.split(key, 12)
    src = jax.random.normal(ks[0], (B, feat_dim), jnp.float32)
    src_t = jax.random.normal(ks[1], (B, time_dim), jnp.float32)   # unused by forward
    seq = jax.random.normal(ks[2], (B, L, feat_dim), jnp.float32)
    seq_t = jax.random.normal(ks[3], (B, L, time_dim), jnp.float32)
    seq_e = jax.random.normal(ks[4], (B, L, edge_dim), jnp.float32)
    mask = jnp.zeros((B, L), jnp.float32)                          # unused by forward

    s_ih = 1.0 / np.sqrt(att)
    s_hh = 1.0 / np.sqrt(H)
    params = dict(
        w_ih_T=jax.random.normal(ks[5], (att, 4 * H), jnp.float32) * s_ih,
        w_hh_T=jax.random.normal(ks[6], (H, 4 * H), jnp.float32) * s_hh,
        b_ih=jax.random.normal(ks[7], (4 * H,), jnp.float32) * s_hh,
        b_hh=jnp.zeros((4 * H,), jnp.float32),
        w1_T=jax.random.normal(ks[8], (2 * feat_dim, feat_dim), jnp.float32)
        / np.sqrt(2 * feat_dim),
        b1=jax.random.normal(ks[9], (feat_dim,), jnp.float32) * 0.1,
        w2_T=jax.random.normal(ks[10], (feat_dim, feat_dim), jnp.float32)
        / np.sqrt(feat_dim),
        b2=jax.random.normal(ks[11], (feat_dim,), jnp.float32) * 0.1,
    )

    out, none_val = lstm_pool_forward(src, src_t, seq, seq_t, seq_e, mask, params)
    out = jax.block_until_ready(out)

    ref = lstm_pool_ref(src, seq, seq_t, seq_e, params)
    assert out.shape == (B, feat_dim)
    assert none_val is None
    np.testing.assert_allclose(np.asarray(out), np.asarray(ref), rtol=1e-3, atol=1e-3)

    print("KERNEL_OK")
</pallas_src>

<mosaic_0001>
module attributes {stable_mosaic.version = 11 : i64} {
  func.func @lstm_pool_kernel(%arg0: i32, %arg1: memref<8x8x32xf32, #tpu.memory_space<vmem>>, %arg2: memref<8x8x16xf32, #tpu.memory_space<vmem>>, %arg3: memref<8x8x16xf32, #tpu.memory_space<vmem>>, %arg4: memref<8x32xf32, #tpu.memory_space<vmem>>, %arg5: memref<32x128xf32, #tpu.memory_space<vmem>>, %arg6: memref<16x128xf32, #tpu.memory_space<vmem>>, %arg7: memref<16x128xf32, #tpu.memory_space<vmem>>, %arg8: memref<32x128xf32, #tpu.memory_space<vmem>>, %arg9: memref<1x128xf32, #tpu.memory_space<vmem>>, %arg10: memref<32x32xf32, #tpu.memory_space<vmem>>, %arg11: memref<32x32xf32, #tpu.memory_space<vmem>>, %arg12: memref<1x32xf32, #tpu.memory_space<vmem>>, %arg13: memref<32x32xf32, #tpu.memory_space<vmem>>, %arg14: memref<1x32xf32, #tpu.memory_space<vmem>>, %arg15: memref<8x32xf32, #tpu.memory_space<vmem>>) attributes {dimension_semantics = [#tpu.dimension_semantics<parallel>], iteration_bounds = array<i64: 1>, scalar_prefetch = 0 : i64, scratch_operands = 0 : i64, tpu.core_type = #tpu.core_type<tc>, window_params = [{transform_indices = @transform_0, window_bounds = array<i64: 8, 8, 32>}, {transform_indices = @transform_1, window_bounds = array<i64: 8, 8, 16>}, {transform_indices = @transform_2, window_bounds = array<i64: 8, 8, 16>}, {transform_indices = @transform_3, window_bounds = array<i64: 8, 32>}, {pipeline_mode = #tpu.pipeline_mode<synchronous>, transform_indices = @transform_4, window_bounds = array<i64: 32, 128>}, {pipeline_mode = #tpu.pipeline_mode<synchronous>, transform_indices = @transform_5, window_bounds = array<i64: 16, 128>}, {pipeline_mode = #tpu.pipeline_mode<synchronous>, transform_indices = @transform_6, window_bounds = array<i64: 16, 128>}, {pipeline_mode = #tpu.pipeline_mode<synchronous>, transform_indices = @transform_7, window_bounds = array<i64: 32, 128>}, {pipeline_mode = #tpu.pipeline_mode<synchronous>, transform_indices = @transform_8, window_bounds = array<i64: 1, 128>}, {pipeline_mode = #tpu.pipeline_mode<synchronous>, transform_indices = @transform_9, window_bounds = array<i64: 32, 32>}, {pipeline_mode = #tpu.pipeline_mode<synchronous>, transform_indices = @transform_10, window_bounds = array<i64: 32, 32>}, {pipeline_mode = #tpu.pipeline_mode<synchronous>, transform_indices = @transform_11, window_bounds = array<i64: 1, 32>}, {pipeline_mode = #tpu.pipeline_mode<synchronous>, transform_indices = @transform_12, window_bounds = array<i64: 32, 32>}, {pipeline_mode = #tpu.pipeline_mode<synchronous>, transform_indices = @transform_13, window_bounds = array<i64: 1, 32>}, {transform_indices = @transform_14, window_bounds = array<i64: 8, 32>}]} {
    %c0 = arith.constant 0 : index
    %c0_0 = arith.constant 0 : index
    %0 = vector.load %arg5[%c0, %c0_0] : memref<32x128xf32, #tpu.memory_space<vmem>>, vector<32x128xf32>
    %c0_1 = arith.constant 0 : index
    %c0_2 = arith.constant 0 : index
    %1 = vector.load %arg6[%c0_1, %c0_2] : memref<16x128xf32, #tpu.memory_space<vmem>>, vector<16x128xf32>
    %c0_3 = arith.constant 0 : index
    %c0_4 = arith.constant 0 : index
    %2 = vector.load %arg7[%c0_3, %c0_4] : memref<16x128xf32, #tpu.memory_space<vmem>>, vector<16x128xf32>
    %c0_5 = arith.constant 0 : index
    %c0_6 = arith.constant 0 : index
    %3 = vector.load %arg8[%c0_5, %c0_6] : memref<32x128xf32, #tpu.memory_space<vmem>>, vector<32x128xf32>
    %c0_7 = arith.constant 0 : index
    %c0_8 = arith.constant 0 : index
    %4 = vector.load %arg9[%c0_7, %c0_8] : memref<1x128xf32, #tpu.memory_space<vmem>>, vector<1x128xf32>
    %cst = arith.constant 0.000000e+00 : f32
    %5 = vector.broadcast %cst : f32 to vector<8x32xf32>
    %cst_9 = arith.constant 0.000000e+00 : f32
    %6 = vector.broadcast %cst_9 : f32 to vector<8x32xf32>
    %c0_10 = arith.constant 0 : index
    %c0_11 = arith.constant 0 : index
    %c0_12 = arith.constant 0 : index
    %7 = vector.load %arg1[%c0_10, %c0_11, %c0_12] : memref<8x8x32xf32, #tpu.memory_space<vmem>>, vector<8x1x32xf32>
    %8 = vector.shape_cast %7 : vector<8x1x32xf32> to vector<8x32xf32>
    %cst_13 = arith.constant dense<0.000000e+00> : vector<8x128xf32>
    %9 = tpu.matmul %8, %0, %cst_13 {dimension_numbers = #tpu.dot_dimension_numbers<[1], [0], [0], [1], [0, 0, 1, 1], [], []>} : vector<8x32xf32>, vector<32x128xf32>, vector<8x128xf32> -> vector<8x128xf32>
    %c0_14 = arith.constant 0 : index
    %c0_15 = arith.constant 0 : index
    %c0_16 = arith.constant 0 : index
    %10 = vector.load %arg2[%c0_14, %c0_15, %c0_16] : memref<8x8x16xf32, #tpu.memory_space<vmem>>, vector<8x1x16xf32>
    %11 = vector.shape_cast %10 : vector<8x1x16xf32> to vector<8x16xf32>
    %cst_17 = arith.constant dense<0.000000e+00> : vector<8x128xf32>
    %12 = tpu.matmul %11, %1, %cst_17 {dimension_numbers = #tpu.dot_dimension_numbers<[1], [0], [0], [1], [0, 0, 1, 1], [], []>} : vector<8x16xf32>, vector<16x128xf32>, vector<8x128xf32> -> vector<8x128xf32>
    %13 = arith.addf %9, %12 : vector<8x128xf32>
    %c0_18 = arith.constant 0 : index
    %c0_19 = arith.constant 0 : index
    %c0_20 = arith.constant 0 : index
    %14 = vector.load %arg3[%c0_18, %c0_19, %c0_20] : memref<8x8x16xf32, #tpu.memory_space<vmem>>, vector<8x1x16xf32>
    %15 = vector.shape_cast %14 : vector<8x1x16xf32> to vector<8x16xf32>
    %cst_21 = arith.constant dense<0.000000e+00> : vector<8x128xf32>
    %16 = tpu.matmul %15, %2, %cst_21 {dimension_numbers = #tpu.dot_dimension_numbers<[1], [0], [0], [1], [0, 0, 1, 1], [], []>} : vector<8x16xf32>, vector<16x128xf32>, vector<8x128xf32> -> vector<8x128xf32>
    %17 = arith.addf %13, %16 : vector<8x128xf32>
    %cst_22 = arith.constant dense<0.000000e+00> : vector<8x128xf32>
    %18 = tpu.matmul %5, %3, %cst_22 {dimension_numbers = #tpu.dot_dimension_numbers<[1], [0], [0], [1], [0, 0, 1, 1], [], []>} : vector<8x32xf32>, vector<32x128xf32>, vector<8x128xf32> -> vector<8x128xf32>
    %19 = arith.addf %17, %18 : vector<8x128xf32>
    %20 = vector.broadcast %4 : vector<1x128xf32> to vector<8x128xf32>
    %21 = arith.addf %19, %20 : vector<8x128xf32>
    %22 = vector.extract_strided_slice %21 {offsets = [0, 0], sizes = [8, 32], strides = [1, 1]} : vector<8x128xf32> to vector<8x32xf32>
    %cst_23 = arith.constant 0.000000e+00 : f32
    %23 = vector.broadcast %cst_23 : f32 to vector<8x32xf32>
    %24 = arith.subf %23, %22 : vector<8x32xf32>
    %25 = math.exp %24 : vector<8x32xf32>
    %cst_24 = arith.constant 1.000000e+00 : f32
    %26 = vector.broadcast %cst_24 : f32 to vector<8x32xf32>
    %27 = arith.addf %26, %25 : vector<8x32xf32>
    %cst_25 = arith.constant 1.000000e+00 : f32
    %28 = vector.broadcast %cst_25 : f32 to vector<8x32xf32>
    %29 = arith.divf %28, %27 : vector<8x32xf32>
    %30 = vector.extract_strided_slice %21 {offsets = [0, 32], sizes = [8, 32], strides = [1, 1]} : vector<8x128xf32> to vector<8x32xf32>
    %cst_26 = arith.constant 0.000000e+00 : f32
    %31 = vector.broadcast %cst_26 : f32 to vector<8x32xf32>
    %32 = arith.subf %31, %30 : vector<8x32xf32>
    %33 = math.exp %32 : vector<8x32xf32>
    %cst_27 = arith.constant 1.000000e+00 : f32
    %34 = vector.broadcast %cst_27 : f32 to vector<8x32xf32>
    %35 = arith.addf %34, %33 : vector<8x32xf32>
    %cst_28 = arith.constant 1.000000e+00 : f32
    %36 = vector.broadcast %cst_28 : f32 to vector<8x32xf32>
    %37 = arith.divf %36, %35 : vector<8x32xf32>
    %38 = vector.extract_strided_slice %21 {offsets = [0, 64], sizes = [8, 32], strides = [1, 1]} : vector<8x128xf32> to vector<8x32xf32>
    %39 = math.tanh %38 : vector<8x32xf32>
    %40 = vector.extract_strided_slice %21 {offsets = [0, 96], sizes = [8, 32], strides = [1, 1]} : vector<8x128xf32> to vector<8x32xf32>
    %cst_29 = arith.constant 0.000000e+00 : f32
    %41 = vector.broadcast %cst_29 : f32 to vector<8x32xf32>
    %42 = arith.subf %41, %40 : vector<8x32xf32>
    %43 = math.exp %42 : vector<8x32xf32>
    %cst_30 = arith.constant 1.000000e+00 : f32
    %44 = vector.broadcast %cst_30 : f32 to vector<8x32xf32>
    %45 = arith.addf %44, %43 : vector<8x32xf32>
    %cst_31 = arith.constant 1.000000e+00 : f32
    %46 = vector.broadcast %cst_31 : f32 to vector<8x32xf32>
    %47 = arith.divf %46, %45 : vector<8x32xf32>
    %48 = arith.mulf %37, %6 : vector<8x32xf32>
    %49 = arith.mulf %29, %39 : vector<8x32xf32>
    %50 = arith.addf %48, %49 : vector<8x32xf32>
    %51 = math.tanh %50 : vector<8x32xf32>
    %52 = arith.mulf %47, %51 : vector<8x32xf32>
    %c0_32 = arith.constant 0 : index
    %c1 = arith.constant 1 : index
    %c0_33 = arith.constant 0 : index
    %53 = vector.load %arg1[%c0_32, %c1, %c0_33] : memref<8x8x32xf32, #tpu.memory_space<vmem>>, vector<8x1x32xf32>
    %54 = vector.shape_cast %53 : vector<8x1x32xf32> to vector<8x32xf32>
    %cst_34 = arith.constant dense<0.000000e+00> : vector<8x128xf32>
    %55 = tpu.matmul %54, %0, %cst_34 {dimension_numbers = #tpu.dot_dimension_numbers<[1], [0], [0], [1], [0, 0, 1, 1], [], []>} : vector<8x32xf32>, vector<32x128xf32>, vector<8x128xf32> -> vector<8x128xf32>
    %c0_35 = arith.constant 0 : index
    %c1_36 = arith.constant 1 : index
    %c0_37 = arith.constant 0 : index
    %56 = vector.load %arg2[%c0_35, %c1_36, %c0_37] : memref<8x8x16xf32, #tpu.memory_space<vmem>>, vector<8x1x16xf32>
    %57 = vector.shape_cast %56 : vector<8x1x16xf32> to vector<8x16xf32>
    %cst_38 = arith.constant dense<0.000000e+00> : vector<8x128xf32>
    %58 = tpu.matmul %57, %1, %cst_38 {dimension_numbers = #tpu.dot_dimension_numbers<[1], [0], [0], [1], [0, 0, 1, 1], [], []>} : vector<8x16xf32>, vector<16x128xf32>, vector<8x128xf32> -> vector<8x128xf32>
    %59 = arith.addf %55, %58 : vector<8x128xf32>
    %c0_39 = arith.constant 0 : index
    %c1_40 = arith.constant 1 : index
    %c0_41 = arith.constant 0 : index
    %60 = vector.load %arg3[%c0_39, %c1_40, %c0_41] : memref<8x8x16xf32, #tpu.memory_space<vmem>>, vector<8x1x16xf32>
    %61 = vector.shape_cast %60 : vector<8x1x16xf32> to vector<8x16xf32>
    %cst_42 = arith.constant dense<0.000000e+00> : vector<8x128xf32>
    %62 = tpu.matmul %61, %2, %cst_42 {dimension_numbers = #tpu.dot_dimension_numbers<[1], [0], [0], [1], [0, 0, 1, 1], [], []>} : vector<8x16xf32>, vector<16x128xf32>, vector<8x128xf32> -> vector<8x128xf32>
    %63 = arith.addf %59, %62 : vector<8x128xf32>
    %cst_43 = arith.constant dense<0.000000e+00> : vector<8x128xf32>
    %64 = tpu.matmul %52, %3, %cst_43 {dimension_numbers = #tpu.dot_dimension_numbers<[1], [0], [0], [1], [0, 0, 1, 1], [], []>} : vector<8x32xf32>, vector<32x128xf32>, vector<8x128xf32> -> vector<8x128xf32>
    %65 = arith.addf %63, %64 : vector<8x128xf32>
    %66 = vector.broadcast %4 : vector<1x128xf32> to vector<8x128xf32>
    %67 = arith.addf %65, %66 : vector<8x128xf32>
    %68 = vector.extract_strided_slice %67 {offsets = [0, 0], sizes = [8, 32], strides = [1, 1]} : vector<8x128xf32> to vector<8x32xf32>
    %cst_44 = arith.constant 0.000000e+00 : f32
    %69 = vector.broadcast %cst_44 : f32 to vector<8x32xf32>
    %70 = arith.subf %69, %68 : vector<8x32xf32>
    %71 = math.exp %70 : vector<8x32xf32>
    %cst_45 = arith.constant 1.000000e+00 : f32
    %72 = vector.broadcast %cst_45 : f32 to vector<8x32xf32>
    %73 = arith.addf %72, %71 : vector<8x32xf32>
    %cst_46 = arith.constant 1.000000e+00 : f32
    %74 = vector.broadcast %cst_46 : f32 to vector<8x32xf32>
    %75 = arith.divf %74, %73 : vector<8x32xf32>
    %76 = vector.extract_strided_slice %67 {offsets = [0, 32], sizes = [8, 32], strides = [1, 1]} : vector<8x128xf32> to vector<8x32xf32>
    %cst_47 = arith.constant 0.000000e+00 : f32
    %77 = vector.broadcast %cst_47 : f32 to vector<8x32xf32>
    %78 = arith.subf %77, %76 : vector<8x32xf32>
    %79 = math.exp %78 : vector<8x32xf32>
    %cst_48 = arith.constant 1.000000e+00 : f32
    %80 = vector.broadcast %cst_48 : f32 to vector<8x32xf32>
    %81 = arith.addf %80, %79 : vector<8x32xf32>
    %cst_49 = arith.constant 1.000000e+00 : f32
    %82 = vector.broadcast %cst_49 : f32 to vector<8x32xf32>
    %83 = arith.divf %82, %81 : vector<8x32xf32>
    %84 = vector.extract_strided_slice %67 {offsets = [0, 64], sizes = [8, 32], strides = [1, 1]} : vector<8x128xf32> to vector<8x32xf32>
    %85 = math.tanh %84 : vector<8x32xf32>
    %86 = vector.extract_strided_slice %67 {offsets = [0, 96], sizes = [8, 32], strides = [1, 1]} : vector<8x128xf32> to vector<8x32xf32>
    %cst_50 = arith.constant 0.000000e+00 : f32
    %87 = vector.broadcast %cst_50 : f32 to vector<8x32xf32>
    %88 = arith.subf %87, %86 : vector<8x32xf32>
    %89 = math.exp %88 : vector<8x32xf32>
    %cst_51 = arith.constant 1.000000e+00 : f32
    %90 = vector.broadcast %cst_51 : f32 to vector<8x32xf32>
    %91 = arith.addf %90, %89 : vector<8x32xf32>
    %cst_52 = arith.constant 1.000000e+00 : f32
    %92 = vector.broadcast %cst_52 : f32 to vector<8x32xf32>
    %93 = arith.divf %92, %91 : vector<8x32xf32>
    %94 = arith.mulf %83, %50 : vector<8x32xf32>
    %95 = arith.mulf %75, %85 : vector<8x32xf32>
    %96 = arith.addf %94, %95 : vector<8x32xf32>
    %97 = math.tanh %96 : vector<8x32xf32>
    %98 = arith.mulf %93, %97 : vector<8x32xf32>
    %c0_53 = arith.constant 0 : index
    %c2 = arith.constant 2 : index
    %c0_54 = arith.constant 0 : index
    %99 = vector.load %arg1[%c0_53, %c2, %c0_54] : memref<8x8x32xf32, #tpu.memory_space<vmem>>, vector<8x1x32xf32>
    %100 = vector.shape_cast %99 : vector<8x1x32xf32> to vector<8x32xf32>
    %cst_55 = arith.constant dense<0.000000e+00> : vector<8x128xf32>
    %101 = tpu.matmul %100, %0, %cst_55 {dimension_numbers = #tpu.dot_dimension_numbers<[1], [0], [0], [1], [0, 0, 1, 1], [], []>} : vector<8x32xf32>, vector<32x128xf32>, vector<8x128xf32> -> vector<8x128xf32>
    %c0_56 = arith.constant 0 : index
    %c2_57 = arith.constant 2 : index
    %c0_58 = arith.constant 0 : index
    %102 = vector.load %arg2[%c0_56, %c2_57, %c0_58] : memref<8x8x16xf32, #tpu.memory_space<vmem>>, vector<8x1x16xf32>
    %103 = vector.shape_cast %102 : vector<8x1x16xf32> to vector<8x16xf32>
    %cst_59 = arith.constant dense<0.000000e+00> : vector<8x128xf32>
    %104 = tpu.matmul %103, %1, %cst_59 {dimension_numbers = #tpu.dot_dimension_numbers<[1], [0], [0], [1], [0, 0, 1, 1], [], []>} : vector<8x16xf32>, vector<16x128xf32>, vector<8x128xf32> -> vector<8x128xf32>
    %105 = arith.addf %101, %104 : vector<8x128xf32>
    %c0_60 = arith.constant 0 : index
    %c2_61 = arith.constant 2 : index
    %c0_62 = arith.constant 0 : index
    %106 = vector.load %arg3[%c0_60, %c2_61, %c0_62] : memref<8x8x16xf32, #tpu.memory_space<vmem>>, vector<8x1x16xf32>
    %107 = vector.shape_cast %106 : vector<8x1x16xf32> to vector<8x16xf32>
    %cst_63 = arith.constant dense<0.000000e+00> : vector<8x128xf32>
    %108 = tpu.matmul %107, %2, %cst_63 {dimension_numbers = #tpu.dot_dimension_numbers<[1], [0], [0], [1], [0, 0, 1, 1], [], []>} : vector<8x16xf32>, vector<16x128xf32>, vector<8x128xf32> -> vector<8x128xf32>
    %109 = arith.addf %105, %108 : vector<8x128xf32>
    %cst_64 = arith.constant dense<0.000000e+00> : vector<8x128xf32>
    %110 = tpu.matmul %98, %3, %cst_64 {dimension_numbers = #tpu.dot_dimension_numbers<[1], [0], [0], [1], [0, 0, 1, 1], [], []>} : vector<8x32xf32>, vector<32x128xf32>, vector<8x128xf32> -> vector<8x128xf32>
    %111 = arith.addf %109, %110 : vector<8x128xf32>
    %112 = vector.broadcast %4 : vector<1x128xf32> to vector<8x128xf32>
    %113 = arith.addf %111, %112 : vector<8x128xf32>
    %114 = vector.extract_strided_slice %113 {offsets = [0, 0], sizes = [8, 32], strides = [1, 1]} : vector<8x128xf32> to vector<8x32xf32>
    %cst_65 = arith.constant 0.000000e+00 : f32
    %115 = vector.broadcast %cst_65 : f32 to vector<8x32xf32>
    %116 = arith.subf %115, %114 : vector<8x32xf32>
    %117 = math.exp %116 : vector<8x32xf32>
    %cst_66 = arith.constant 1.000000e+00 : f32
    %118 = vector.broadcast %cst_66 : f32 to vector<8x32xf32>
    %119 = arith.addf %118, %117 : vector<8x32xf32>
    %cst_67 = arith.constant 1.000000e+00 : f32
    %120 = vector.broadcast %cst_67 : f32 to vector<8x32xf32>
    %121 = arith.divf %120, %119 : vector<8x32xf32>
    %122 = vector.extract_strided_slice %113 {offsets = [0, 32], sizes = [8, 32], strides = [1, 1]} : vector<8x128xf32> to vector<8x32xf32>
    %cst_68 = arith.constant 0.000000e+00 : f32
    %123 = vector.broadcast %cst_68 : f32 to vector<8x32xf32>
    %124 = arith.subf %123, %122 : vector<8x32xf32>
    %125 = math.exp %124 : vector<8x32xf32>
    %cst_69 = arith.constant 1.000000e+00 : f32
    %126 = vector.broadcast %cst_69 : f32 to vector<8x32xf32>
    %127 = arith.addf %126, %125 : vector<8x32xf32>
    %cst_70 = arith.constant 1.000000e+00 : f32
    %128 = vector.broadcast %cst_70 : f32 to vector<8x32xf32>
    %129 = arith.divf %128, %127 : vector<8x32xf32>
    %130 = vector.extract_strided_slice %113 {offsets = [0, 64], sizes = [8, 32], strides = [1, 1]} : vector<8x128xf32> to vector<8x32xf32>
    %131 = math.tanh %130 : vector<8x32xf32>
    %132 = vector.extract_strided_slice %113 {offsets = [0, 96], sizes = [8, 32], strides = [1, 1]} : vector<8x128xf32> to vector<8x32xf32>
    %cst_71 = arith.constant 0.000000e+00 : f32
    %133 = vector.broadcast %cst_71 : f32 to vector<8x32xf32>
    %134 = arith.subf %133, %132 : vector<8x32xf32>
    %135 = math.exp %134 : vector<8x32xf32>
    %cst_72 = arith.constant 1.000000e+00 : f32
    %136 = vector.broadcast %cst_72 : f32 to vector<8x32xf32>
    %137 = arith.addf %136, %135 : vector<8x32xf32>
    %cst_73 = arith.constant 1.000000e+00 : f32
    %138 = vector.broadcast %cst_73 : f32 to vector<8x32xf32>
    %139 = arith.divf %138, %137 : vector<8x32xf32>
    %140 = arith.mulf %129, %96 : vector<8x32xf32>
    %141 = arith.mulf %121, %131 : vector<8x32xf32>
    %142 = arith.addf %140, %141 : vector<8x32xf32>
    %143 = math.tanh %142 : vector<8x32xf32>
    %144 = arith.mulf %139, %143 : vector<8x32xf32>
    %c0_74 = arith.constant 0 : index
    %c3 = arith.constant 3 : index
    %c0_75 = arith.constant 0 : index
    %145 = vector.load %arg1[%c0_74, %c3, %c0_75] : memref<8x8x32xf32, #tpu.memory_space<vmem>>, vector<8x1x32xf32>
    %146 = vector.shape_cast %145 : vector<8x1x32xf32> to vector<8x32xf32>
    %cst_76 = arith.constant dense<0.000000e+00> : vector<8x128xf32>
    %147 = tpu.matmul %146, %0, %cst_76 {dimension_numbers = #tpu.dot_dimension_numbers<[1], [0], [0], [1], [0, 0, 1, 1], [], []>} : vector<8x32xf32>, vector<32x128xf32>, vector<8x128xf32> -> vector<8x128xf32>
    %c0_77 = arith.constant 0 : index
    %c3_78 = arith.constant 3 : index
    %c0_79 = arith.constant 0 : index
    %148 = vector.load %arg2[%c0_77, %c3_78, %c0_79] : memref<8x8x16xf32, #tpu.memory_space<vmem>>, vector<8x1x16xf32>
    %149 = vector.shape_cast %148 : vector<8x1x16xf32> to vector<8x16xf32>
    %cst_80 = arith.constant dense<0.000000e+00> : vector<8x128xf32>
    %150 = tpu.matmul %149, %1, %cst_80 {dimension_numbers = #tpu.dot_dimension_numbers<[1], [0], [0], [1], [0, 0, 1, 1], [], []>} : vector<8x16xf32>, vector<16x128xf32>, vector<8x128xf32> -> vector<8x128xf32>
    %151 = arith.addf %147, %150 : vector<8x128xf32>
    %c0_81 = arith.constant 0 : index
    %c3_82 = arith.constant 3 : index
    %c0_83 = arith.constant 0 : index
    %152 = vector.load %arg3[%c0_81, %c3_82, %c0_83] : memref<8x8x16xf32, #tpu.memory_space<vmem>>, vector<8x1x16xf32>
    %153 = vector.shape_cast %152 : vector<8x1x16xf32> to vector<8x16xf32>
    %cst_84 = arith.constant dense<0.000000e+00> : vector<8x128xf32>
    %154 = tpu.matmul %153, %2, %cst_84 {dimension_numbers = #tpu.dot_dimension_numbers<[1], [0], [0], [1], [0, 0, 1, 1], [], []>} : vector<8x16xf32>, vector<16x128xf32>, vector<8x128xf32> -> vector<8x128xf32>
    %155 = arith.addf %151, %154 : vector<8x128xf32>
    %cst_85 = arith.constant dense<0.000000e+00> : vector<8x128xf32>
    %156 = tpu.matmul %144, %3, %cst_85 {dimension_numbers = #tpu.dot_dimension_numbers<[1], [0], [0], [1], [0, 0, 1, 1], [], []>} : vector<8x32xf32>, vector<32x128xf32>, vector<8x128xf32> -> vector<8x128xf32>
    %157 = arith.addf %155, %156 : vector<8x128xf32>
    %158 = vector.broadcast %4 : vector<1x128xf32> to vector<8x128xf32>
    %159 = arith.addf %157, %158 : vector<8x128xf32>
    %160 = vector.extract_strided_slice %159 {offsets = [0, 0], sizes = [8, 32], strides = [1, 1]} : vector<8x128xf32> to vector<8x32xf32>
    %cst_86 = arith.constant 0.000000e+00 : f32
    %161 = vector.broadcast %cst_86 : f32 to vector<8x32xf32>
    %162 = arith.subf %161, %160 : vector<8x32xf32>
    %163 = math.exp %162 : vector<8x32xf32>
    %cst_87 = arith.constant 1.000000e+00 : f32
    %164 = vector.broadcast %cst_87 : f32 to vector<8x32xf32>
    %165 = arith.addf %164, %163 : vector<8x32xf32>
    %cst_88 = arith.constant 1.000000e+00 : f32
    %166 = vector.broadcast %cst_88 : f32 to vector<8x32xf32>
    %167 = arith.divf %166, %165 : vector<8x32xf32>
    %168 = vector.extract_strided_slice %159 {offsets = [0, 32], sizes = [8, 32], strides = [1, 1]} : vector<8x128xf32> to vector<8x32xf32>
    %cst_89 = arith.constant 0.000000e+00 : f32
    %169 = vector.broadcast %cst_89 : f32 to vector<8x32xf32>
    %170 = arith.subf %169, %168 : vector<8x32xf32>
    %171 = math.exp %170 : vector<8x32xf32>
    %cst_90 = arith.constant 1.000000e+00 : f32
    %172 = vector.broadcast %cst_90 : f32 to vector<8x32xf32>
    %173 = arith.addf %172, %171 : vector<8x32xf32>
    %cst_91 = arith.constant 1.000000e+00 : f32
    %174 = vector.broadcast %cst_91 : f32 to vector<8x32xf32>
    %175 = arith.divf %174, %173 : vector<8x32xf32>
    %176 = vector.extract_strided_slice %159 {offsets = [0, 64], sizes = [8, 32], strides = [1, 1]} : vector<8x128xf32> to vector<8x32xf32>
    %177 = math.tanh %176 : vector<8x32xf32>
    %178 = vector.extract_strided_slice %159 {offsets = [0, 96], sizes = [8, 32], strides = [1, 1]} : vector<8x128xf32> to vector<8x32xf32>
    %cst_92 = arith.constant 0.000000e+00 : f32
    %179 = vector.broadcast %cst_92 : f32 to vector<8x32xf32>
    %180 = arith.subf %179, %178 : vector<8x32xf32>
    %181 = math.exp %180 : vector<8x32xf32>
    %cst_93 = arith.constant 1.000000e+00 : f32
    %182 = vector.broadcast %cst_93 : f32 to vector<8x32xf32>
    %183 = arith.addf %182, %181 : vector<8x32xf32>
    %cst_94 = arith.constant 1.000000e+00 : f32
    %184 = vector.broadcast %cst_94 : f32 to vector<8x32xf32>
    %185 = arith.divf %184, %183 : vector<8x32xf32>
    %186 = arith.mulf %175, %142 : vector<8x32xf32>
    %187 = arith.mulf %167, %177 : vector<8x32xf32>
    %188 = arith.addf %186, %187 : vector<8x32xf32>
    %189 = math.tanh %188 : vector<8x32xf32>
    %190 = arith.mulf %185, %189 : vector<8x32xf32>
    %c0_95 = arith.constant 0 : index
    %c4 = arith.constant 4 : index
    %c0_96 = arith.constant 0 : index
    %191 = vector.load %arg1[%c0_95, %c4, %c0_96] : memref<8x8x32xf32, #tpu.memory_space<vmem>>, vector<8x1x32xf32>
    %192 = vector.shape_cast %191 : vector<8x1x32xf32> to vector<8x32xf32>
    %cst_97 = arith.constant dense<0.000000e+00> : vector<8x128xf32>
    %193 = tpu.matmul %192, %0, %cst_97 {dimension_numbers = #tpu.dot_dimension_numbers<[1], [0], [0], [1], [0, 0, 1, 1], [], []>} : vector<8x32xf32>, vector<32x128xf32>, vector<8x128xf32> -> vector<8x128xf32>
    %c0_98 = arith.constant 0 : index
    %c4_99 = arith.constant 4 : index
    %c0_100 = arith.constant 0 : index
    %194 = vector.load %arg2[%c0_98, %c4_99, %c0_100] : memref<8x8x16xf32, #tpu.memory_space<vmem>>, vector<8x1x16xf32>
    %195 = vector.shape_cast %194 : vector<8x1x16xf32> to vector<8x16xf32>
    %cst_101 = arith.constant dense<0.000000e+00> : vector<8x128xf32>
    %196 = tpu.matmul %195, %1, %cst_101 {dimension_numbers = #tpu.dot_dimension_numbers<[1], [0], [0], [1], [0, 0, 1, 1], [], []>} : vector<8x16xf32>, vector<16x128xf32>, vector<8x128xf32> -> vector<8x128xf32>
    %197 = arith.addf %193, %196 : vector<8x128xf32>
    %c0_102 = arith.constant 0 : index
    %c4_103 = arith.constant 4 : index
    %c0_104 = arith.constant 0 : index
    %198 = vector.load %arg3[%c0_102, %c4_103, %c0_104] : memref<8x8x16xf32, #tpu.memory_space<vmem>>, vector<8x1x16xf32>
    %199 = vector.shape_cast %198 : vector<8x1x16xf32> to vector<8x16xf32>
    %cst_105 = arith.constant dense<0.000000e+00> : vector<8x128xf32>
    %200 = tpu.matmul %199, %2, %cst_105 {dimension_numbers = #tpu.dot_dimension_numbers<[1], [0], [0], [1], [0, 0, 1, 1], [], []>} : vector<8x16xf32>, vector<16x128xf32>, vector<8x128xf32> -> vector<8x128xf32>
    %201 = arith.addf %197, %200 : vector<8x128xf32>
    %cst_106 = arith.constant dense<0.000000e+00> : vector<8x128xf32>
    %202 = tpu.matmul %190, %3, %cst_106 {dimension_numbers = #tpu.dot_dimension_numbers<[1], [0], [0], [1], [0, 0, 1, 1], [], []>} : vector<8x32xf32>, vector<32x128xf32>, vector<8x128xf32> -> vector<8x128xf32>
    %203 = arith.addf %201, %202 : vector<8x128xf32>
    %204 = vector.broadcast %4 : vector<1x128xf32> to vector<8x128xf32>
    %205 = arith.addf %203, %204 : vector<8x128xf32>
    %206 = vector.extract_strided_slice %205 {offsets = [0, 0], sizes = [8, 32], strides = [1, 1]} : vector<8x128xf32> to vector<8x32xf32>
    %cst_107 = arith.constant 0.000000e+00 : f32
    %207 = vector.broadcast %cst_107 : f32 to vector<8x32xf32>
    %208 = arith.subf %207, %206 : vector<8x32xf32>
    %209 = math.exp %208 : vector<8x32xf32>
    %cst_108 = arith.constant 1.000000e+00 : f32
    %210 = vector.broadcast %cst_108 : f32 to vector<8x32xf32>
    %211 = arith.addf %210, %209 : vector<8x32xf32>
    %cst_109 = arith.constant 1.000000e+00 : f32
    %212 = vector.broadcast %cst_109 : f32 to vector<8x32xf32>
    %213 = arith.divf %212, %211 : vector<8x32xf32>
    %214 = vector.extract_strided_slice %205 {offsets = [0, 32], sizes = [8, 32], strides = [1, 1]} : vector<8x128xf32> to vector<8x32xf32>
    %cst_110 = arith.constant 0.000000e+00 : f32
    %215 = vector.broadcast %cst_110 : f32 to vector<8x32xf32>
    %216 = arith.subf %215, %214 : vector<8x32xf32>
    %217 = math.exp %216 : vector<8x32xf32>
    %cst_111 = arith.constant 1.000000e+00 : f32
    %218 = vector.broadcast %cst_111 : f32 to vector<8x32xf32>
    %219 = arith.addf %218, %217 : vector<8x32xf32>
    %cst_112 = arith.constant 1.000000e+00 : f32
    %220 = vector.broadcast %cst_112 : f32 to vector<8x32xf32>
    %221 = arith.divf %220, %219 : vector<8x32xf32>
    %222 = vector.extract_strided_slice %205 {offsets = [0, 64], sizes = [8, 32], strides = [1, 1]} : vector<8x128xf32> to vector<8x32xf32>
    %223 = math.tanh %222 : vector<8x32xf32>
    %224 = vector.extract_strided_slice %205 {offsets = [0, 96], sizes = [8, 32], strides = [1, 1]} : vector<8x128xf32> to vector<8x32xf32>
    %cst_113 = arith.constant 0.000000e+00 : f32
    %225 = vector.broadcast %cst_113 : f32 to vector<8x32xf32>
    %226 = arith.subf %225, %224 : vector<8x32xf32>
    %227 = math.exp %226 : vector<8x32xf32>
    %cst_114 = arith.constant 1.000000e+00 : f32
    %228 = vector.broadcast %cst_114 : f32 to vector<8x32xf32>
    %229 = arith.addf %228, %227 : vector<8x32xf32>
    %cst_115 = arith.constant 1.000000e+00 : f32
    %230 = vector.broadcast %cst_115 : f32 to vector<8x32xf32>
    %231 = arith.divf %230, %229 : vector<8x32xf32>
    %232 = arith.mulf %221, %188 : vector<8x32xf32>
    %233 = arith.mulf %213, %223 : vector<8x32xf32>
    %234 = arith.addf %232, %233 : vector<8x32xf32>
    %235 = math.tanh %234 : vector<8x32xf32>
    %236 = arith.mulf %231, %235 : vector<8x32xf32>
    %c0_116 = arith.constant 0 : index
    %c5 = arith.constant 5 : index
    %c0_117 = arith.constant 0 : index
    %237 = vector.load %arg1[%c0_116, %c5, %c0_117] : memref<8x8x32xf32, #tpu.memory_space<vmem>>, vector<8x1x32xf32>
    %238 = vector.shape_cast %237 : vector<8x1x32xf32> to vector<8x32xf32>
    %cst_118 = arith.constant dense<0.000000e+00> : vector<8x128xf32>
    %239 = tpu.matmul %238, %0, %cst_118 {dimension_numbers = #tpu.dot_dimension_numbers<[1], [0], [0], [1], [0, 0, 1, 1], [], []>} : vector<8x32xf32>, vector<32x128xf32>, vector<8x128xf32> -> vector<8x128xf32>
    %c0_119 = arith.constant 0 : index
    %c5_120 = arith.constant 5 : index
    %c0_121 = arith.constant 0 : index
    %240 = vector.load %arg2[%c0_119, %c5_120, %c0_121] : memref<8x8x16xf32, #tpu.memory_space<vmem>>, vector<8x1x16xf32>
    %241 = vector.shape_cast %240 : vector<8x1x16xf32> to vector<8x16xf32>
    %cst_122 = arith.constant dense<0.000000e+00> : vector<8x128xf32>
    %242 = tpu.matmul %241, %1, %cst_122 {dimension_numbers = #tpu.dot_dimension_numbers<[1], [0], [0], [1], [0, 0, 1, 1], [], []>} : vector<8x16xf32>, vector<16x128xf32>, vector<8x128xf32> -> vector<8x128xf32>
    %243 = arith.addf %239, %242 : vector<8x128xf32>
    %c0_123 = arith.constant 0 : index
    %c5_124 = arith.constant 5 : index
    %c0_125 = arith.constant 0 : index
    %244 = vector.load %arg3[%c0_123, %c5_124, %c0_125] : memref<8x8x16xf32, #tpu.memory_space<vmem>>, vector<8x1x16xf32>
    %245 = vector.shape_cast %244 : vector<8x1x16xf32> to vector<8x16xf32>
    %cst_126 = arith.constant dense<0.000000e+00> : vector<8x128xf32>
    %246 = tpu.matmul %245, %2, %cst_126 {dimension_numbers = #tpu.dot_dimension_numbers<[1], [0], [0], [1], [0, 0, 1, 1], [], []>} : vector<8x16xf32>, vector<16x128xf32>, vector<8x128xf32> -> vector<8x128xf32>
    %247 = arith.addf %243, %246 : vector<8x128xf32>
    %cst_127 = arith.constant dense<0.000000e+00> : vector<8x128xf32>
    %248 = tpu.matmul %236, %3, %cst_127 {dimension_numbers = #tpu.dot_dimension_numbers<[1], [0], [0], [1], [0, 0, 1, 1], [], []>} : vector<8x32xf32>, vector<32x128xf32>, vector<8x128xf32> -> vector<8x128xf32>
    %249 = arith.addf %247, %248 : vector<8x128xf32>
    %250 = vector.broadcast %4 : vector<1x128xf32> to vector<8x128xf32>
    %251 = arith.addf %249, %250 : vector<8x128xf32>
    %252 = vector.extract_strided_slice %251 {offsets = [0, 0], sizes = [8, 32], strides = [1, 1]} : vector<8x128xf32> to vector<8x32xf32>
    %cst_128 = arith.constant 0.000000e+00 : f32
    %253 = vector.broadcast %cst_128 : f32 to vector<8x32xf32>
    %254 = arith.subf %253, %252 : vector<8x32xf32>
    %255 = math.exp %254 : vector<8x32xf32>
    %cst_129 = arith.constant 1.000000e+00 : f32
    %256 = vector.broadcast %cst_129 : f32 to vector<8x32xf32>
    %257 = arith.addf %256, %255 : vector<8x32xf32>
    %cst_130 = arith.constant 1.000000e+00 : f32
    %258 = vector.broadcast %cst_130 : f32 to vector<8x32xf32>
    %259 = arith.divf %258, %257 : vector<8x32xf32>
    %260 = vector.extract_strided_slice %251 {offsets = [0, 32], sizes = [8, 32], strides = [1, 1]} : vector<8x128xf32> to vector<8x32xf32>
    %cst_131 = arith.constant 0.000000e+00 : f32
    %261 = vector.broadcast %cst_131 : f32 to vector<8x32xf32>
    %262 = arith.subf %261, %260 : vector<8x32xf32>
    %263 = math.exp %262 : vector<8x32xf32>
    %cst_132 = arith.constant 1.000000e+00 : f32
    %264 = vector.broadcast %cst_132 : f32 to vector<8x32xf32>
    %265 = arith.addf %264, %263 : vector<8x32xf32>
    %cst_133 = arith.constant 1.000000e+00 : f32
    %266 = vector.broadcast %cst_133 : f32 to vector<8x32xf32>
    %267 = arith.divf %266, %265 : vector<8x32xf32>
    %268 = vector.extract_strided_slice %251 {offsets = [0, 64], sizes = [8, 32], strides = [1, 1]} : vector<8x128xf32> to vector<8x32xf32>
    %269 = math.tanh %268 : vector<8x32xf32>
    %270 = vector.extract_strided_slice %251 {offsets = [0, 96], sizes = [8, 32], strides = [1, 1]} : vector<8x128xf32> to vector<8x32xf32>
    %cst_134 = arith.constant 0.000000e+00 : f32
    %271 = vector.broadcast %cst_134 : f32 to vector<8x32xf32>
    %272 = arith.subf %271, %270 : vector<8x32xf32>
    %273 = math.exp %272 : vector<8x32xf32>
    %cst_135 = arith.constant 1.000000e+00 : f32
    %274 = vector.broadcast %cst_135 : f32 to vector<8x32xf32>
    %275 = arith.addf %274, %273 : vector<8x32xf32>
    %cst_136 = arith.constant 1.000000e+00 : f32
    %276 = vector.broadcast %cst_136 : f32 to vector<8x32xf32>
    %277 = arith.divf %276, %275 : vector<8x32xf32>
    %278 = arith.mulf %267, %234 : vector<8x32xf32>
    %279 = arith.mulf %259, %269 : vector<8x32xf32>
    %280 = arith.addf %278, %279 : vector<8x32xf32>
    %281 = math.tanh %280 : vector<8x32xf32>
    %282 = arith.mulf %277, %281 : vector<8x32xf32>
    %c0_137 = arith.constant 0 : index
    %c6 = arith.constant 6 : index
    %c0_138 = arith.constant 0 : index
    %283 = vector.load %arg1[%c0_137, %c6, %c0_138] : memref<8x8x32xf32, #tpu.memory_space<vmem>>, vector<8x1x32xf32>
    %284 = vector.shape_cast %283 : vector<8x1x32xf32> to vector<8x32xf32>
    %cst_139 = arith.constant dense<0.000000e+00> : vector<8x128xf32>
    %285 = tpu.matmul %284, %0, %cst_139 {dimension_numbers = #tpu.dot_dimension_numbers<[1], [0], [0], [1], [0, 0, 1, 1], [], []>} : vector<8x32xf32>, vector<32x128xf32>, vector<8x128xf32> -> vector<8x128xf32>
    %c0_140 = arith.constant 0 : index
    %c6_141 = arith.constant 6 : index
    %c0_142 = arith.constant 0 : index
    %286 = vector.load %arg2[%c0_140, %c6_141, %c0_142] : memref<8x8x16xf32, #tpu.memory_space<vmem>>, vector<8x1x16xf32>
    %287 = vector.shape_cast %286 : vector<8x1x16xf32> to vector<8x16xf32>
    %cst_143 = arith.constant dense<0.000000e+00> : vector<8x128xf32>
    %288 = tpu.matmul %287, %1, %cst_143 {dimension_numbers = #tpu.dot_dimension_numbers<[1], [0], [0], [1], [0, 0, 1, 1], [], []>} : vector<8x16xf32>, vector<16x128xf32>, vector<8x128xf32> -> vector<8x128xf32>
    %289 = arith.addf %285, %288 : vector<8x128xf32>
    %c0_144 = arith.constant 0 : index
    %c6_145 = arith.constant 6 : index
    %c0_146 = arith.constant 0 : index
    %290 = vector.load %arg3[%c0_144, %c6_145, %c0_146] : memref<8x8x16xf32, #tpu.memory_space<vmem>>, vector<8x1x16xf32>
    %291 = vector.shape_cast %290 : vector<8x1x16xf32> to vector<8x16xf32>
    %cst_147 = arith.constant dense<0.000000e+00> : vector<8x128xf32>
    %292 = tpu.matmul %291, %2, %cst_147 {dimension_numbers = #tpu.dot_dimension_numbers<[1], [0], [0], [1], [0, 0, 1, 1], [], []>} : vector<8x16xf32>, vector<16x128xf32>, vector<8x128xf32> -> vector<8x128xf32>
    %293 = arith.addf %289, %292 : vector<8x128xf32>
    %cst_148 = arith.constant dense<0.000000e+00> : vector<8x128xf32>
    %294 = tpu.matmul %282, %3, %cst_148 {dimension_numbers = #tpu.dot_dimension_numbers<[1], [0], [0], [1], [0, 0, 1, 1], [], []>} : vector<8x32xf32>, vector<32x128xf32>, vector<8x128xf32> -> vector<8x128xf32>
    %295 = arith.addf %293, %294 : vector<8x128xf32>
    %296 = vector.broadcast %4 : vector<1x128xf32> to vector<8x128xf32>
    %297 = arith.addf %295, %296 : vector<8x128xf32>
    %298 = vector.extract_strided_slice %297 {offsets = [0, 0], sizes = [8, 32], strides = [1, 1]} : vector<8x128xf32> to vector<8x32xf32>
    %cst_149 = arith.constant 0.000000e+00 : f32
    %299 = vector.broadcast %cst_149 : f32 to vector<8x32xf32>
    %300 = arith.subf %299, %298 : vector<8x32xf32>
    %301 = math.exp %300 : vector<8x32xf32>
    %cst_150 = arith.constant 1.000000e+00 : f32
    %302 = vector.broadcast %cst_150 : f32 to vector<8x32xf32>
    %303 = arith.addf %302, %301 : vector<8x32xf32>
    %cst_151 = arith.constant 1.000000e+00 : f32
    %304 = vector.broadcast %cst_151 : f32 to vector<8x32xf32>
    %305 = arith.divf %304, %303 : vector<8x32xf32>
    %306 = vector.extract_strided_slice %297 {offsets = [0, 32], sizes = [8, 32], strides = [1, 1]} : vector<8x128xf32> to vector<8x32xf32>
    %cst_152 = arith.constant 0.000000e+00 : f32
    %307 = vector.broadcast %cst_152 : f32 to vector<8x32xf32>
    %308 = arith.subf %307, %306 : vector<8x32xf32>
    %309 = math.exp %308 : vector<8x32xf32>
    %cst_153 = arith.constant 1.000000e+00 : f32
    %310 = vector.broadcast %cst_153 : f32 to vector<8x32xf32>
    %311 = arith.addf %310, %309 : vector<8x32xf32>
    %cst_154 = arith.constant 1.000000e+00 : f32
    %312 = vector.broadcast %cst_154 : f32 to vector<8x32xf32>
    %313 = arith.divf %312, %311 : vector<8x32xf32>
    %314 = vector.extract_strided_slice %297 {offsets = [0, 64], sizes = [8, 32], strides = [1, 1]} : vector<8x128xf32> to vector<8x32xf32>
    %315 = math.tanh %314 : vector<8x32xf32>
    %316 = vector.extract_strided_slice %297 {offsets = [0, 96], sizes = [8, 32], strides = [1, 1]} : vector<8x128xf32> to vector<8x32xf32>
    %cst_155 = arith.constant 0.000000e+00 : f32
    %317 = vector.broadcast %cst_155 : f32 to vector<8x32xf32>
    %318 = arith.subf %317, %316 : vector<8x32xf32>
    %319 = math.exp %318 : vector<8x32xf32>
    %cst_156 = arith.constant 1.000000e+00 : f32
    %320 = vector.broadcast %cst_156 : f32 to vector<8x32xf32>
    %321 = arith.addf %320, %319 : vector<8x32xf32>
    %cst_157 = arith.constant 1.000000e+00 : f32
    %322 = vector.broadcast %cst_157 : f32 to vector<8x32xf32>
    %323 = arith.divf %322, %321 : vector<8x32xf32>
    %324 = arith.mulf %313, %280 : vector<8x32xf32>
    %325 = arith.mulf %305, %315 : vector<8x32xf32>
    %326 = arith.addf %324, %325 : vector<8x32xf32>
    %327 = math.tanh %326 : vector<8x32xf32>
    %328 = arith.mulf %323, %327 : vector<8x32xf32>
    %c0_158 = arith.constant 0 : index
    %c7 = arith.constant 7 : index
    %c0_159 = arith.constant 0 : index
    %329 = vector.load %arg1[%c0_158, %c7, %c0_159] : memref<8x8x32xf32, #tpu.memory_space<vmem>>, vector<8x1x32xf32>
    %330 = vector.shape_cast %329 : vector<8x1x32xf32> to vector<8x32xf32>
    %cst_160 = arith.constant dense<0.000000e+00> : vector<8x128xf32>
    %331 = tpu.matmul %330, %0, %cst_160 {dimension_numbers = #tpu.dot_dimension_numbers<[1], [0], [0], [1], [0, 0, 1, 1], [], []>} : vector<8x32xf32>, vector<32x128xf32>, vector<8x128xf32> -> vector<8x128xf32>
    %c0_161 = arith.constant 0 : index
    %c7_162 = arith.constant 7 : index
    %c0_163 = arith.constant 0 : index
    %332 = vector.load %arg2[%c0_161, %c7_162, %c0_163] : memref<8x8x16xf32, #tpu.memory_space<vmem>>, vector<8x1x16xf32>
    %333 = vector.shape_cast %332 : vector<8x1x16xf32> to vector<8x16xf32>
    %cst_164 = arith.constant dense<0.000000e+00> : vector<8x128xf32>
    %334 = tpu.matmul %333, %1, %cst_164 {dimension_numbers = #tpu.dot_dimension_numbers<[1], [0], [0], [1], [0, 0, 1, 1], [], []>} : vector<8x16xf32>, vector<16x128xf32>, vector<8x128xf32> -> vector<8x128xf32>
    %335 = arith.addf %331, %334 : vector<8x128xf32>
    %c0_165 = arith.constant 0 : index
    %c7_166 = arith.constant 7 : index
    %c0_167 = arith.constant 0 : index
    %336 = vector.load %arg3[%c0_165, %c7_166, %c0_167] : memref<8x8x16xf32, #tpu.memory_space<vmem>>, vector<8x1x16xf32>
    %337 = vector.shape_cast %336 : vector<8x1x16xf32> to vector<8x16xf32>
    %cst_168 = arith.constant dense<0.000000e+00> : vector<8x128xf32>
    %338 = tpu.matmul %337, %2, %cst_168 {dimension_numbers = #tpu.dot_dimension_numbers<[1], [0], [0], [1], [0, 0, 1, 1], [], []>} : vector<8x16xf32>, vector<16x128xf32>, vector<8x128xf32> -> vector<8x128xf32>
    %339 = arith.addf %335, %338 : vector<8x128xf32>
    %cst_169 = arith.constant dense<0.000000e+00> : vector<8x128xf32>
    %340 = tpu.matmul %328, %3, %cst_169 {dimension_numbers = #tpu.dot_dimension_numbers<[1], [0], [0], [1], [0, 0, 1, 1], [], []>} : vector<8x32xf32>, vector<32x128xf32>, vector<8x128xf32> -> vector<8x128xf32>
    %341 = arith.addf %339, %340 : vector<8x128xf32>
    %342 = vector.broadcast %4 : vector<1x128xf32> to vector<8x128xf32>
    %343 = arith.addf %341, %342 : vector<8x128xf32>
    %344 = vector.extract_strided_slice %343 {offsets = [0, 0], sizes = [8, 32], strides = [1, 1]} : vector<8x128xf32> to vector<8x32xf32>
    %cst_170 = arith.constant 0.000000e+00 : f32
    %345 = vector.broadcast %cst_170 : f32 to vector<8x32xf32>
    %346 = arith.subf %345, %344 : vector<8x32xf32>
    %347 = math.exp %346 : vector<8x32xf32>
    %cst_171 = arith.constant 1.000000e+00 : f32
    %348 = vector.broadcast %cst_171 : f32 to vector<8x32xf32>
    %349 = arith.addf %348, %347 : vector<8x32xf32>
    %cst_172 = arith.constant 1.000000e+00 : f32
    %350 = vector.broadcast %cst_172 : f32 to vector<8x32xf32>
    %351 = arith.divf %350, %349 : vector<8x32xf32>
    %352 = vector.extract_strided_slice %343 {offsets = [0, 32], sizes = [8, 32], strides = [1, 1]} : vector<8x128xf32> to vector<8x32xf32>
    %cst_173 = arith.constant 0.000000e+00 : f32
    %353 = vector.broadcast %cst_173 : f32 to vector<8x32xf32>
    %354 = arith.subf %353, %352 : vector<8x32xf32>
    %355 = math.exp %354 : vector<8x32xf32>
    %cst_174 = arith.constant 1.000000e+00 : f32
    %356 = vector.broadcast %cst_174 : f32 to vector<8x32xf32>
    %357 = arith.addf %356, %355 : vector<8x32xf32>
    %cst_175 = arith.constant 1.000000e+00 : f32
    %358 = vector.broadcast %cst_175 : f32 to vector<8x32xf32>
    %359 = arith.divf %358, %357 : vector<8x32xf32>
    %360 = vector.extract_strided_slice %343 {offsets = [0, 64], sizes = [8, 32], strides = [1, 1]} : vector<8x128xf32> to vector<8x32xf32>
    %361 = math.tanh %360 : vector<8x32xf32>
    %362 = vector.extract_strided_slice %343 {offsets = [0, 96], sizes = [8, 32], strides = [1, 1]} : vector<8x128xf32> to vector<8x32xf32>
    %cst_176 = arith.constant 0.000000e+00 : f32
    %363 = vector.broadcast %cst_176 : f32 to vector<8x32xf32>
    %364 = arith.subf %363, %362 : vector<8x32xf32>
    %365 = math.exp %364 : vector<8x32xf32>
    %cst_177 = arith.constant 1.000000e+00 : f32
    %366 = vector.broadcast %cst_177 : f32 to vector<8x32xf32>
    %367 = arith.addf %366, %365 : vector<8x32xf32>
    %cst_178 = arith.constant 1.000000e+00 : f32
    %368 = vector.broadcast %cst_178 : f32 to vector<8x32xf32>
    %369 = arith.divf %368, %367 : vector<8x32xf32>
    %370 = arith.mulf %359, %326 : vector<8x32xf32>
    %371 = arith.mulf %351, %361 : vector<8x32xf32>
    %372 = arith.addf %370, %371 : vector<8x32xf32>
    %373 = math.tanh %372 : vector<8x32xf32>
    %374 = arith.mulf %369, %373 : vector<8x32xf32>
    %c0_179 = arith.constant 0 : index
    %c0_180 = arith.constant 0 : index
    %375 = vector.load %arg10[%c0_179, %c0_180] : memref<32x32xf32, #tpu.memory_space<vmem>>, vector<32x32xf32>
    %cst_181 = arith.constant dense<0.000000e+00> : vector<8x32xf32>
    %376 = tpu.matmul %374, %375, %cst_181 {dimension_numbers = #tpu.dot_dimension_numbers<[1], [0], [0], [1], [0, 0, 1, 1], [], []>} : vector<8x32xf32>, vector<32x32xf32>, vector<8x32xf32> -> vector<8x32xf32>
    %c0_182 = arith.constant 0 : index
    %c0_183 = arith.constant 0 : index
    %377 = vector.load %arg4[%c0_182, %c0_183] : memref<8x32xf32, #tpu.memory_space<vmem>>, vector<8x32xf32>
    %c0_184 = arith.constant 0 : index
    %c0_185 = arith.constant 0 : index
    %378 = vector.load %arg11[%c0_184, %c0_185] : memref<32x32xf32, #tpu.memory_space<vmem>>, vector<32x32xf32>
    %cst_186 = arith.constant dense<0.000000e+00> : vector<8x32xf32>
    %379 = tpu.matmul %377, %378, %cst_186 {dimension_numbers = #tpu.dot_dimension_numbers<[1], [0], [0], [1], [0, 0, 1, 1], [], []>} : vector<8x32xf32>, vector<32x32xf32>, vector<8x32xf32> -> vector<8x32xf32>
    %380 = arith.addf %376, %379 : vector<8x32xf32>
    %c0_187 = arith.constant 0 : index
    %c0_188 = arith.constant 0 : index
    %381 = vector.load %arg12[%c0_187, %c0_188] : memref<1x32xf32, #tpu.memory_space<vmem>>, vector<1x32xf32>
    %382 = vector.broadcast %381 : vector<1x32xf32> to vector<8x32xf32>
    %383 = arith.addf %380, %382 : vector<8x32xf32>
    %cst_189 = arith.constant 0.000000e+00 : f32
    %384 = vector.broadcast %cst_189 : f32 to vector<8x32xf32>
    %385 = arith.maximumf %383, %384 : vector<8x32xf32>
    %c0_190 = arith.constant 0 : index
    %c0_191 = arith.constant 0 : index
    %386 = vector.load %arg13[%c0_190, %c0_191] : memref<32x32xf32, #tpu.memory_space<vmem>>, vector<32x32xf32>
    %cst_192 = arith.constant dense<0.000000e+00> : vector<8x32xf32>
    %387 = tpu.matmul %385, %386, %cst_192 {dimension_numbers = #tpu.dot_dimension_numbers<[1], [0], [0], [1], [0, 0, 1, 1], [], []>} : vector<8x32xf32>, vector<32x32xf32>, vector<8x32xf32> -> vector<8x32xf32>
    %c0_193 = arith.constant 0 : index
    %c0_194 = arith.constant 0 : index
    %388 = vector.load %arg14[%c0_193, %c0_194] : memref<1x32xf32, #tpu.memory_space<vmem>>, vector<1x32xf32>
    %389 = vector.broadcast %388 : vector<1x32xf32> to vector<8x32xf32>
    %390 = arith.addf %387, %389 : vector<8x32xf32>
    %c0_195 = arith.constant 0 : index
    %c0_196 = arith.constant 0 : index
    %391 = vector.load %arg15[%c0_195, %c0_196] : memref<8x32xf32, #tpu.memory_space<vmem>>, vector<8x32xf32>
    tpu.vector_store %arg15[%c0_195, %c0_196], %390 {strides = array<i32>} : memref<8x32xf32, #tpu.memory_space<vmem>>, vector<8x32xf32>,
    return
  }
  func.func @transform_0(%arg0: i32) -> (i32, i32, i32) {
    %c0_i32 = arith.constant 0 : i32
    %c0_i32_0 = arith.constant 0 : i32
    %c0_i32_1 = arith.constant 0 : i32
    return %arg0, %c0_i32, %c0_i32_0 : i32, i32, i32
  }
  func.func @transform_1(%arg0: i32) -> (i32, i32, i32) {
    %c0_i32 = arith.constant 0 : i32
    %c0_i32_0 = arith.constant 0 : i32
    %c0_i32_1 = arith.constant 0 : i32
    return %arg0, %c0_i32, %c0_i32_0 : i32, i32, i32
  }
  func.func @transform_2(%arg0: i32) -> (i32, i32, i32) {
    %c0_i32 = arith.constant 0 : i32
    %c0_i32_0 = arith.constant 0 : i32
    %c0_i32_1 = arith.constant 0 : i32
    return %arg0, %c0_i32, %c0_i32_0 : i32, i32, i32
  }
  func.func @transform_3(%arg0: i32) -> (i32, i32) {
    %c0_i32 = arith.constant 0 : i32
    %c0_i32_0 = arith.constant 0 : i32
    return %arg0, %c0_i32 : i32, i32
  }
  func.func @transform_4(%arg0: i32) -> (i32, i32) {
    %c0_i32 = arith.constant 0 : i32
    %c0_i32_0 = arith.constant 0 : i32
    %c0_i32_1 = arith.constant 0 : i32
    return %c0_i32, %c0_i32_0 : i32, i32
  }
  func.func @transform_5(%arg0: i32) -> (i32, i32) {
    %c0_i32 = arith.constant 0 : i32
    %c0_i32_0 = arith.constant 0 : i32
    %c0_i32_1 = arith.constant 0 : i32
    return %c0_i32, %c0_i32_0 : i32, i32
  }
  func.func @transform_6(%arg0: i32) -> (i32, i32) {
    %c0_i32 = arith.constant 0 : i32
    %c0_i32_0 = arith.constant 0 : i32
    %c0_i32_1 = arith.constant 0 : i32
    return %c0_i32, %c0_i32_0 : i32, i32
  }
  func.func @transform_7(%arg0: i32) -> (i32, i32) {
    %c0_i32 = arith.constant 0 : i32
    %c0_i32_0 = arith.constant 0 : i32
    %c0_i32_1 = arith.constant 0 : i32
    return %c0_i32, %c0_i32_0 : i32, i32
  }
  func.func @transform_8(%arg0: i32) -> (i32, i32) {
    %c0_i32 = arith.constant 0 : i32
    %c0_i32_0 = arith.constant 0 : i32
    %c0_i32_1 = arith.constant 0 : i32
    return %c0_i32, %c0_i32_0 : i32, i32
  }
  func.func @transform_9(%arg0: i32) -> (i32, i32) {
    %c0_i32 = arith.constant 0 : i32
    %c0_i32_0 = arith.constant 0 : i32
    %c0_i32_1 = arith.constant 0 : i32
    return %c0_i32, %c0_i32_0 : i32, i32
  }
  func.func @transform_10(%arg0: i32) -> (i32, i32) {
    %c0_i32 = arith.constant 0 : i32
    %c0_i32_0 = arith.constant 0 : i32
    %c0_i32_1 = arith.constant 0 : i32
    return %c0_i32, %c0_i32_0 : i32, i32
  }
  func.func @transform_11(%arg0: i32) -> (i32, i32) {
    %c0_i32 = arith.constant 0 : i32
    %c0_i32_0 = arith.constant 0 : i32
    %c0_i32_1 = arith.constant 0 : i32
    return %c0_i32, %c0_i32_0 : i32, i32
  }
  func.func @transform_12(%arg0: i32) -> (i32, i32) {
    %c0_i32 = arith.constant 0 : i32
    %c0_i32_0 = arith.constant 0 : i32
    %c0_i32_1 = arith.constant 0 : i32
    return %c0_i32, %c0_i32_0 : i32, i32
  }
  func.func @transform_13(%arg0: i32) -> (i32, i32) {
    %c0_i32 = arith.constant 0 : i32
    %c0_i32_0 = arith.constant 0 : i32
    %c0_i32_1 = arith.constant 0 : i32
    return %c0_i32, %c0_i32_0 : i32, i32
  }
  func.func @transform_14(%arg0: i32) -> (i32, i32) {
    %c0_i32 = arith.constant 0 : i32
    %c0_i32_0 = arith.constant 0 : i32
    return %arg0, %c0_i32 : i32, i32
  }
}

</mosaic_0001>

<llo_original>
// kernel: tpu_custom_call.1
$region0: #{tpu_custom_call.1}
  #allocation0 [shape = 'u32[]', space=smem, size = 0x4, offset = 0x4, fixed_abs, tag = 'smem constant byte address 0x4 - core index']
  #allocation1 [shape = 'u32[144,128]{1,0:T(1,128)}', space=vmem, size = 0x12000, scoped, tag = 'internal scratch']
  %s0 = inlined_call_operand.hbm [shape: f32[8,8,32], index: 0, kind: input, shape index: {}]
  %s1 = inlined_call_operand.hbm [shape: f32[8,8,16], index: 1, kind: input, shape index: {}]
  %s2 = inlined_call_operand.hbm [shape: f32[8,8,16], index: 2, kind: input, shape index: {}]
  %s3 = inlined_call_operand.hbm [shape: f32[8,32], index: 3, kind: input, shape index: {}]
  %s4 = inlined_call_operand.hbm [shape: f32[32,128], index: 4, kind: input, shape index: {}]
  %s5 = inlined_call_operand.hbm [shape: f32[16,128], index: 5, kind: input, shape index: {}]
  %s6 = inlined_call_operand.hbm [shape: f32[16,128], index: 6, kind: input, shape index: {}]
  %s7 = inlined_call_operand.hbm [shape: f32[32,128], index: 7, kind: input, shape index: {}]
  %s8 = inlined_call_operand.vmem [shape: f32[1,128], index: 8, kind: input, shape index: {}]
  %s9 = inlined_call_operand.vmem [shape: f32[32,32], index: 9, kind: input, shape index: {}]
  %s10 = inlined_call_operand.hbm [shape: f32[32,32], index: 10, kind: input, shape index: {}]
  %s11 = inlined_call_operand.vmem [shape: f32[1,32], index: 11, kind: input, shape index: {}]
  %s12 = inlined_call_operand.hbm [shape: f32[32,32], index: 12, kind: input, shape index: {}]
  %s13 = inlined_call_operand.vmem [shape: f32[1,32], index: 13, kind: input, shape index: {}]
  %s14 = inlined_call_operand.hbm [shape: f32[8,32], index: 14, kind: output, shape index: {}]
  %s15 = sld [smem:[#allocation0]]
  $region106: #{tpu_custom_call.1} parent=0
    _
  %s17 = ssub.s32 1, %s15
  %s18 = scalar_select 0, %s17, %s15
  $region1: #{tpu_custom_call.1} parent=0
    #allocation2 [shape = 'u8[32768]{0}', space=vmem, size = 0x8000, scoped, tag = 'input window, operand 0, single buffered']
    #allocation3 [shape = 's32[1]{0}', space=sflag, size = 0x4, scoped, tag = 'scoped memory for tpu_custom_call.1']
    #allocation4 [shape = 's32[1]{0}', space=sflag, size = 0x4, scoped, tag = 'scoped memory for tpu_custom_call.1']
    #allocation5 [shape = 'u8[32768]{0}', space=vmem, size = 0x8000, scoped, tag = 'input window, operand 1, single buffered']
    #allocation6 [shape = 's32[1]{0}', space=sflag, size = 0x4, scoped, tag = 'scoped memory for tpu_custom_call.1']
    #allocation7 [shape = 'u8[32768]{0}', space=vmem, size = 0x8000, scoped, tag = 'input window, operand 2, single buffered']
    #allocation8 [shape = 'u8[4096]{0}', space=vmem, size = 0x1000, scoped, tag = 'input window, operand 3, single buffered']
    #allocation9 [shape = 's32[1]{0}', space=sflag, size = 0x4, scoped, tag = 'scoped memory for tpu_custom_call.1']
    #allocation10 [shape = 'u8[16384]{0}', space=vmem, size = 0x4000, scoped, tag = 'input window, operand 4, single buffered']
    #allocation11 [shape = 'u8[8192]{0}', space=vmem, size = 0x2000, scoped, tag = 'input window, operand 5, single buffered']
    #allocation12 [shape = 's32[1]{0}', space=sflag, size = 0x4, scoped, tag = 'scoped memory for tpu_custom_call.1']
    #allocation13 [shape = 'u8[8192]{0}', space=vmem, size = 0x2000, scoped, tag = 'input window, operand 6, single buffered']
    #allocation14 [shape = 'u8[16384]{0}', space=vmem, size = 0x4000, scoped, tag = 'input window, operand 7, single buffered']
    #allocation15 [shape = 's32[1]{0}', space=sflag, size = 0x4, scoped, tag = 'scoped memory for tpu_custom_call.1']
    #allocation16 [shape = 'u8[16384]{0}', space=vmem, size = 0x4000, scoped, tag = 'input window, operand 10, single buffered']
    #allocation17 [shape = 'u8[16384]{0}', space=vmem, size = 0x4000, scoped, tag = 'input window, operand 12, single buffered']
    #allocation18 [shape = 's32[1]{0}', space=sflag, size = 0x4, scoped, tag = 'scoped memory for tpu_custom_call.1']
    #allocation19 [shape = 'u8[4096]{0}', space=vmem, size = 0x1000, scoped, tag = 'output window, operand 0, single buffered']
    %19 = vsyncpa [#allocation3], 0
    %20 = vsyncpa [#allocation6], 0
    %21 = vsyncpa [#allocation9], 0
    %22 = vsyncpa [#allocation12], 0
    %23 = vsyncpa [#allocation15], 0
    %24 = vsyncpa [#allocation18], 0
    %25 = vsyncpa [#allocation4], 0
    // Predicated region
    $region2: #{tpu_custom_call.1} parent=1 // pred_check
      _
    $region3: #{tpu_custom_call.1} parent=1 // pred_check_branch
      %27 = sbr.rel (0) target = $region5
    $region4: #{tpu_custom_call.1} parent=1 // pred_region
      %s29 = ssub.s32 1024, 1024
      %30 = vsyncadd [#allocation3], %s29
      %s31 = sshll.u32 [#allocation2], 4
      %s32 = int_to_ptr.vmem [resolvable:$true] %s31
      %37 = dma.hbm_to_vmem [thread:$0]  %s0, 1024, %s32, [#allocation3], 128, 128, 8
    $region5: #{tpu_custom_call.1} parent=1 // pred_fallthru
      _
    // Predicated region
    $region6: #{tpu_custom_call.1} parent=1 // pred_check
      _
    $region7: #{tpu_custom_call.1} parent=1 // pred_check_branch
      %39 = sbr.rel (0) target = $region9
    $region8: #{tpu_custom_call.1} parent=1 // pred_region
      %s41 = ssub.s32 1024, 1024
      %42 = vsyncadd [#allocation6], %s41
      %s43 = sshll.u32 [#allocation5], 4
      %s44 = int_to_ptr.vmem [resolvable:$true] %s43
      %49 = dma.hbm_to_vmem [thread:$0]  %s1, 1024, %s44, [#allocation6], 128, 128, 8
    $region9: #{tpu_custom_call.1} parent=1 // pred_fallthru
      _
    // Predicated region
    $region10: #{tpu_custom_call.1} parent=1 // pred_check
      _
    $region11: #{tpu_custom_call.1} parent=1 // pred_check_branch
      %51 = sbr.rel (0) target = $region13
    $region12: #{tpu_custom_call.1} parent=1 // pred_region
      %s53 = ssub.s32 1024, 1024
      %54 = vsyncadd [#allocation6], %s53
      %s55 = sshll.u32 [#allocation7], 4
      %s56 = int_to_ptr.vmem [resolvable:$true] %s55
      %61 = dma.hbm_to_vmem [thread:$0]  %s2, 1024, %s56, [#allocation6], 128, 128, 8
    $region13: #{tpu_custom_call.1} parent=1 // pred_fallthru
      _
    // Predicated region
    $region14: #{tpu_custom_call.1} parent=1 // pred_check
      _
    $region15: #{tpu_custom_call.1} parent=1 // pred_check_branch
      %63 = sbr.rel (0) target = $region17
    $region16: #{tpu_custom_call.1} parent=1 // pred_region
      %s65 = ssub.s32 128, 128
      %66 = vsyncadd [#allocation9], %s65
      %s68 = sshll.u32 [#allocation8], 4
      %s69 = int_to_ptr.vmem [resolvable:$true] %s68
      %71 = dma.hbm_to_vmem [thread:$0]  %s3, 128, %s69, [#allocation9]
    $region17: #{tpu_custom_call.1} parent=1 // pred_fallthru
      _
    // Predicated region
    $region18: #{tpu_custom_call.1} parent=1 // pred_check
      _
    $region19: #{tpu_custom_call.1} parent=1 // pred_check_branch
      %73 = sbr.rel (0) target = $region21
    $region20: #{tpu_custom_call.1} parent=1 // pred_region
      %s75 = ssub.s32 512, 512
      %76 = vsyncadd [#allocation9], %s75
      %s77 = sshll.u32 [#allocation10], 4
      %s78 = int_to_ptr.vmem [resolvable:$true] %s77
      %83 = dma.hbm_to_vmem [thread:$0]  %s4, 512, %s78, [#allocation9], 128, 128, 8
    $region21: #{tpu_custom_call.1} parent=1 // pred_fallthru
      _
    // Predicated region
    $region22: #{tpu_custom_call.1} parent=1 // pred_check
      _
    $region23: #{tpu_custom_call.1} parent=1 // pred_check_branch
      %85 = sbr.rel (0) target = $region25
    $region24: #{tpu_custom_call.1} parent=1 // pred_region
      %s87 = ssub.s32 256, 256
      %88 = vsyncadd [#allocation12], %s87
      %s89 = sshll.u32 [#allocation11], 4
      %s90 = int_to_ptr.vmem [resolvable:$true] %s89
      %95 = dma.hbm_to_vmem [thread:$0]  %s5, 256, %s90, [#allocation12], 128, 128, 8
    $region25: #{tpu_custom_call.1} parent=1 // pred_fallthru
      _
    // Predicated region
    $region26: #{tpu_custom_call.1} parent=1 // pred_check
      _
    $region27: #{tpu_custom_call.1} parent=1 // pred_check_branch
      %97 = sbr.rel (0) target = $region29
    $region28: #{tpu_custom_call.1} parent=1 // pred_region
      %s99 = ssub.s32 256, 256
      %100 = vsyncadd [#allocation12], %s99
      %s101 = sshll.u32 [#allocation13], 4
      %s102 = int_to_ptr.vmem [resolvable:$true] %s101
      %107 = dma.hbm_to_vmem [thread:$0]  %s6, 256, %s102, [#allocation12], 128, 128, 8
    $region29: #{tpu_custom_call.1} parent=1 // pred_fallthru
      _
    // Predicated region
    $region30: #{tpu_custom_call.1} parent=1 // pred_check
      _
    $region31: #{tpu_custom_call.1} parent=1 // pred_check_branch
      %109 = sbr.rel (0) target = $region33
    $region32: #{tpu_custom_call.1} parent=1 // pred_region
      %s111 = ssub.s32 512, 512
      %112 = vsyncadd [#allocation15], %s111
      %s113 = sshll.u32 [#allocation14], 4
      %s114 = int_to_ptr.vmem [resolvable:$true] %s113
      %119 = dma.hbm_to_vmem [thread:$0]  %s7, 512, %s114, [#allocation15], 128, 128, 8
    $region33: #{tpu_custom_call.1} parent=1 // pred_fallthru
      _
    // Predicated region
    $region34: #{tpu_custom_call.1} parent=1 // pred_check
      _
    $region35: #{tpu_custom_call.1} parent=1 // pred_check_branch
      %121 = sbr.rel (0) target = $region37
    $region36: #{tpu_custom_call.1} parent=1 // pred_region
      _
    $region37: #{tpu_custom_call.1} parent=1 // pred_fallthru
      _
    // Predicated region
    $region38: #{tpu_custom_call.1} parent=1 // pred_check
      _
    $region39: #{tpu_custom_call.1} parent=1 // pred_check_branch
      %123 = sbr.rel (0) target = $region41
    $region40: #{tpu_custom_call.1} parent=1 // pred_region
      _
    $region41: #{tpu_custom_call.1} parent=1 // pred_fallthru
      _
    // Predicated region
    $region42: #{tpu_custom_call.1} parent=1 // pred_check
      _
    $region43: #{tpu_custom_call.1} parent=1 // pred_check_branch
      %125 = sbr.rel (0) target = $region45
    $region44: #{tpu_custom_call.1} parent=1 // pred_region
      %s127 = ssub.s32 512, 512
      %128 = vsyncadd [#allocation15], %s127
      %s129 = sshll.u32 [#allocation16], 4
      %s130 = int_to_ptr.vmem [resolvable:$true] %s129
      %135 = dma.hbm_to_vmem [thread:$0]  %s10, 512, %s130, [#allocation15], 128, 128, 8
    $region45: #{tpu_custom_call.1} parent=1 // pred_fallthru
      _
    // Predicated region
    $region46: #{tpu_custom_call.1} parent=1 // pred_check
      _
    $region47: #{tpu_custom_call.1} parent=1 // pred_check_branch
      %137 = sbr.rel (0) target = $region49
    $region48: #{tpu_custom_call.1} parent=1 // pred_region
      _
    $region49: #{tpu_custom_call.1} parent=1 // pred_fallthru
      _
    // Predicated region
    $region50: #{tpu_custom_call.1} parent=1 // pred_check
      _
    $region51: #{tpu_custom_call.1} parent=1 // pred_check_branch
      %139 = sbr.rel (0) target = $region53
    $region52: #{tpu_custom_call.1} parent=1 // pred_region
      %s141 = ssub.s32 512, 512
      %142 = vsyncadd [#allocation18], %s141
      %s143 = sshll.u32 [#allocation17], 4
      %s144 = int_to_ptr.vmem [resolvable:$true] %s143
      %149 = dma.hbm_to_vmem [thread:$0]  %s12, 512, %s144, [#allocation18], 128, 128, 8
    $region53: #{tpu_custom_call.1} parent=1 // pred_fallthru
      _
    // Predicated region
    $region54: #{tpu_custom_call.1} parent=1 // pred_check
      _
    $region55: #{tpu_custom_call.1} parent=1 // pred_check_branch
      %151 = sbr.rel (0) target = $region57
    $region56: #{tpu_custom_call.1} parent=1 // pred_region
      _
    $region57: #{tpu_custom_call.1} parent=1 // pred_fallthru
      _
    // Predicated region
    $region58: #{tpu_custom_call.1} parent=1 // pred_check
      _
    $region59: #{tpu_custom_call.1} parent=1 // pred_check_branch
      %153 = sbr.rel (0) target = $region61
    $region60: #{tpu_custom_call.1} parent=1 // pred_region
      %154 = dma.done [#allocation3], 1024
    $region61: #{tpu_custom_call.1} parent=1 // pred_fallthru
      _
    // Predicated region
    $region62: #{tpu_custom_call.1} parent=1 // pred_check
      _
    $region63: #{tpu_custom_call.1} parent=1 // pred_check_branch
      %156 = sbr.rel (0) target = $region65
    $region64: #{tpu_custom_call.1} parent=1 // pred_region
      %157 = dma.done [#allocation6], 1024
    $region65: #{tpu_custom_call.1} parent=1 // pred_fallthru
      _
    // Predicated region
    $region66: #{tpu_custom_call.1} parent=1 // pred_check
      _
    $region67: #{tpu_custom_call.1} parent=1 // pred_check_branch
      %159 = sbr.rel (0) target = $region69
    $region68: #{tpu_custom_call.1} parent=1 // pred_region
      %160 = dma.done [#allocation6], 1024
    $region69: #{tpu_custom_call.1} parent=1 // pred_fallthru
      _
    // Predicated region
    $region70: #{tpu_custom_call.1} parent=1 // pred_check
      _
    $region71: #{tpu_custom_call.1} parent=1 // pred_check_branch
      %162 = sbr.rel (0) target = $region73
    $region72: #{tpu_custom_call.1} parent=1 // pred_region
      %163 = dma.done [#allocation9], 128
    $region73: #{tpu_custom_call.1} parent=1 // pred_fallthru
      _
    // Predicated region
    $region74: #{tpu_custom_call.1} parent=1 // pred_check
      _
    $region75: #{tpu_custom_call.1} parent=1 // pred_check_branch
      %165 = sbr.rel (0) target = $region77
    $region76: #{tpu_custom_call.1} parent=1 // pred_region
      %166 = dma.done [#allocation9], 512
    $region77: #{tpu_custom_call.1} parent=1 // pred_fallthru
      _
    // Predicated region
    $region78: #{tpu_custom_call.1} parent=1 // pred_check
      _
    $region79: #{tpu_custom_call.1} parent=1 // pred_check_branch
      %168 = sbr.rel (0) target = $region81
    $region80: #{tpu_custom_call.1} parent=1 // pred_region
      %169 = dma.done [#allocation12], 256
    $region81: #{tpu_custom_call.1} parent=1 // pred_fallthru
      _
    // Predicated region
    $region82: #{tpu_custom_call.1} parent=1 // pred_check
      _
    $region83: #{tpu_custom_call.1} parent=1 // pred_check_branch
      %171 = sbr.rel (0) target = $region85
    $region84: #{tpu_custom_call.1} parent=1 // pred_region
      %172 = dma.done [#allocation12], 256
    $region85: #{tpu_custom_call.1} parent=1 // pred_fallthru
      _
    // Predicated region
    $region86: #{tpu_custom_call.1} parent=1 // pred_check
      _
    $region87: #{tpu_custom_call.1} parent=1 // pred_check_branch
      %174 = sbr.rel (0) target = $region89
    $region88: #{tpu_custom_call.1} parent=1 // pred_region
      %175 = dma.done [#allocation15], 512
    $region89: #{tpu_custom_call.1} parent=1 // pred_fallthru
      _
    // Predicated region
    $region90: #{tpu_custom_call.1} parent=1 // pred_check
      _
    $region91: #{tpu_custom_call.1} parent=1 // pred_check_branch
      %177 = sbr.rel (0) target = $region93
    $region92: #{tpu_custom_call.1} parent=1 // pred_region
      %178 = dma.done [#allocation15], 512
    $region93: #{tpu_custom_call.1} parent=1 // pred_fallthru
      _
    // Predicated region
    $region94: #{tpu_custom_call.1} parent=1 // pred_check
      _
    $region95: #{tpu_custom_call.1} parent=1 // pred_check_branch
      %180 = sbr.rel (0) target = $region97
    $region96: #{tpu_custom_call.1} parent=1 // pred_region
      %181 = dma.done [#allocation18], 512
    $region97: #{tpu_custom_call.1} parent=1 // pred_fallthru
      _
    %v182 = vld [vmem:[#allocation10] sm:$0xff]
    %v183 = vld [vmem:[#allocation10 + $0x8] sm:$0xff]
    %v184 = vld [vmem:[#allocation10 + $0x10] sm:$0xff]
    %v185 = vld [vmem:[#allocation10 + $0x18] sm:$0xff]
    %v186 = vld [vmem:[#allocation11] sm:$0xff]
    %v187 = vld [vmem:[#allocation11 + $0x8] sm:$0xff]
    %v188 = vld [vmem:[#allocation13] sm:$0xff]
    %v189 = vld [vmem:[#allocation13 + $0x8] sm:$0xff]
    %v190 = vld [vmem:[#allocation14] sm:$0xff]
    %v191 = vld [vmem:[#allocation14 + $0x8] sm:$0xff]
    %v192 = vld [vmem:[#allocation14 + $0x10] sm:$0xff]
    %v193 = vld [vmem:[#allocation14 + $0x18] sm:$0xff]
    %v194 = vld [vmem:[%s8] sm:$0x1]
    %v195 = vld [vmem:[#allocation2] sm:$0x1]
    %v196 = vld [vmem:[#allocation2 + $0x8] sm:$0x1]
    %v197 = vld [vmem:[#allocation2 + $0x10] sm:$0x1]
    %v198 = vld [vmem:[#allocation2 + $0x18] sm:$0x1]
    %v199 = vld [vmem:[#allocation2 + $0x20] sm:$0x1]
    %v200 = vld [vmem:[#allocation2 + $0x28] sm:$0x1]
    %v201 = vld [vmem:[#allocation2 + $0x30] sm:$0x1]
    %v202 = vld [vmem:[#allocation2 + $0x38] sm:$0x1]
    %v203 = vld [vmem:[#allocation5] sm:$0x1]
    %v204 = vld [vmem:[#allocation5 + $0x8] sm:$0x1]
    %v205 = vld [vmem:[#allocation5 + $0x10] sm:$0x1]
    %v206 = vld [vmem:[#allocation5 + $0x18] sm:$0x1]
    %v207 = vld [vmem:[#allocation5 + $0x20] sm:$0x1]
    %v208 = vld [vmem:[#allocation5 + $0x28] sm:$0x1]
    %v209 = vld [vmem:[#allocation5 + $0x30] sm:$0x1]
    %v210 = vld [vmem:[#allocation5 + $0x38] sm:$0x1]
    %v219 = vrot.slane %v204, 7
    %vm220 = vcmask 1041409
    %v221 = vsel %vm220, %v219, %v203
    %v222 = vrot.slane %v205, 6
    %vm223 = vcmask 1042434
    %v224 = vsel %vm223, %v222, %v221
    %v225 = vrot.slane %v206, 5
    %vm226 = vcmask 1043459
    %v227 = vsel %vm226, %v225, %v224
    %v228 = vrot.slane %v207, 4
    %vm229 = vcmask 1044484
    %v230 = vsel %vm229, %v228, %v227
    %v231 = vrot.slane %v208, 3
    %vm232 = vcmask 1045509
    %v233 = vsel %vm232, %v231, %v230
    %v234 = vrot.slane %v209, 2
    %vm235 = vcmask 1046534
    %v236 = vsel %vm235, %v234, %v233
    %v237 = vrot.slane %v210, 1
    %vm238 = vcmask 1047559
    %v239 = vsel %vm238, %v237, %v236
    %vm240 = vcmask 130048
    %v241 = vsel %vm240, %v239, 0
    %243 = vmatprep.subr.mxu0 0.0
    %244 = vmatpush1.msra.mxu0 %v186
    %245 = vmatprep.subr.mxu0 0.0
    %246 = vmatpush1.msra.mxu0 %v187
    %247 = vmatprep.subr.mxu0 0.0
    %248 = vmatpush1.msra.mxu0 0.0
    %249 = vmatprep.subr.mxu0 0.0
    %250 = vmatpush1.msra.mxu0 0.0
    %251 = vmatprep.subr.mxu0 0.0
    %252 = vmatpush1.msra.mxu0 0.0
    %253 = vmatprep.subr.mxu0 0.0
    %254 = vmatpush1.msra.mxu0 0.0
    %255 = vmatprep.subr.mxu0 0.0
    %256 = vmatpush1.msra.mxu0 0.0
    %257 = vmatprep.subr.mxu0 0.0
    %258 = vmatpush1.msra.mxu0 0.0
    %259 = vmatprep.subr.mxu0 0.0
    %260 = vmatpush1.msra.mxu0 0.0
    %261 = vmatprep.subr.mxu0 0.0
    %262 = vmatpush1.msra.mxu0 0.0
    %263 = vmatprep.subr.mxu0 0.0
    %264 = vmatpush1.msra.mxu0 0.0
    %265 = vmatprep.subr.mxu0 0.0
    %266 = vmatpush1.msra.mxu0 0.0
    %267 = vmatprep.subr.mxu0 0.0
    %268 = vmatpush1.msra.mxu0 0.0
    %269 = vmatprep.subr.mxu0 0.0
    %270 = vmatpush1.msra.mxu0 0.0
    %271 = vmatprep.subr.mxu0 0.0
    %272 = vmatpush1.msra.mxu0 0.0
    %273 = vmatprep.subr.mxu0 0.0
    %274 = vmatpush1.msra.mxu0 0.0
    %275 = vmatprep.subr.mxu0 0.0
    %276 = vmatpush1.msra.mxu0 0.0
    %277 = vmatprep.subr.mxu0 0.0
    %278 = vmatpush1.msra.mxu0 0.0
    %279 = vmatprep.subr.mxu0 0.0
    %280 = vmatpush1.msra.mxu0 0.0
    %281 = vmatprep.subr.mxu0 0.0
    %282 = vmatpush1.msra.mxu0 0.0
    %283 = vmatprep.subr.mxu0 0.0
    %284 = vmatpush1.msra.mxu0 0.0
    %285 = vmatprep.subr.mxu0 0.0
    %286 = vmatpush1.msra.mxu0 0.0
    %287 = vmatprep.subr.mxu0 0.0
    %288 = vmatpush1.msra.mxu0 0.0
    %289 = vmatprep.subr.mxu0 0.0
    %290 = vmatpush1.msra.mxu0 0.0
    %291 = vmatprep.subr.mxu0 0.0
    %292 = vmatpush1.msra.mxu0 0.0
    %293 = vmatprep.subr.mxu0 0.0
    %294 = vmatpush1.msra.mxu0 0.0
    %295 = vmatprep.subr.mxu0 0.0
    %296 = vmatpush1.msra.mxu0 0.0
    %297 = vmatprep.subr.mxu0 0.0
    %298 = vmatpush1.msra.mxu0 0.0
    %299 = vmatprep.subr.mxu0 0.0
    %300 = vmatpush1.msra.mxu0 0.0
    %301 = vmatprep.subr.mxu0 0.0
    %302 = vmatpush1.msra.mxu0 0.0
    %303 = vmatprep.subr.mxu0 0.0
    %304 = vmatpush1.msra.mxu0 0.0
    %305 = vmatprep.subr.mxu0 0.0
    %306 = vmatpush1.msra.mxu0 0.0
    %307 = vmatprep.mubr.f32.mxu0 0.0
    %308 = vmatmul.mubr.f32.gmra.mrb[0].mxu0 %v241
    %v309 = vpop.f32.mrb[0].mxu0
    %v310 = vadd.f32 0.0, %v309
    %v311 = vpop.f32.mrb[0].mxu0
    %312 = vdwg.mxu0
    %v321 = vrot.slane %v196, 7
    %v322 = vsel %vm220, %v321, %v195
    %v323 = vrot.slane %v197, 6
    %v324 = vsel %vm223, %v323, %v322
    %v325 = vrot.slane %v198, 5
    %v326 = vsel %vm226, %v325, %v324
    %v327 = vrot.slane %v199, 4
    %v328 = vsel %vm229, %v327, %v326
    %v329 = vrot.slane %v200, 3
    %v330 = vsel %vm232, %v329, %v328
    %v331 = vrot.slane %v201, 2
    %v332 = vsel %vm235, %v331, %v330
    %v333 = vrot.slane %v202, 1
    %v334 = vsel %vm238, %v333, %v332
    %vm335 = vcmask 261120
    %v336 = vsel %vm335, %v334, 0
    %338 = vmatprep.subr.mxu0 0.0
    %339 = vmatpush1.msra.mxu0 %v182
    %340 = vmatprep.subr.mxu0 0.0
    %341 = vmatpush1.msra.mxu0 %v183
    %342 = vmatprep.subr.mxu0 0.0
    %343 = vmatpush1.msra.mxu0 %v184
    %344 = vmatprep.subr.mxu0 0.0
    %345 = vmatpush1.msra.mxu0 %v185
    %346 = vmatprep.subr.mxu0 0.0
    %347 = vmatpush1.msra.mxu0 0.0
    %348 = vmatprep.subr.mxu0 0.0
    %349 = vmatpush1.msra.mxu0 0.0
    %350 = vmatprep.subr.mxu0 0.0
    %351 = vmatpush1.msra.mxu0 0.0
    %352 = vmatprep.subr.mxu0 0.0
    %353 = vmatpush1.msra.mxu0 0.0
    %354 = vmatprep.subr.mxu0 0.0
    %355 = vmatpush1.msra.mxu0 0.0
    %356 = vmatprep.subr.mxu0 0.0
    %357 = vmatpush1.msra.mxu0 0.0
    %358 = vmatprep.subr.mxu0 0.0
    %359 = vmatpush1.msra.mxu0 0.0
    %360 = vmatprep.subr.mxu0 0.0
    %361 = vmatpush1.msra.mxu0 0.0
    %362 = vmatprep.subr.mxu0 0.0
    %363 = vmatpush1.msra.mxu0 0.0
    %364 = vmatprep.subr.mxu0 0.0
    %365 = vmatpush1.msra.mxu0 0.0
    %366 = vmatprep.subr.mxu0 0.0
    %367 = vmatpush1.msra.mxu0 0.0
    %368 = vmatprep.subr.mxu0 0.0
    %369 = vmatpush1.msra.mxu0 0.0
    %370 = vmatprep.subr.mxu0 0.0
    %371 = vmatpush1.msra.mxu0 0.0
    %372 = vmatprep.subr.mxu0 0.0
    %373 = vmatpush1.msra.mxu0 0.0
    %374 = vmatprep.subr.mxu0 0.0
    %375 = vmatpush1.msra.mxu0 0.0
    %376 = vmatprep.subr.mxu0 0.0
    %377 = vmatpush1.msra.mxu0 0.0
    %378 = vmatprep.subr.mxu0 0.0
    %379 = vmatpush1.msra.mxu0 0.0
    %380 = vmatprep.subr.mxu0 0.0
    %381 = vmatpush1.msra.mxu0 0.0
    %382 = vmatprep.subr.mxu0 0.0
    %383 = vmatpush1.msra.mxu0 0.0
    %384 = vmatprep.subr.mxu0 0.0
    %385 = vmatpush1.msra.mxu0 0.0
    %386 = vmatprep.subr.mxu0 0.0
    %387 = vmatpush1.msra.mxu0 0.0
    %388 = vmatprep.subr.mxu0 0.0
    %389 = vmatpush1.msra.mxu0 0.0
    %390 = vmatprep.subr.mxu0 0.0
    %391 = vmatpush1.msra.mxu0 0.0
    %392 = vmatprep.subr.mxu0 0.0
    %393 = vmatpush1.msra.mxu0 0.0
    %394 = vmatprep.subr.mxu0 0.0
    %395 = vmatpush1.msra.mxu0 0.0
    %396 = vmatprep.subr.mxu0 0.0
    %397 = vmatpush1.msra.mxu0 0.0
    %398 = vmatprep.subr.mxu0 0.0
    %399 = vmatpush1.msra.mxu0 0.0
    %400 = vmatprep.subr.mxu0 0.0
    %401 = vmatpush1.msra.mxu0 0.0
    %402 = vmatprep.mubr.f32.mxu0 0.0
    %403 = vmatmul.mubr.f32.gmra.mrb[0].mxu0 %v336
    %v404 = vpop.f32.mrb[0].mxu0
    %v405 = vadd.f32 %v310, %v404
    %v406 = vpop.f32.mrb[0].mxu0
    %407 = vdwg.mxu0
    %v408 = vld [vmem:[#allocation7] sm:$0x1]
    %v409 = vld [vmem:[#allocation7 + $0x8] sm:$0x1]
    %v410 = vld [vmem:[#allocation7 + $0x10] sm:$0x1]
    %v411 = vld [vmem:[#allocation7 + $0x18] sm:$0x1]
    %v412 = vld [vmem:[#allocation7 + $0x20] sm:$0x1]
    %v413 = vld [vmem:[#allocation7 + $0x28] sm:$0x1]
    %v414 = vld [vmem:[#allocation7 + $0x30] sm:$0x1]
    %v415 = vld [vmem:[#allocation7 + $0x38] sm:$0x1]
    %v424 = vrot.slane %v409, 7
    %v425 = vsel %vm220, %v424, %v408
    %v426 = vrot.slane %v410, 6
    %v427 = vsel %vm223, %v426, %v425
    %v428 = vrot.slane %v411, 5
    %v429 = vsel %vm226, %v428, %v427
    %v430 = vrot.slane %v412, 4
    %v431 = vsel %vm229, %v430, %v429
    %v432 = vrot.slane %v413, 3
    %v433 = vsel %vm232, %v432, %v431
    %v434 = vrot.slane %v414, 2
    %v435 = vsel %vm235, %v434, %v433
    %v436 = vrot.slane %v415, 1
    %v437 = vsel %vm238, %v436, %v435
    %v438 = vsel %vm240, %v437, 0
    %440 = vmatprep.subr.mxu0 0.0
    %441 = vmatpush1.msra.mxu0 %v188
    %442 = vmatprep.subr.mxu0 0.0
    %443 = vmatpush1.msra.mxu0 %v189
    %444 = vmatprep.subr.mxu0 0.0
    %445 = vmatpush1.msra.mxu0 0.0
    %446 = vmatprep.subr.mxu0 0.0
    %447 = vmatpush1.msra.mxu0 0.0
    %448 = vmatprep.subr.mxu0 0.0
    %449 = vmatpush1.msra.mxu0 0.0
    %450 = vmatprep.subr.mxu0 0.0
    %451 = vmatpush1.msra.mxu0 0.0
    %452 = vmatprep.subr.mxu0 0.0
    %453 = vmatpush1.msra.mxu0 0.0
    %454 = vmatprep.subr.mxu0 0.0
    %455 = vmatpush1.msra.mxu0 0.0
    %456 = vmatprep.subr.mxu0 0.0
    %457 = vmatpush1.msra.mxu0 0.0
    %458 = vmatprep.subr.mxu0 0.0
    %459 = vmatpush1.msra.mxu0 0.0
    %460 = vmatprep.subr.mxu0 0.0
    %461 = vmatpush1.msra.mxu0 0.0
    %462 = vmatprep.subr.mxu0 0.0
    %463 = vmatpush1.msra.mxu0 0.0
    %464 = vmatprep.subr.mxu0 0.0
    %465 = vmatpush1.msra.mxu0 0.0
    %466 = vmatprep.subr.mxu0 0.0
    %467 = vmatpush1.msra.mxu0 0.0
    %468 = vmatprep.subr.mxu0 0.0
    %469 = vmatpush1.msra.mxu0 0.0
    %470 = vmatprep.subr.mxu0 0.0
    %471 = vmatpush1.msra.mxu0 0.0
    %472 = vmatprep.subr.mxu0 0.0
    %473 = vmatpush1.msra.mxu0 0.0
    %474 = vmatprep.subr.mxu0 0.0
    %475 = vmatpush1.msra.mxu0 0.0
    %476 = vmatprep.subr.mxu0 0.0
    %477 = vmatpush1.msra.mxu0 0.0
    %478 = vmatprep.subr.mxu0 0.0
    %479 = vmatpush1.msra.mxu0 0.0
    %480 = vmatprep.subr.mxu0 0.0
    %481 = vmatpush1.msra.mxu0 0.0
    %482 = vmatprep.subr.mxu0 0.0
    %483 = vmatpush1.msra.mxu0 0.0
    %484 = vmatprep.subr.mxu0 0.0
    %485 = vmatpush1.msra.mxu0 0.0
    %486 = vmatprep.subr.mxu0 0.0
    %487 = vmatpush1.msra.mxu0 0.0
    %488 = vmatprep.subr.mxu0 0.0
    %489 = vmatpush1.msra.mxu0 0.0
    %490 = vmatprep.subr.mxu0 0.0
    %491 = vmatpush1.msra.mxu0 0.0
    %492 = vmatprep.subr.mxu0 0.0
    %493 = vmatpush1.msra.mxu0 0.0
    %494 = vmatprep.subr.mxu0 0.0
    %495 = vmatpush1.msra.mxu0 0.0
    %496 = vmatprep.subr.mxu0 0.0
    %497 = vmatpush1.msra.mxu0 0.0
    %498 = vmatprep.subr.mxu0 0.0
    %499 = vmatpush1.msra.mxu0 0.0
    %500 = vmatprep.subr.mxu0 0.0
    %501 = vmatpush1.msra.mxu0 0.0
    %502 = vmatprep.subr.mxu0 0.0
    %503 = vmatpush1.msra.mxu0 0.0
    %504 = vmatprep.mubr.f32.mxu0 0.0
    %505 = vmatmul.mubr.f32.gmra.mrb[0].mxu0 %v438
    %v506 = vpop.f32.mrb[0].mxu0
    %v507 = vadd.f32 0.0, %v506
    %v508 = vpop.f32.mrb[0].mxu0
    %509 = vdwg.mxu0
    %v510 = vadd.f32 %v405, %v507
    %v512 = vsel %vm335, 0.0, 0
    %514 = vmatprep.subr.mxu0 0.0
    %515 = vmatpush1.msra.mxu0 %v190
    %516 = vmatprep.subr.mxu0 0.0
    %517 = vmatpush1.msra.mxu0 %v191
    %518 = vmatprep.subr.mxu0 0.0
    %519 = vmatpush1.msra.mxu0 %v192
    %520 = vmatprep.subr.mxu0 0.0
    %521 = vmatpush1.msra.mxu0 %v193
    %522 = vmatprep.subr.mxu0 0.0
    %523 = vmatpush1.msra.mxu0 0.0
    %524 = vmatprep.subr.mxu0 0.0
    %525 = vmatpush1.msra.mxu0 0.0
    %526 = vmatprep.subr.mxu0 0.0
    %527 = vmatpush1.msra.mxu0 0.0
    %528 = vmatprep.subr.mxu0 0.0
    %529 = vmatpush1.msra.mxu0 0.0
    %530 = vmatprep.subr.mxu0 0.0
    %531 = vmatpush1.msra.mxu0 0.0
    %532 = vmatprep.subr.mxu0 0.0
    %533 = vmatpush1.msra.mxu0 0.0
    %534 = vmatprep.subr.mxu0 0.0
    %535 = vmatpush1.msra.mxu0 0.0
    %536 = vmatprep.subr.mxu0 0.0
    %537 = vmatpush1.msra.mxu0 0.0
    %538 = vmatprep.subr.mxu0 0.0
    %539 = vmatpush1.msra.mxu0 0.0
    %540 = vmatprep.subr.mxu0 0.0
    %541 = vmatpush1.msra.mxu0 0.0
    %542 = vmatprep.subr.mxu0 0.0
    %543 = vmatpush1.msra.mxu0 0.0
    %544 = vmatprep.subr.mxu0 0.0
    %545 = vmatpush1.msra.mxu0 0.0
    %546 = vmatprep.subr.mxu0 0.0
    %547 = vmatpush1.msra.mxu0 0.0
    %548 = vmatprep.subr.mxu0 0.0
    %549 = vmatpush1.msra.mxu0 0.0
    %550 = vmatprep.subr.mxu0 0.0
    %551 = vmatpush1.msra.mxu0 0.0
    %552 = vmatprep.subr.mxu0 0.0
    %553 = vmatpush1.msra.mxu0 0.0
    %554 = vmatprep.subr.mxu0 0.0
    %555 = vmatpush1.msra.mxu0 0.0
    %556 = vmatprep.subr.mxu0 0.0
    %557 = vmatpush1.msra.mxu0 0.0
    %558 = vmatprep.subr.mxu0 0.0
    %559 = vmatpush1.msra.mxu0 0.0
    %560 = vmatprep.subr.mxu0 0.0
    %561 = vmatpush1.msra.mxu0 0.0
    %562 = vmatprep.subr.mxu0 0.0
    %563 = vmatpush1.msra.mxu0 0.0
    %564 = vmatprep.subr.mxu0 0.0
    %565 = vmatpush1.msra.mxu0 0.0
    %566 = vmatprep.subr.mxu0 0.0
    %567 = vmatpush1.msra.mxu0 0.0
    %568 = vmatprep.subr.mxu0 0.0
    %569 = vmatpush1.msra.mxu0 0.0
    %570 = vmatprep.subr.mxu0 0.0
    %571 = vmatpush1.msra.mxu0 0.0
    %572 = vmatprep.subr.mxu0 0.0
    %573 = vmatpush1.msra.mxu0 0.0
    %574 = vmatprep.subr.mxu0 0.0
    %575 = vmatpush1.msra.mxu0 0.0
    %576 = vmatprep.subr.mxu0 0.0
    %577 = vmatpush1.msra.mxu0 0.0
    %578 = vmatprep.mubr.f32.mxu0 0.0
    %579 = vmatmul.mubr.f32.gmra.mrb[0].mxu0 %v512
    %v580 = vpop.f32.mrb[0].mxu0
    %v581 = vadd.f32 0.0, %v580
    %v582 = vpop.f32.mrb[0].mxu0
    %583 = vdwg.mxu0
    %v584 = vadd.f32 %v510, %v581
    %v586 = vlaneseq
    %v587 = vshrl.u32 %v586, 7
    %v588 = vsub.s32 0, %v587
    %v589 = vrot.slane %v194, %v588
    %v591 = vadd.f32 %v584, %v589
    %v592 = vsub.f32 0.0, %v591
    %v593 = vmul.f32 %v592, 1.442695
    %v594 = vpow.pop %v593
    %v595 = vadd.f32 %v594, 1.0
    %v596 = vrcp.pop %v595
    %v597 = vmul.f32 1.0, %v596
    %v598 = vtanh.pop %v591
    %v599 = vmul.f32 %v597, 0.0
    %601 = vrot.lane.b32.xlu0 %v598, 64
    %v602 = vpop.permute.xlu0 %601
    %v604 = vmul.f32 %v597, %v602
    %606 = vrot.lane.b32.xlu0 %v604, 32
    %v607 = vpop.permute.xlu0 %606
    %v609 = vadd.f32 %v599, %v607
    %v610 = vtanh.pop %v609
    %612 = vrot.lane.b32.xlu0 %v610, 64
    %v613 = vpop.permute.xlu0 %612
    %v615 = vmul.f32 %v597, %v613
    %v616 = vld [vmem:[#allocation2 + $0x1] sm:$0x1]
    %v617 = vld [vmem:[#allocation2 + $0x9] sm:$0x1]
    %v618 = vld [vmem:[#allocation2 + $0x11] sm:$0x1]
    %v619 = vld [vmem:[#allocation2 + $0x19] sm:$0x1]
    %v620 = vld [vmem:[#allocation2 + $0x21] sm:$0x1]
    %v621 = vld [vmem:[#allocation2 + $0x29] sm:$0x1]
    %v622 = vld [vmem:[#allocation2 + $0x31] sm:$0x1]
    %v623 = vld [vmem:[#allocation2 + $0x39] sm:$0x1]
    %v624 = vld [vmem:[#allocation5 + $0x1] sm:$0x1]
    %v625 = vld [vmem:[#allocation5 + $0x9] sm:$0x1]
    %v626 = vld [vmem:[#allocation5 + $0x11] sm:$0x1]
    %v627 = vld [vmem:[#allocation5 + $0x19] sm:$0x1]
    %v628 = vld [vmem:[#allocation5 + $0x21] sm:$0x1]
    %v629 = vld [vmem:[#allocation5 + $0x29] sm:$0x1]
    %v630 = vld [vmem:[#allocation5 + $0x31] sm:$0x1]
    %v631 = vld [vmem:[#allocation5 + $0x39] sm:$0x1]
    %v640 = vrot.slane %v625, 7
    %v641 = vsel %vm220, %v640, %v624
    %v642 = vrot.slane %v626, 6
    %v643 = vsel %vm223, %v642, %v641
    %v644 = vrot.slane %v627, 5
    %v645 = vsel %vm226, %v644, %v643
    %v646 = vrot.slane %v628, 4
    %v647 = vsel %vm229, %v646, %v645
    %v648 = vrot.slane %v629, 3
    %v649 = vsel %vm232, %v648, %v647
    %v650 = vrot.slane %v630, 2
    %v651 = vsel %vm235, %v650, %v649
    %v652 = vrot.slane %v631, 1
    %v653 = vsel %vm238, %v652, %v651
    %v654 = vsel %vm240, %v653, 0
    %656 = vmatprep.subr.mxu0 0.0
    %657 = vmatpush1.msra.mxu0 %v186
    %658 = vmatprep.subr.mxu0 0.0
    %659 = vmatpush1.msra.mxu0 %v187
    %660 = vmatprep.subr.mxu0 0.0
    %661 = vmatpush1.msra.mxu0 0.0
    %662 = vmatprep.subr.mxu0 0.0
    %663 = vmatpush1.msra.mxu0 0.0
    %664 = vmatprep.subr.mxu0 0.0
    %665 = vmatpush1.msra.mxu0 0.0
    %666 = vmatprep.subr.mxu0 0.0
    %667 = vmatpush1.msra.mxu0 0.0
    %668 = vmatprep.subr.mxu0 0.0
    %669 = vmatpush1.msra.mxu0 0.0
    %670 = vmatprep.subr.mxu0 0.0
    %671 = vmatpush1.msra.mxu0 0.0
    %672 = vmatprep.subr.mxu0 0.0
    %673 = vmatpush1.msra.mxu0 0.0
    %674 = vmatprep.subr.mxu0 0.0
    %675 = vmatpush1.msra.mxu0 0.0
    %676 = vmatprep.subr.mxu0 0.0
    %677 = vmatpush1.msra.mxu0 0.0
    %678 = vmatprep.subr.mxu0 0.0
    %679 = vmatpush1.msra.mxu0 0.0
    %680 = vmatprep.subr.mxu0 0.0
    %681 = vmatpush1.msra.mxu0 0.0
    %682 = vmatprep.subr.mxu0 0.0
    %683 = vmatpush1.msra.mxu0 0.0
    %684 = vmatprep.subr.mxu0 0.0
    %685 = vmatpush1.msra.mxu0 0.0
    %686 = vmatprep.subr.mxu0 0.0
    %687 = vmatpush1.msra.mxu0 0.0
    %688 = vmatprep.subr.mxu0 0.0
    %689 = vmatpush1.msra.mxu0 0.0
    %690 = vmatprep.subr.mxu0 0.0
    %691 = vmatpush1.msra.mxu0 0.0
    %692 = vmatprep.subr.mxu0 0.0
    %693 = vmatpush1.msra.mxu0 0.0
    %694 = vmatprep.subr.mxu0 0.0
    %695 = vmatpush1.msra.mxu0 0.0
    %696 = vmatprep.subr.mxu0 0.0
    %697 = vmatpush1.msra.mxu0 0.0
    %698 = vmatprep.subr.mxu0 0.0
    %699 = vmatpush1.msra.mxu0 0.0
    %700 = vmatprep.subr.mxu0 0.0
    %701 = vmatpush1.msra.mxu0 0.0
    %702 = vmatprep.subr.mxu0 0.0
    %703 = vmatpush1.msra.mxu0 0.0
    %704 = vmatprep.subr.mxu0 0.0
    %705 = vmatpush1.msra.mxu0 0.0
    %706 = vmatprep.subr.mxu0 0.0
    %707 = vmatpush1.msra.mxu0 0.0
    %708 = vmatprep.subr.mxu0 0.0
    %709 = vmatpush1.msra.mxu0 0.0
    %710 = vmatprep.subr.mxu0 0.0
    %711 = vmatpush1.msra.mxu0 0.0
    %712 = vmatprep.subr.mxu0 0.0
    %713 = vmatpush1.msra.mxu0 0.0
    %714 = vmatprep.subr.mxu0 0.0
    %715 = vmatpush1.msra.mxu0 0.0
    %716 = vmatprep.subr.mxu0 0.0
    %717 = vmatpush1.msra.mxu0 0.0
    %718 = vmatprep.subr.mxu0 0.0
    %719 = vmatpush1.msra.mxu0 0.0
    %720 = vmatprep.mubr.f32.mxu0 0.0
    %721 = vmatmul.mubr.f32.gmra.mrb[0].mxu0 %v654
    %v722 = vpop.f32.mrb[0].mxu0
    %v723 = vadd.f32 0.0, %v722
    %v724 = vpop.f32.mrb[0].mxu0
    %725 = vdwg.mxu0
    %v734 = vrot.slane %v617, 7
    %v735 = vsel %vm220, %v734, %v616
    %v736 = vrot.slane %v618, 6
    %v737 = vsel %vm223, %v736, %v735
    %v738 = vrot.slane %v619, 5
    %v739 = vsel %vm226, %v738, %v737
    %v740 = vrot.slane %v620, 4
    %v741 = vsel %vm229, %v740, %v739
    %v742 = vrot.slane %v621, 3
    %v743 = vsel %vm232, %v742, %v741
    %v744 = vrot.slane %v622, 2
    %v745 = vsel %vm235, %v744, %v743
    %v746 = vrot.slane %v623, 1
    %v747 = vsel %vm238, %v746, %v745
    %v748 = vsel %vm335, %v747, 0
    %750 = vmatprep.subr.mxu0 0.0
    %751 = vmatpush1.msra.mxu0 %v182
    %752 = vmatprep.subr.mxu0 0.0
    %753 = vmatpush1.msra.mxu0 %v183
    %754 = vmatprep.subr.mxu0 0.0
    %755 = vmatpush1.msra.mxu0 %v184
    %756 = vmatprep.subr.mxu0 0.0
    %757 = vmatpush1.msra.mxu0 %v185
    %758 = vmatprep.subr.mxu0 0.0
    %759 = vmatpush1.msra.mxu0 0.0
    %760 = vmatprep.subr.mxu0 0.0
    %761 = vmatpush1.msra.mxu0 0.0
    %762 = vmatprep.subr.mxu0 0.0
    %763 = vmatpush1.msra.mxu0 0.0
    %764 = vmatprep.subr.mxu0 0.0
    %765 = vmatpush1.msra.mxu0 0.0
    %766 = vmatprep.subr.mxu0 0.0
    %767 = vmatpush1.msra.mxu0 0.0
    %768 = vmatprep.subr.mxu0 0.0
    %769 = vmatpush1.msra.mxu0 0.0
    %770 = vmatprep.subr.mxu0 0.0
    %771 = vmatpush1.msra.mxu0 0.0
    %772 = vmatprep.subr.mxu0 0.0
    %773 = vmatpush1.msra.mxu0 0.0
    %774 = vmatprep.subr.mxu0 0.0
    %775 = vmatpush1.msra.mxu0 0.0
    %776 = vmatprep.subr.mxu0 0.0
    %777 = vmatpush1.msra.mxu0 0.0
    %778 = vmatprep.subr.mxu0 0.0
    %779 = vmatpush1.msra.mxu0 0.0
    %780 = vmatprep.subr.mxu0 0.0
    %781 = vmatpush1.msra.mxu0 0.0
    %782 = vmatprep.subr.mxu0 0.0
    %783 = vmatpush1.msra.mxu0 0.0
    %784 = vmatprep.subr.mxu0 0.0
    %785 = vmatpush1.msra.mxu0 0.0
    %786 = vmatprep.subr.mxu0 0.0
    %787 = vmatpush1.msra.mxu0 0.0
    %788 = vmatprep.subr.mxu0 0.0
    %789 = vmatpush1.msra.mxu0 0.0
    %790 = vmatprep.subr.mxu0 0.0
    %791 = vmatpush1.msra.mxu0 0.0
    %792 = vmatprep.subr.mxu0 0.0
    %793 = vmatpush1.msra.mxu0 0.0
    %794 = vmatprep.subr.mxu0 0.0
    %795 = vmatpush1.msra.mxu0 0.0
    %796 = vmatprep.subr.mxu0 0.0
    %797 = vmatpush1.msra.mxu0 0.0
    %798 = vmatprep.subr.mxu0 0.0
    %799 = vmatpush1.msra.mxu0 0.0
    %800 = vmatprep.subr.mxu0 0.0
    %801 = vmatpush1.msra.mxu0 0.0
    %802 = vmatprep.subr.mxu0 0.0
    %803 = vmatpush1.msra.mxu0 0.0
    %804 = vmatprep.subr.mxu0 0.0
    %805 = vmatpush1.msra.mxu0 0.0
    %806 = vmatprep.subr.mxu0 0.0
    %807 = vmatpush1.msra.mxu0 0.0
    %808 = vmatprep.subr.mxu0 0.0
    %809 = vmatpush1.msra.mxu0 0.0
    %810 = vmatprep.subr.mxu0 0.0
    %811 = vmatpush1.msra.mxu0 0.0
    %812 = vmatprep.subr.mxu0 0.0
    %813 = vmatpush1.msra.mxu0 0.0
    %814 = vmatprep.mubr.f32.mxu0 0.0
    %815 = vmatmul.mubr.f32.gmra.mrb[0].mxu0 %v748
    %v816 = vpop.f32.mrb[0].mxu0
    %v817 = vadd.f32 %v723, %v816
    %v818 = vpop.f32.mrb[0].mxu0
    %819 = vdwg.mxu0
    %v820 = vld [vmem:[#allocation7 + $0x1] sm:$0x1]
    %v821 = vld [vmem:[#allocation7 + $0x9] sm:$0x1]
    %v822 = vld [vmem:[#allocation7 + $0x11] sm:$0x1]
    %v823 = vld [vmem:[#allocation7 + $0x19] sm:$0x1]
    %v824 = vld [vmem:[#allocation7 + $0x21] sm:$0x1]
    %v825 = vld [vmem:[#allocation7 + $0x29] sm:$0x1]
    %v826 = vld [vmem:[#allocation7 + $0x31] sm:$0x1]
    %v827 = vld [vmem:[#allocation7 + $0x39] sm:$0x1]
    %v836 = vrot.slane %v821, 7
    %v837 = vsel %vm220, %v836, %v820
    %v838 = vrot.slane %v822, 6
    %v839 = vsel %vm223, %v838, %v837
    %v840 = vrot.slane %v823, 5
    %v841 = vsel %vm226, %v840, %v839
    %v842 = vrot.slane %v824, 4
    %v843 = vsel %vm229, %v842, %v841
    %v844 = vrot.slane %v825, 3
    %v845 = vsel %vm232, %v844, %v843
    %v846 = vrot.slane %v826, 2
    %v847 = vsel %vm235, %v846, %v845
    %v848 = vrot.slane %v827, 1
    %v849 = vsel %vm238, %v848, %v847
    %v850 = vsel %vm240, %v849, 0
    %852 = vmatprep.subr.mxu0 0.0
    %853 = vmatpush1.msra.mxu0 %v188
    %854 = vmatprep.subr.mxu0 0.0
    %855 = vmatpush1.msra.mxu0 %v189
    %856 = vmatprep.subr.mxu0 0.0
    %857 = vmatpush1.msra.mxu0 0.0
    %858 = vmatprep.subr.mxu0 0.0
    %859 = vmatpush1.msra.mxu0 0.0
    %860 = vmatprep.subr.mxu0 0.0
    %861 = vmatpush1.msra.mxu0 0.0
    %862 = vmatprep.subr.mxu0 0.0
    %863 = vmatpush1.msra.mxu0 0.0
    %864 = vmatprep.subr.mxu0 0.0
    %865 = vmatpush1.msra.mxu0 0.0
    %866 = vmatprep.subr.mxu0 0.0
    %867 = vmatpush1.msra.mxu0 0.0
    %868 = vmatprep.subr.mxu0 0.0
    %869 = vmatpush1.msra.mxu0 0.0
    %870 = vmatprep.subr.mxu0 0.0
    %871 = vmatpush1.msra.mxu0 0.0
    %872 = vmatprep.subr.mxu0 0.0
    %873 = vmatpush1.msra.mxu0 0.0
    %874 = vmatprep.subr.mxu0 0.0
    %875 = vmatpush1.msra.mxu0 0.0
    %876 = vmatprep.subr.mxu0 0.0
    %877 = vmatpush1.msra.mxu0 0.0
    %878 = vmatprep.subr.mxu0 0.0
    %879 = vmatpush1.msra.mxu0 0.0
    %880 = vmatprep.subr.mxu0 0.0
    %881 = vmatpush1.msra.mxu0 0.0
    %882 = vmatprep.subr.mxu0 0.0
    %883 = vmatpush1.msra.mxu0 0.0
    %884 = vmatprep.subr.mxu0 0.0
    %885 = vmatpush1.msra.mxu0 0.0
    %886 = vmatprep.subr.mxu0 0.0
    %887 = vmatpush1.msra.mxu0 0.0
    %888 = vmatprep.subr.mxu0 0.0
    %889 = vmatpush1.msra.mxu0 0.0
    %890 = vmatprep.subr.mxu0 0.0
    %891 = vmatpush1.msra.mxu0 0.0
    %892 = vmatprep.subr.mxu0 0.0
    %893 = vmatpush1.msra.mxu0 0.0
    %894 = vmatprep.subr.mxu0 0.0
    %895 = vmatpush1.msra.mxu0 0.0
    %896 = vmatprep.subr.mxu0 0.0
    %897 = vmatpush1.msra.mxu0 0.0
    %898 = vmatprep.subr.mxu0 0.0
    %899 = vmatpush1.msra.mxu0 0.0
    %900 = vmatprep.subr.mxu0 0.0
    %901 = vmatpush1.msra.mxu0 0.0
    %902 = vmatprep.subr.mxu0 0.0
    %903 = vmatpush1.msra.mxu0 0.0
    %904 = vmatprep.subr.mxu0 0.0
    %905 = vmatpush1.msra.mxu0 0.0
    %906 = vmatprep.subr.mxu0 0.0
    %907 = vmatpush1.msra.mxu0 0.0
    %908 = vmatprep.subr.mxu0 0.0
    %909 = vmatpush1.msra.mxu0 0.0
    %910 = vmatprep.subr.mxu0 0.0
    %911 = vmatpush1.msra.mxu0 0.0
    %912 = vmatprep.subr.mxu0 0.0
    %913 = vmatpush1.msra.mxu0 0.0
    %914 = vmatprep.subr.mxu0 0.0
    %915 = vmatpush1.msra.mxu0 0.0
    %916 = vmatprep.mubr.f32.mxu0 0.0
    %917 = vmatmul.mubr.f32.gmra.mrb[0].mxu0 %v850
    %v918 = vpop.f32.mrb[0].mxu0
    %v919 = vadd.f32 0.0, %v918
    %v920 = vpop.f32.mrb[0].mxu0
    %921 = vdwg.mxu0
    %v922 = vadd.f32 %v817, %v919
    %924 = vrot.lane.b32.xlu0 %v615, 32
    %v925 = vpop.permute.xlu0 %924
    %v926 = vsel %vm335, %v925, 0
    %928 = vmatprep.subr.mxu0 0.0
    %929 = vmatpush1.msra.mxu0 %v190
    %930 = vmatprep.subr.mxu0 0.0
    %931 = vmatpush1.msra.mxu0 %v191
    %932 = vmatprep.subr.mxu0 0.0
    %933 = vmatpush1.msra.mxu0 %v192
    %934 = vmatprep.subr.mxu0 0.0
    %935 = vmatpush1.msra.mxu0 %v193
    %936 = vmatprep.subr.mxu0 0.0
    %937 = vmatpush1.msra.mxu0 0.0
    %938 = vmatprep.subr.mxu0 0.0
    %939 = vmatpush1.msra.mxu0 0.0
    %940 = vmatprep.subr.mxu0 0.0
    %941 = vmatpush1.msra.mxu0 0.0
    %942 = vmatprep.subr.mxu0 0.0
    %943 = vmatpush1.msra.mxu0 0.0
    %944 = vmatprep.subr.mxu0 0.0
    %945 = vmatpush1.msra.mxu0 0.0
    %946 = vmatprep.subr.mxu0 0.0
    %947 = vmatpush1.msra.mxu0 0.0
    %948 = vmatprep.subr.mxu0 0.0
    %949 = vmatpush1.msra.mxu0 0.0
    %950 = vmatprep.subr.mxu0 0.0
    %951 = vmatpush1.msra.mxu0 0.0
    %952 = vmatprep.subr.mxu0 0.0
    %953 = vmatpush1.msra.mxu0 0.0
    %954 = vmatprep.subr.mxu0 0.0
    %955 = vmatpush1.msra.mxu0 0.0
    %956 = vmatprep.subr.mxu0 0.0
    %957 = vmatpush1.msra.mxu0 0.0
    %958 = vmatprep.subr.mxu0 0.0
    %959 = vmatpush1.msra.mxu0 0.0
    %960 = vmatprep.subr.mxu0 0.0
    %961 = vmatpush1.msra.mxu0 0.0
    %962 = vmatprep.subr.mxu0 0.0
    %963 = vmatpush1.msra.mxu0 0.0
    %964 = vmatprep.subr.mxu0 0.0
    %965 = vmatpush1.msra.mxu0 0.0
    %966 = vmatprep.subr.mxu0 0.0
    %967 = vmatpush1.msra.mxu0 0.0
    %968 = vmatprep.subr.mxu0 0.0
    %969 = vmatpush1.msra.mxu0 0.0
    %970 = vmatprep.subr.mxu0 0.0
    %971 = vmatpush1.msra.mxu0 0.0
    %972 = vmatprep.subr.mxu0 0.0
    %973 = vmatpush1.msra.mxu0 0.0
    %974 = vmatprep.subr.mxu0 0.0
    %975 = vmatpush1.msra.mxu0 0.0
    %976 = vmatprep.subr.mxu0 0.0
    %977 = vmatpush1.msra.mxu0 0.0
    %978 = vmatprep.subr.mxu0 0.0
    %979 = vmatpush1.msra.mxu0 0.0
    %980 = vmatprep.subr.mxu0 0.0
    %981 = vmatpush1.msra.mxu0 0.0
    %982 = vmatprep.subr.mxu0 0.0
    %983 = vmatpush1.msra.mxu0 0.0
    %984 = vmatprep.subr.mxu0 0.0
    %985 = vmatpush1.msra.mxu0 0.0
    %986 = vmatprep.subr.mxu0 0.0
    %987 = vmatpush1.msra.mxu0 0.0
    %988 = vmatprep.subr.mxu0 0.0
    %989 = vmatpush1.msra.mxu0 0.0
    %990 = vmatprep.subr.mxu0 0.0
    %991 = vmatpush1.msra.mxu0 0.0
    %992 = vmatprep.mubr.f32.mxu0 0.0
    %993 = vmatmul.mubr.f32.gmra.mrb[0].mxu0 %v926
    %v994 = vpop.f32.mrb[0].mxu0
    %v995 = vadd.f32 0.0, %v994
    %v996 = vpop.f32.mrb[0].mxu0
    %997 = vdwg.mxu0
    %v998 = vadd.f32 %v922, %v995
    %v999 = vadd.f32 %v998, %v589
    %v1000 = vsub.f32 0.0, %v999
    %v1001 = vmul.f32 %v1000, 1.442695
    %v1002 = vpow.pop %v1001
    %v1003 = vadd.f32 %v1002, 1.0
    %v1004 = vrcp.pop %v1003
    %v1005 = vmul.f32 1.0, %v1004
    %v1006 = vtanh.pop %v999
    %v1007 = vmul.f32 %v1005, %v609
    %1009 = vrot.lane.b32.xlu0 %v1006, 64
    %v1010 = vpop.permute.xlu0 %1009
    %v1012 = vmul.f32 %v1005, %v1010
    %1014 = vrot.lane.b32.xlu0 %v1012, 32
    %v1015 = vpop.permute.xlu0 %1014
    %v1017 = vadd.f32 %v1007, %v1015
    %v1018 = vtanh.pop %v1017
    %1020 = vrot.lane.b32.xlu0 %v1018, 64
    %v1021 = vpop.permute.xlu0 %1020
    %v1023 = vmul.f32 %v1005, %v1021
    %v1024 = vld [vmem:[#allocation2 + $0x2] sm:$0x1]
    %v1025 = vld [vmem:[#allocation2 + $0xa] sm:$0x1]
    %v1026 = vld [vmem:[#allocation2 + $0x12] sm:$0x1]
    %v1027 = vld [vmem:[#allocation2 + $0x1a] sm:$0x1]
    %v1028 = vld [vmem:[#allocation2 + $0x22] sm:$0x1]
    %v1029 = vld [vmem:[#allocation2 + $0x2a] sm:$0x1]
    %v1030 = vld [vmem:[#allocation2 + $0x32] sm:$0x1]
    %v1031 = vld [vmem:[#allocation2 + $0x3a] sm:$0x1]
    %v1032 = vld [vmem:[#allocation5 + $0x2] sm:$0x1]
    %v1033 = vld [vmem:[#allocation5 + $0xa] sm:$0x1]
    %v1034 = vld [vmem:[#allocation5 + $0x12] sm:$0x1]
    %v1035 = vld [vmem:[#allocation5 + $0x1a] sm:$0x1]
    %v1036 = vld [vmem:[#allocation5 + $0x22] sm:$0x1]
    %v1037 = vld [vmem:[#allocation5 + $0x2a] sm:$0x1]
    %v1038 = vld [vmem:[#allocation5 + $0x32] sm:$0x1]
    %v1039 = vld [vmem:[#allocation5 + $0x3a] sm:$0x1]
    %v1048 = vrot.slane %v1033, 7
    %v1049 = vsel %vm220, %v1048, %v1032
    %v1050 = vrot.slane %v1034, 6
    %v1051 = vsel %vm223, %v1050, %v1049
    %v1052 = vrot.slane %v1035, 5
    %v1053 = vsel %vm226, %v1052, %v1051
    %v1054 = vrot.slane %v1036, 4
    %v1055 = vsel %vm229, %v1054, %v1053
    %v1056 = vrot.slane %v1037, 3
    %v1057 = vsel %vm232, %v1056, %v1055
    %v1058 = vrot.slane %v1038, 2
    %v1059 = vsel %vm235, %v1058, %v1057
    %v1060 = vrot.slane %v1039, 1
    %v1061 = vsel %vm238, %v1060, %v1059
    %v1062 = vsel %vm240, %v1061, 0
    %1064 = vmatprep.subr.mxu0 0.0
    %1065 = vmatpush1.msra.mxu0 %v186
    %1066 = vmatprep.subr.mxu0 0.0
    %1067 = vmatpush1.msra.mxu0 %v187
    %1068 = vmatprep.subr.mxu0 0.0
    %1069 = vmatpush1.msra.mxu0 0.0
    %1070 = vmatprep.subr.mxu0 0.0
    %1071 = vmatpush1.msra.mxu0 0.0
    %1072 = vmatprep.subr.mxu0 0.0
    %1073 = vmatpush1.msra.mxu0 0.0
    %1074 = vmatprep.subr.mxu0 0.0
    %1075 = vmatpush1.msra.mxu0 0.0
    %1076 = vmatprep.subr.mxu0 0.0
    %1077 = vmatpush1.msra.mxu0 0.0
    %1078 = vmatprep.subr.mxu0 0.0
    %1079 = vmatpush1.msra.mxu0 0.0
    %1080 = vmatprep.subr.mxu0 0.0
    %1081 = vmatpush1.msra.mxu0 0.0
    %1082 = vmatprep.subr.mxu0 0.0
    %1083 = vmatpush1.msra.mxu0 0.0
    %1084 = vmatprep.subr.mxu0 0.0
    %1085 = vmatpush1.msra.mxu0 0.0
    %1086 = vmatprep.subr.mxu0 0.0
    %1087 = vmatpush1.msra.mxu0 0.0
    %1088 = vmatprep.subr.mxu0 0.0
    %1089 = vmatpush1.msra.mxu0 0.0
    %1090 = vmatprep.subr.mxu0 0.0
    %1091 = vmatpush1.msra.mxu0 0.0
    %1092 = vmatprep.subr.mxu0 0.0
    %1093 = vmatpush1.msra.mxu0 0.0
    %1094 = vmatprep.subr.mxu0 0.0
    %1095 = vmatpush1.msra.mxu0 0.0
    %1096 = vmatprep.subr.mxu0 0.0
    %1097 = vmatpush1.msra.mxu0 0.0
    %1098 = vmatprep.subr.mxu0 0.0
    %1099 = vmatpush1.msra.mxu0 0.0
    %1100 = vmatprep.subr.mxu0 0.0
    %1101 = vmatpush1.msra.mxu0 0.0
    %1102 = vmatprep.subr.mxu0 0.0
    %1103 = vmatpush1.msra.mxu0 0.0
    %1104 = vmatprep.subr.mxu0 0.0
    %1105 = vmatpush1.msra.mxu0 0.0
    %1106 = vmatprep.subr.mxu0 0.0
    %1107 = vmatpush1.msra.mxu0 0.0
    %1108 = vmatprep.subr.mxu0 0.0
    %1109 = vmatpush1.msra.mxu0 0.0
    %1110 = vmatprep.subr.mxu0 0.0
    %1111 = vmatpush1.msra.mxu0 0.0
    %1112 = vmatprep.subr.mxu0 0.0
    %1113 = vmatpush1.msra.mxu0 0.0
    %1114 = vmatprep.subr.mxu0 0.0
    %1115 = vmatpush1.msra.mxu0 0.0
    %1116 = vmatprep.subr.mxu0 0.0
    %1117 = vmatpush1.msra.mxu0 0.0
    %1118 = vmatprep.subr.mxu0 0.0
    %1119 = vmatpush1.msra.mxu0 0.0
    %1120 = vmatprep.subr.mxu0 0.0
    %1121 = vmatpush1.msra.mxu0 0.0
    %1122 = vmatprep.subr.mxu0 0.0
    %1123 = vmatpush1.msra.mxu0 0.0
    %1124 = vmatprep.subr.mxu0 0.0
    %1125 = vmatpush1.msra.mxu0 0.0
    %1126 = vmatprep.subr.mxu0 0.0
    %1127 = vmatpush1.msra.mxu0 0.0
    %1128 = vmatprep.mubr.f32.mxu0 0.0
    %1129 = vmatmul.mubr.f32.gmra.mrb[0].mxu0 %v1062
    %v1130 = vpop.f32.mrb[0].mxu0
    %v1131 = vadd.f32 0.0, %v1130
    %v1132 = vpop.f32.mrb[0].mxu0
    %1133 = vdwg.mxu0
    %v1142 = vrot.slane %v1025, 7
    %v1143 = vsel %vm220, %v1142, %v1024
    %v1144 = vrot.slane %v1026, 6
    %v1145 = vsel %vm223, %v1144, %v1143
    %v1146 = vrot.slane %v1027, 5
    %v1147 = vsel %vm226, %v1146, %v1145
    %v1148 = vrot.slane %v1028, 4
    %v1149 = vsel %vm229, %v1148, %v1147
    %v1150 = vrot.slane %v1029, 3
    %v1151 = vsel %vm232, %v1150, %v1149
    %v1152 = vrot.slane %v1030, 2
    %v1153 = vsel %vm235, %v1152, %v1151
    %v1154 = vrot.slane %v1031, 1
    %v1155 = vsel %vm238, %v1154, %v1153
    %v1156 = vsel %vm335, %v1155, 0
    %1158 = vmatprep.subr.mxu0 0.0
    %1159 = vmatpush1.msra.mxu0 %v182
    %1160 = vmatprep.subr.mxu0 0.0
    %1161 = vmatpush1.msra.mxu0 %v183
    %1162 = vmatprep.subr.mxu0 0.0
    %1163 = vmatpush1.msra.mxu0 %v184
    %1164 = vmatprep.subr.mxu0 0.0
    %1165 = vmatpush1.msra.mxu0 %v185
    %1166 = vmatprep.subr.mxu0 0.0
    %1167 = vmatpush1.msra.mxu0 0.0
    %1168 = vmatprep.subr.mxu0 0.0
    %1169 = vmatpush1.msra.mxu0 0.0
    %1170 = vmatprep.subr.mxu0 0.0
    %1171 = vmatpush1.msra.mxu0 0.0
    %1172 = vmatprep.subr.mxu0 0.0
    %1173 = vmatpush1.msra.mxu0 0.0
    %1174 = vmatprep.subr.mxu0 0.0
    %1175 = vmatpush1.msra.mxu0 0.0
    %1176 = vmatprep.subr.mxu0 0.0
    %1177 = vmatpush1.msra.mxu0 0.0
    %1178 = vmatprep.subr.mxu0 0.0
    %1179 = vmatpush1.msra.mxu0 0.0
    %1180 = vmatprep.subr.mxu0 0.0
    %1181 = vmatpush1.msra.mxu0 0.0
    %1182 = vmatprep.subr.mxu0 0.0
    %1183 = vmatpush1.msra.mxu0 0.0
    %1184 = vmatprep.subr.mxu0 0.0
    %1185 = vmatpush1.msra.mxu0 0.0
    %1186 = vmatprep.subr.mxu0 0.0
    %1187 = vmatpush1.msra.mxu0 0.0
    %1188 = vmatprep.subr.mxu0 0.0
    %1189 = vmatpush1.msra.mxu0 0.0
    %1190 = vmatprep.subr.mxu0 0.0
    %1191 = vmatpush1.msra.mxu0 0.0
    %1192 = vmatprep.subr.mxu0 0.0
    %1193 = vmatpush1.msra.mxu0 0.0
    %1194 = vmatprep.subr.mxu0 0.0
    %1195 = vmatpush1.msra.mxu0 0.0
    %1196 = vmatprep.subr.mxu0 0.0
    %1197 = vmatpush1.msra.mxu0 0.0
    %1198 = vmatprep.subr.mxu0 0.0
    %1199 = vmatpush1.msra.mxu0 0.0
    %1200 = vmatprep.subr.mxu0 0.0
    %1201 = vmatpush1.msra.mxu0 0.0
    %1202 = vmatprep.subr.mxu0 0.0
    %1203 = vmatpush1.msra.mxu0 0.0
    %1204 = vmatprep.subr.mxu0 0.0
    %1205 = vmatpush1.msra.mxu0 0.0
    %1206 = vmatprep.subr.mxu0 0.0
    %1207 = vmatpush1.msra.mxu0 0.0
    %1208 = vmatprep.subr.mxu0 0.0
    %1209 = vmatpush1.msra.mxu0 0.0
    %1210 = vmatprep.subr.mxu0 0.0
    %1211 = vmatpush1.msra.mxu0 0.0
    %1212 = vmatprep.subr.mxu0 0.0
    %1213 = vmatpush1.msra.mxu0 0.0
    %1214 = vmatprep.subr.mxu0 0.0
    %1215 = vmatpush1.msra.mxu0 0.0
    %1216 = vmatprep.subr.mxu0 0.0
    %1217 = vmatpush1.msra.mxu0 0.0
    %1218 = vmatprep.subr.mxu0 0.0
    %1219 = vmatpush1.msra.mxu0 0.0
    %1220 = vmatprep.subr.mxu0 0.0
    %1221 = vmatpush1.msra.mxu0 0.0
    %1222 = vmatprep.mubr.f32.mxu0 0.0
    %1223 = vmatmul.mubr.f32.gmra.mrb[0].mxu0 %v1156
    %v1224 = vpop.f32.mrb[0].mxu0
    %v1225 = vadd.f32 %v1131, %v1224
    %v1226 = vpop.f32.mrb[0].mxu0
    %1227 = vdwg.mxu0
    %v1228 = vld [vmem:[#allocation7 + $0x2] sm:$0x1]
    %v1229 = vld [vmem:[#allocation7 + $0xa] sm:$0x1]
    %v1230 = vld [vmem:[#allocation7 + $0x12] sm:$0x1]
    %v1231 = vld [vmem:[#allocation7 + $0x1a] sm:$0x1]
    %v1232 = vld [vmem:[#allocation7 + $0x22] sm:$0x1]
    %v1233 = vld [vmem:[#allocation7 + $0x2a] sm:$0x1]
    %v1234 = vld [vmem:[#allocation7 + $0x32] sm:$0x1]
    %v1235 = vld [vmem:[#allocation7 + $0x3a] sm:$0x1]
    %v1244 = vrot.slane %v1229, 7
    %v1245 = vsel %vm220, %v1244, %v1228
    %v1246 = vrot.slane %v1230, 6
    %v1247 = vsel %vm223, %v1246, %v1245
    %v1248 = vrot.slane %v1231, 5
    %v1249 = vsel %vm226, %v1248, %v1247
    %v1250 = vrot.slane %v1232, 4
    %v1251 = vsel %vm229, %v1250, %v1249
    %v1252 = vrot.slane %v1233, 3
    %v1253 = vsel %vm232, %v1252, %v1251
    %v1254 = vrot.slane %v1234, 2
    %v1255 = vsel %vm235, %v1254, %v1253
    %v1256 = vrot.slane %v1235, 1
    %v1257 = vsel %vm238, %v1256, %v1255
    %v1258 = vsel %vm240, %v1257, 0
    %1260 = vmatprep.subr.mxu0 0.0
    %1261 = vmatpush1.msra.mxu0 %v188
    %1262 = vmatprep.subr.mxu0 0.0
    %1263 = vmatpush1.msra.mxu0 %v189
    %1264 = vmatprep.subr.mxu0 0.0
    %1265 = vmatpush1.msra.mxu0 0.0
    %1266 = vmatprep.subr.mxu0 0.0
    %1267 = vmatpush1.msra.mxu0 0.0
    %1268 = vmatprep.subr.mxu0 0.0
    %1269 = vmatpush1.msra.mxu0 0.0
    %1270 = vmatprep.subr.mxu0 0.0
    %1271 = vmatpush1.msra.mxu0 0.0
    %1272 = vmatprep.subr.mxu0 0.0
    %1273 = vmatpush1.msra.mxu0 0.0
    %1274 = vmatprep.subr.mxu0 0.0
    %1275 = vmatpush1.msra.mxu0 0.0
    %1276 = vmatprep.subr.mxu0 0.0
    %1277 = vmatpush1.msra.mxu0 0.0
    %1278 = vmatprep.subr.mxu0 0.0
    %1279 = vmatpush1.msra.mxu0 0.0
    %1280 = vmatprep.subr.mxu0 0.0
    %1281 = vmatpush1.msra.mxu0 0.0
    %1282 = vmatprep.subr.mxu0 0.0
    %1283 = vmatpush1.msra.mxu0 0.0
    %1284 = vmatprep.subr.mxu0 0.0
    %1285 = vmatpush1.msra.mxu0 0.0
    %1286 = vmatprep.subr.mxu0 0.0
    %1287 = vmatpush1.msra.mxu0 0.0
    %1288 = vmatprep.subr.mxu0 0.0
    %1289 = vmatpush1.msra.mxu0 0.0
    %1290 = vmatprep.subr.mxu0 0.0
    %1291 = vmatpush1.msra.mxu0 0.0
    %1292 = vmatprep.subr.mxu0 0.0
    %1293 = vmatpush1.msra.mxu0 0.0
    %1294 = vmatprep.subr.mxu0 0.0
    %1295 = vmatpush1.msra.mxu0 0.0
    %1296 = vmatprep.subr.mxu0 0.0
    %1297 = vmatpush1.msra.mxu0 0.0
    %1298 = vmatprep.subr.mxu0 0.0
    %1299 = vmatpush1.msra.mxu0 0.0
    %1300 = vmatprep.subr.mxu0 0.0
    %1301 = vmatpush1.msra.mxu0 0.0
    %1302 = vmatprep.subr.mxu0 0.0
    %1303 = vmatpush1.msra.mxu0 0.0
    %1304 = vmatprep.subr.mxu0 0.0
    %1305 = vmatpush1.msra.mxu0 0.0
    %1306 = vmatprep.subr.mxu0 0.0
    %1307 = vmatpush1.msra.mxu0 0.0
    %1308 = vmatprep.subr.mxu0 0.0
    %1309 = vmatpush1.msra.mxu0 0.0
    %1310 = vmatprep.subr.mxu0 0.0
    %1311 = vmatpush1.msra.mxu0 0.0
    %1312 = vmatprep.subr.mxu0 0.0
    %1313 = vmatpush1.msra.mxu0 0.0
    %1314 = vmatprep.subr.mxu0 0.0
    %1315 = vmatpush1.msra.mxu0 0.0
    %1316 = vmatprep.subr.mxu0 0.0
    %1317 = vmatpush1.msra.mxu0 0.0
    %1318 = vmatprep.subr.mxu0 0.0
    %1319 = vmatpush1.msra.mxu0 0.0
    %1320 = vmatprep.subr.mxu0 0.0
    %1321 = vmatpush1.msra.mxu0 0.0
    %1322 = vmatprep.subr.mxu0 0.0
    %1323 = vmatpush1.msra.mxu0 0.0
    %1324 = vmatprep.mubr.f32.mxu0 0.0
    %1325 = vmatmul.mubr.f32.gmra.mrb[0].mxu0 %v1258
    %v1326 = vpop.f32.mrb[0].mxu0
    %v1327 = vadd.f32 0.0, %v1326
    %v1328 = vpop.f32.mrb[0].mxu0
    %1329 = vdwg.mxu0
    %v1330 = vadd.f32 %v1225, %v1327
    %1332 = vrot.lane.b32.xlu0 %v1023, 32
    %v1333 = vpop.permute.xlu0 %1332
    %v1334 = vsel %vm335, %v1333, 0
    %1336 = vmatprep.subr.mxu0 0.0
    %1337 = vmatpush1.msra.mxu0 %v190
    %1338 = vmatprep.subr.mxu0 0.0
    %1339 = vmatpush1.msra.mxu0 %v191
    %1340 = vmatprep.subr.mxu0 0.0
    %1341 = vmatpush1.msra.mxu0 %v192
    %1342 = vmatprep.subr.mxu0 0.0
    %1343 = vmatpush1.msra.mxu0 %v193
    %1344 = vmatprep.subr.mxu0 0.0
    %1345 = vmatpush1.msra.mxu0 0.0
    %1346 = vmatprep.subr.mxu0 0.0
    %1347 = vmatpush1.msra.mxu0 0.0
    %1348 = vmatprep.subr.mxu0 0.0
    %1349 = vmatpush1.msra.mxu0 0.0
    %1350 = vmatprep.subr.mxu0 0.0
    %1351 = vmatpush1.msra.mxu0 0.0
    %1352 = vmatprep.subr.mxu0 0.0
    %1353 = vmatpush1.msra.mxu0 0.0
    %1354 = vmatprep.subr.mxu0 0.0
    %1355 = vmatpush1.msra.mxu0 0.0
    %1356 = vmatprep.subr.mxu0 0.0
    %1357 = vmatpush1.msra.mxu0 0.0
    %1358 = vmatprep.subr.mxu0 0.0
    %1359 = vmatpush1.msra.mxu0 0.0
    %1360 = vmatprep.subr.mxu0 0.0
    %1361 = vmatpush1.msra.mxu0 0.0
    %1362 = vmatprep.subr.mxu0 0.0
    %1363 = vmatpush1.msra.mxu0 0.0
    %1364 = vmatprep.subr.mxu0 0.0
    %1365 = vmatpush1.msra.mxu0 0.0
    %1366 = vmatprep.subr.mxu0 0.0
    %1367 = vmatpush1.msra.mxu0 0.0
    %1368 = vmatprep.subr.mxu0 0.0
    %1369 = vmatpush1.msra.mxu0 0.0
    %1370 = vmatprep.subr.mxu0 0.0
    %1371 = vmatpush1.msra.mxu0 0.0
    %1372 = vmatprep.subr.mxu0 0.0
    %1373 = vmatpush1.msra.mxu0 0.0
    %1374 = vmatprep.subr.mxu0 0.0
    %1375 = vmatpush1.msra.mxu0 0.0
    %1376 = vmatprep.subr.mxu0 0.0
    %1377 = vmatpush1.msra.mxu0 0.0
    %1378 = vmatprep.subr.mxu0 0.0
    %1379 = vmatpush1.msra.mxu0 0.0
    %1380 = vmatprep.subr.mxu0 0.0
    %1381 = vmatpush1.msra.mxu0 0.0
    %1382 = vmatprep.subr.mxu0 0.0
    %1383 = vmatpush1.msra.mxu0 0.0
    %1384 = vmatprep.subr.mxu0 0.0
    %1385 = vmatpush1.msra.mxu0 0.0
    %1386 = vmatprep.subr.mxu0 0.0
    %1387 = vmatpush1.msra.mxu0 0.0
    %1388 = vmatprep.subr.mxu0 0.0
    %1389 = vmatpush1.msra.mxu0 0.0
    %1390 = vmatprep.subr.mxu0 0.0
    %1391 = vmatpush1.msra.mxu0 0.0
    %1392 = vmatprep.subr.mxu0 0.0
    %1393 = vmatpush1.msra.mxu0 0.0
    %1394 = vmatprep.subr.mxu0 0.0
    %1395 = vmatpush1.msra.mxu0 0.0
    %1396 = vmatprep.subr.mxu0 0.0
    %1397 = vmatpush1.msra.mxu0 0.0
    %1398 = vmatprep.subr.mxu0 0.0
    %1399 = vmatpush1.msra.mxu0 0.0
    %1400 = vmatprep.mubr.f32.mxu0 0.0
    %1401 = vmatmul.mubr.f32.gmra.mrb[0].mxu0 %v1334
    %v1402 = vpop.f32.mrb[0].mxu0
    %v1403 = vadd.f32 0.0, %v1402
    %v1404 = vpop.f32.mrb[0].mxu0
    %1405 = vdwg.mxu0
    %v1406 = vadd.f32 %v1330, %v1403
    %v1407 = vadd.f32 %v1406, %v589
    %v1408 = vsub.f32 0.0, %v1407
    %v1409 = vmul.f32 %v1408, 1.442695
    %v1410 = vpow.pop %v1409
    %v1411 = vadd.f32 %v1410, 1.0
    %v1412 = vrcp.pop %v1411
    %v1413 = vmul.f32 1.0, %v1412
    %v1414 = vtanh.pop %v1407
    %v1415 = vmul.f32 %v1413, %v1017
    %1417 = vrot.lane.b32.xlu0 %v1414, 64
    %v1418 = vpop.permute.xlu0 %1417
    %v1420 = vmul.f32 %v1413, %v1418
    %1422 = vrot.lane.b32.xlu0 %v1420, 32
    %v1423 = vpop.permute.xlu0 %1422
    %v1425 = vadd.f32 %v1415, %v1423
    %v1426 = vtanh.pop %v1425
    %1428 = vrot.lane.b32.xlu0 %v1426, 64
    %v1429 = vpop.permute.xlu0 %1428
    %v1431 = vmul.f32 %v1413, %v1429
    %v1432 = vld [vmem:[#allocation2 + $0x3] sm:$0x1]
    %v1433 = vld [vmem:[#allocation2 + $0xb] sm:$0x1]
    %v1434 = vld [vmem:[#allocation2 + $0x13] sm:$0x1]
    %v1435 = vld [vmem:[#allocation2 + $0x1b] sm:$0x1]
    %v1436 = vld [vmem:[#allocation2 + $0x23] sm:$0x1]
    %v1437 = vld [vmem:[#allocation2 + $0x2b] sm:$0x1]
    %v1438 = vld [vmem:[#allocation2 + $0x33] sm:$0x1]
    %v1439 = vld [vmem:[#allocation2 + $0x3b] sm:$0x1]
    %v1440 = vld [vmem:[#allocation5 + $0x3] sm:$0x1]
    %v1441 = vld [vmem:[#allocation5 + $0xb] sm:$0x1]
    %v1442 = vld [vmem:[#allocation5 + $0x13] sm:$0x1]
    %v1443 = vld [vmem:[#allocation5 + $0x1b] sm:$0x1]
    %v1444 = vld [vmem:[#allocation5 + $0x23] sm:$0x1]
    %v1445 = vld [vmem:[#allocation5 + $0x2b] sm:$0x1]
    %v1446 = vld [vmem:[#allocation5 + $0x33] sm:$0x1]
    %v1447 = vld [vmem:[#allocation5 + $0x3b] sm:$0x1]
    %v1456 = vrot.slane %v1441, 7
    %v1457 = vsel %vm220, %v1456, %v1440
    %v1458 = vrot.slane %v1442, 6
    %v1459 = vsel %vm223, %v1458, %v1457
    %v1460 = vrot.slane %v1443, 5
    %v1461 = vsel %vm226, %v1460, %v1459
    %v1462 = vrot.slane %v1444, 4
    %v1463 = vsel %vm229, %v1462, %v1461
    %v1464 = vrot.slane %v1445, 3
    %v1465 = vsel %vm232, %v1464, %v1463
    %v1466 = vrot.slane %v1446, 2
    %v1467 = vsel %vm235, %v1466, %v1465
    %v1468 = vrot.slane %v1447, 1
    %v1469 = vsel %vm238, %v1468, %v1467
    %v1470 = vsel %vm240, %v1469, 0
    %1472 = vmatprep.subr.mxu0 0.0
    %1473 = vmatpush1.msra.mxu0 %v186
    %1474 = vmatprep.subr.mxu0 0.0
    %1475 = vmatpush1.msra.mxu0 %v187
    %1476 = vmatprep.subr.mxu0 0.0
    %1477 = vmatpush1.msra.mxu0 0.0
    %1478 = vmatprep.subr.mxu0 0.0
    %1479 = vmatpush1.msra.mxu0 0.0
    %1480 = vmatprep.subr.mxu0 0.0
    %1481 = vmatpush1.msra.mxu0 0.0
    %1482 = vmatprep.subr.mxu0 0.0
    %1483 = vmatpush1.msra.mxu0 0.0
    %1484 = vmatprep.subr.mxu0 0.0
    %1485 = vmatpush1.msra.mxu0 0.0
    %1486 = vmatprep.subr.mxu0 0.0
    %1487 = vmatpush1.msra.mxu0 0.0
    %1488 = vmatprep.subr.mxu0 0.0
    %1489 = vmatpush1.msra.mxu0 0.0
    %1490 = vmatprep.subr.mxu0 0.0
    %1491 = vmatpush1.msra.mxu0 0.0
    %1492 = vmatprep.subr.mxu0 0.0
    %1493 = vmatpush1.msra.mxu0 0.0
    %1494 = vmatprep.subr.mxu0 0.0
    %1495 = vmatpush1.msra.mxu0 0.0
    %1496 = vmatprep.subr.mxu0 0.0
    %1497 = vmatpush1.msra.mxu0 0.0
    %1498 = vmatprep.subr.mxu0 0.0
    %1499 = vmatpush1.msra.mxu0 0.0
    %1500 = vmatprep.subr.mxu0 0.0
    %1501 = vmatpush1.msra.mxu0 0.0
    %1502 = vmatprep.subr.mxu0 0.0
    %1503 = vmatpush1.msra.mxu0 0.0
    %1504 = vmatprep.subr.mxu0 0.0
    %1505 = vmatpush1.msra.mxu0 0.0
    %1506 = vmatprep.subr.mxu0 0.0
    %1507 = vmatpush1.msra.mxu0 0.0
    %1508 = vmatprep.subr.mxu0 0.0
    %1509 = vmatpush1.msra.mxu0 0.0
    %1510 = vmatprep.subr.mxu0 0.0
    %1511 = vmatpush1.msra.mxu0 0.0
    %1512 = vmatprep.subr.mxu0 0.0
    %1513 = vmatpush1.msra.mxu0 0.0
    %1514 = vmatprep.subr.mxu0 0.0
    %1515 = vmatpush1.msra.mxu0 0.0
    %1516 = vmatprep.subr.mxu0 0.0
    %1517 = vmatpush1.msra.mxu0 0.0
    %1518 = vmatprep.subr.mxu0 0.0
    %1519 = vmatpush1.msra.mxu0 0.0
    %1520 = vmatprep.subr.mxu0 0.0
    %1521 = vmatpush1.msra.mxu0 0.0
    %1522 = vmatprep.subr.mxu0 0.0
    %1523 = vmatpush1.msra.mxu0 0.0
    %1524 = vmatprep.subr.mxu0 0.0
    %1525 = vmatpush1.msra.mxu0 0.0
    %1526 = vmatprep.subr.mxu0 0.0
    %1527 = vmatpush1.msra.mxu0 0.0
    %1528 = vmatprep.subr.mxu0 0.0
    %1529 = vmatpush1.msra.mxu0 0.0
    %1530 = vmatprep.subr.mxu0 0.0
    %1531 = vmatpush1.msra.mxu0 0.0
    %1532 = vmatprep.subr.mxu0 0.0
    %1533 = vmatpush1.msra.mxu0 0.0
    %1534 = vmatprep.subr.mxu0 0.0
    %1535 = vmatpush1.msra.mxu0 0.0
    %1536 = vmatprep.mubr.f32.mxu0 0.0
    %1537 = vmatmul.mubr.f32.gmra.mrb[0].mxu0 %v1470
    %v1538 = vpop.f32.mrb[0].mxu0
    %v1539 = vadd.f32 0.0, %v1538
    %v1540 = vpop.f32.mrb[0].mxu0
    %1541 = vdwg.mxu0
    %v1550 = vrot.slane %v1433, 7
    %v1551 = vsel %vm220, %v1550, %v1432
    %v1552 = vrot.slane %v1434, 6
    %v1553 = vsel %vm223, %v1552, %v1551
    %v1554 = vrot.slane %v1435, 5
    %v1555 = vsel %vm226, %v1554, %v1553
    %v1556 = vrot.slane %v1436, 4
    %v1557 = vsel %vm229, %v1556, %v1555
    %v1558 = vrot.slane %v1437, 3
    %v1559 = vsel %vm232, %v1558, %v1557
    %v1560 = vrot.slane %v1438, 2
    %v1561 = vsel %vm235, %v1560, %v1559
    %v1562 = vrot.slane %v1439, 1
    %v1563 = vsel %vm238, %v1562, %v1561
    %v1564 = vsel %vm335, %v1563, 0
    %1566 = vmatprep.subr.mxu0 0.0
    %1567 = vmatpush1.msra.mxu0 %v182
    %1568 = vmatprep.subr.mxu0 0.0
    %1569 = vmatpush1.msra.mxu0 %v183
    %1570 = vmatprep.subr.mxu0 0.0
    %1571 = vmatpush1.msra.mxu0 %v184
    %1572 = vmatprep.subr.mxu0 0.0
    %1573 = vmatpush1.msra.mxu0 %v185
    %1574 = vmatprep.subr.mxu0 0.0
    %1575 = vmatpush1.msra.mxu0 0.0
    %1576 = vmatprep.subr.mxu0 0.0
    %1577 = vmatpush1.msra.mxu0 0.0
    %1578 = vmatprep.subr.mxu0 0.0
    %1579 = vmatpush1.msra.mxu0 0.0
    %1580 = vmatprep.subr.mxu0 0.0
    %1581 = vmatpush1.msra.mxu0 0.0
    %1582 = vmatprep.subr.mxu0 0.0
    %1583 = vmatpush1.msra.mxu0 0.0
    %1584 = vmatprep.subr.mxu0 0.0
    %1585 = vmatpush1.msra.mxu0 0.0
    %1586 = vmatprep.subr.mxu0 0.0
    %1587 = vmatpush1.msra.mxu0 0.0
    %1588 = vmatprep.subr.mxu0 0.0
    %1589 = vmatpush1.msra.mxu0 0.0
    %1590 = vmatprep.subr.mxu0 0.0
    %1591 = vmatpush1.msra.mxu0 0.0
    %1592 = vmatprep.subr.mxu0 0.0
    %1593 = vmatpush1.msra.mxu0 0.0
    %1594 = vmatprep.subr.mxu0 0.0
    %1595 = vmatpush1.msra.mxu0 0.0
    %1596 = vmatprep.subr.mxu0 0.0
    %1597 = vmatpush1.msra.mxu0 0.0
    %1598 = vmatprep.subr.mxu0 0.0
    %1599 = vmatpush1.msra.mxu0 0.0
    %1600 = vmatprep.subr.mxu0 0.0
    %1601 = vmatpush1.msra.mxu0 0.0
    %1602 = vmatprep.subr.mxu0 0.0
    %1603 = vmatpush1.msra.mxu0 0.0
    %1604 = vmatprep.subr.mxu0 0.0
    %1605 = vmatpush1.msra.mxu0 0.0
    %1606 = vmatprep.subr.mxu0 0.0
    %1607 = vmatpush1.msra.mxu0 0.0
    %1608 = vmatprep.subr.mxu0 0.0
    %1609 = vmatpush1.msra.mxu0 0.0
    %1610 = vmatprep.subr.mxu0 0.0
    %1611 = vmatpush1.msra.mxu0 0.0
    %1612 = vmatprep.subr.mxu0 0.0
    %1613 = vmatpush1.msra.mxu0 0.0
    %1614 = vmatprep.subr.mxu0 0.0
    %1615 = vmatpush1.msra.mxu0 0.0
    %1616 = vmatprep.subr.mxu0 0.0
    %1617 = vmatpush1.msra.mxu0 0.0
    %1618 = vmatprep.subr.mxu0 0.0
    %1619 = vmatpush1.msra.mxu0 0.0
    %1620 = vmatprep.subr.mxu0 0.0
    %1621 = vmatpush1.msra.mxu0 0.0
    %1622 = vmatprep.subr.mxu0 0.0
    %1623 = vmatpush1.msra.mxu0 0.0
    %1624 = vmatprep.subr.mxu0 0.0
    %1625 = vmatpush1.msra.mxu0 0.0
    %1626 = vmatprep.subr.mxu0 0.0
    %1627 = vmatpush1.msra.mxu0 0.0
    %1628 = vmatprep.subr.mxu0 0.0
    %1629 = vmatpush1.msra.mxu0 0.0
    %1630 = vmatprep.mubr.f32.mxu0 0.0
    %1631 = vmatmul.mubr.f32.gmra.mrb[0].mxu0 %v1564
    %v1632 = vpop.f32.mrb[0].mxu0
    %v1633 = vadd.f32 %v1539, %v1632
    %v1634 = vpop.f32.mrb[0].mxu0
    %1635 = vdwg.mxu0
    %v1636 = vld [vmem:[#allocation7 + $0x3] sm:$0x1]
    %v1637 = vld [vmem:[#allocation7 + $0xb] sm:$0x1]
    %v1638 = vld [vmem:[#allocation7 + $0x13] sm:$0x1]
    %v1639 = vld [vmem:[#allocation7 + $0x1b] sm:$0x1]
    %v1640 = vld [vmem:[#allocation7 + $0x23] sm:$0x1]
    %v1641 = vld [vmem:[#allocation7 + $0x2b] sm:$0x1]
    %v1642 = vld [vmem:[#allocation7 + $0x33] sm:$0x1]
    %v1643 = vld [vmem:[#allocation7 + $0x3b] sm:$0x1]
    %v1652 = vrot.slane %v1637, 7
    %v1653 = vsel %vm220, %v1652, %v1636
    %v1654 = vrot.slane %v1638, 6
    %v1655 = vsel %vm223, %v1654, %v1653
    %v1656 = vrot.slane %v1639, 5
    %v1657 = vsel %vm226, %v1656, %v1655
    %v1658 = vrot.slane %v1640, 4
    %v1659 = vsel %vm229, %v1658, %v1657
    %v1660 = vrot.slane %v1641, 3
    %v1661 = vsel %vm232, %v1660, %v1659
    %v1662 = vrot.slane %v1642, 2
    %v1663 = vsel %vm235, %v1662, %v1661
    %v1664 = vrot.slane %v1643, 1
    %v1665 = vsel %vm238, %v1664, %v1663
    %v1666 = vsel %vm240, %v1665, 0
    %1668 = vmatprep.subr.mxu0 0.0
    %1669 = vmatpush1.msra.mxu0 %v188
    %1670 = vmatprep.subr.mxu0 0.0
    %1671 = vmatpush1.msra.mxu0 %v189
    %1672 = vmatprep.subr.mxu0 0.0
    %1673 = vmatpush1.msra.mxu0 0.0
    %1674 = vmatprep.subr.mxu0 0.0
    %1675 = vmatpush1.msra.mxu0 0.0
    %1676 = vmatprep.subr.mxu0 0.0
    %1677 = vmatpush1.msra.mxu0 0.0
    %1678 = vmatprep.subr.mxu0 0.0
    %1679 = vmatpush1.msra.mxu0 0.0
    %1680 = vmatprep.subr.mxu0 0.0
    %1681 = vmatpush1.msra.mxu0 0.0
    %1682 = vmatprep.subr.mxu0 0.0
    %1683 = vmatpush1.msra.mxu0 0.0
    %1684 = vmatprep.subr.mxu0 0.0
    %1685 = vmatpush1.msra.mxu0 0.0
    %1686 = vmatprep.subr.mxu0 0.0
    %1687 = vmatpush1.msra.mxu0 0.0
    %1688 = vmatprep.subr.mxu0 0.0
    %1689 = vmatpush1.msra.mxu0 0.0
    %1690 = vmatprep.subr.mxu0 0.0
    %1691 = vmatpush1.msra.mxu0 0.0
    %1692 = vmatprep.subr.mxu0 0.0
    %1693 = vmatpush1.msra.mxu0 0.0
    %1694 = vmatprep.subr.mxu0 0.0
    %1695 = vmatpush1.msra.mxu0 0.0
    %1696 = vmatprep.subr.mxu0 0.0
    %1697 = vmatpush1.msra.mxu0 0.0
    %1698 = vmatprep.subr.mxu0 0.0
    %1699 = vmatpush1.msra.mxu0 0.0
    %1700 = vmatprep.subr.mxu0 0.0
    %1701 = vmatpush1.msra.mxu0 0.0
    %1702 = vmatprep.subr.mxu0 0.0
    %1703 = vmatpush1.msra.mxu0 0.0
    %1704 = vmatprep.subr.mxu0 0.0
    %1705 = vmatpush1.msra.mxu0 0.0
    %1706 = vmatprep.subr.mxu0 0.0
    %1707 = vmatpush1.msra.mxu0 0.0
    %1708 = vmatprep.subr.mxu0 0.0
    %1709 = vmatpush1.msra.mxu0 0.0
    %1710 = vmatprep.subr.mxu0 0.0
    %1711 = vmatpush1.msra.mxu0 0.0
    %1712 = vmatprep.subr.mxu0 0.0
    %1713 = vmatpush1.msra.mxu0 0.0
    %1714 = vmatprep.subr.mxu0 0.0
    %1715 = vmatpush1.msra.mxu0 0.0
    %1716 = vmatprep.subr.mxu0 0.0
    %1717 = vmatpush1.msra.mxu0 0.0
    %1718 = vmatprep.subr.mxu0 0.0
    %1719 = vmatpush1.msra.mxu0 0.0
    %1720 = vmatprep.subr.mxu0 0.0
    %1721 = vmatpush1.msra.mxu0 0.0
    %1722 = vmatprep.subr.mxu0 0.0
    %1723 = vmatpush1.msra.mxu0 0.0
    %1724 = vmatprep.subr.mxu0 0.0
    %1725 = vmatpush1.msra.mxu0 0.0
    %1726 = vmatprep.subr.mxu0 0.0
    %1727 = vmatpush1.msra.mxu0 0.0
    %1728 = vmatprep.subr.mxu0 0.0
    %1729 = vmatpush1.msra.mxu0 0.0
    %1730 = vmatprep.subr.mxu0 0.0
    %1731 = vmatpush1.msra.mxu0 0.0
    %1732 = vmatprep.mubr.f32.mxu0 0.0
    %1733 = vmatmul.mubr.f32.gmra.mrb[0].mxu0 %v1666
    %v1734 = vpop.f32.mrb[0].mxu0
    %v1735 = vadd.f32 0.0, %v1734
    %v1736 = vpop.f32.mrb[0].mxu0
    %1737 = vdwg.mxu0
    %v1738 = vadd.f32 %v1633, %v1735
    %1740 = vrot.lane.b32.xlu0 %v1431, 32
    %v1741 = vpop.permute.xlu0 %1740
    %v1742 = vsel %vm335, %v1741, 0
    %1744 = vmatprep.subr.mxu0 0.0
    %1745 = vmatpush1.msra.mxu0 %v190
    %1746 = vmatprep.subr.mxu0 0.0
    %1747 = vmatpush1.msra.mxu0 %v191
    %1748 = vmatprep.subr.mxu0 0.0
    %1749 = vmatpush1.msra.mxu0 %v192
    %1750 = vmatprep.subr.mxu0 0.0
    %1751 = vmatpush1.msra.mxu0 %v193
    %1752 = vmatprep.subr.mxu0 0.0
    %1753 = vmatpush1.msra.mxu0 0.0
    %1754 = vmatprep.subr.mxu0 0.0
    %1755 = vmatpush1.msra.mxu0 0.0
    %1756 = vmatprep.subr.mxu0 0.0
    %1757 = vmatpush1.msra.mxu0 0.0
    %1758 = vmatprep.subr.mxu0 0.0
    %1759 = vmatpush1.msra.mxu0 0.0
    %1760 = vmatprep.subr.mxu0 0.0
    %1761 = vmatpush1.msra.mxu0 0.0
    %1762 = vmatprep.subr.mxu0 0.0
    %1763 = vmatpush1.msra.mxu0 0.0
    %1764 = vmatprep.subr.mxu0 0.0
    %1765 = vmatpush1.msra.mxu0 0.0
    %1766 = vmatprep.subr.mxu0 0.0
    %1767 = vmatpush1.msra.mxu0 0.0
    %1768 = vmatprep.subr.mxu0 0.0
    %1769 = vmatpush1.msra.mxu0 0.0
    %1770 = vmatprep.subr.mxu0 0.0
    %1771 = vmatpush1.msra.mxu0 0.0
    %1772 = vmatprep.subr.mxu0 0.0
    %1773 = vmatpush1.msra.mxu0 0.0
    %1774 = vmatprep.subr.mxu0 0.0
    %1775 = vmatpush1.msra.mxu0 0.0
    %1776 = vmatprep.subr.mxu0 0.0
    %1777 = vmatpush1.msra.mxu0 0.0
    %1778 = vmatprep.subr.mxu0 0.0
    %1779 = vmatpush1.msra.mxu0 0.0
    %1780 = vmatprep.subr.mxu0 0.0
    %1781 = vmatpush1.msra.mxu0 0.0
    %1782 = vmatprep.subr.mxu0 0.0
    %1783 = vmatpush1.msra.mxu0 0.0
    %1784 = vmatprep.subr.mxu0 0.0
    %1785 = vmatpush1.msra.mxu0 0.0
    %1786 = vmatprep.subr.mxu0 0.0
    %1787 = vmatpush1.msra.mxu0 0.0
    %1788 = vmatprep.subr.mxu0 0.0
    %1789 = vmatpush1.msra.mxu0 0.0
    %1790 = vmatprep.subr.mxu0 0.0
    %1791 = vmatpush1.msra.mxu0 0.0
    %1792 = vmatprep.subr.mxu0 0.0
    %1793 = vmatpush1.msra.mxu0 0.0
    %1794 = vmatprep.subr.mxu0 0.0
    %1795 = vmatpush1.msra.mxu0 0.0
    %1796 = vmatprep.subr.mxu0 0.0
    %1797 = vmatpush1.msra.mxu0 0.0
    %1798 = vmatprep.subr.mxu0 0.0
    %1799 = vmatpush1.msra.mxu0 0.0
    %1800 = vmatprep.subr.mxu0 0.0
    %1801 = vmatpush1.msra.mxu0 0.0
    %1802 = vmatprep.subr.mxu0 0.0
    %1803 = vmatpush1.msra.mxu0 0.0
    %1804 = vmatprep.subr.mxu0 0.0
    %1805 = vmatpush1.msra.mxu0 0.0
    %1806 = vmatprep.subr.mxu0 0.0
    %1807 = vmatpush1.msra.mxu0 0.0
    %1808 = vmatprep.mubr.f32.mxu0 0.0
    %1809 = vmatmul.mubr.f32.gmra.mrb[0].mxu0 %v1742
    %v1810 = vpop.f32.mrb[0].mxu0
    %v1811 = vadd.f32 0.0, %v1810
    %v1812 = vpop.f32.mrb[0].mxu0
    %1813 = vdwg.mxu0
    %v1814 = vadd.f32 %v1738, %v1811
    %v1815 = vadd.f32 %v1814, %v589
    %v1816 = vsub.f32 0.0, %v1815
    %v1817 = vmul.f32 %v1816, 1.442695
    %v1818 = vpow.pop %v1817
    %v1819 = vadd.f32 %v1818, 1.0
    %v1820 = vrcp.pop %v1819
    %v1821 = vmul.f32 1.0, %v1820
    %v1822 = vtanh.pop %v1815
    %v1823 = vmul.f32 %v1821, %v1425
    %1825 = vrot.lane.b32.xlu0 %v1822, 64
    %v1826 = vpop.permute.xlu0 %1825
    %v1828 = vmul.f32 %v1821, %v1826
    %1830 = vrot.lane.b32.xlu0 %v1828, 32
    %v1831 = vpop.permute.xlu0 %1830
    %v1833 = vadd.f32 %v1823, %v1831
    %v1834 = vtanh.pop %v1833
    %1836 = vrot.lane.b32.xlu0 %v1834, 64
    %v1837 = vpop.permute.xlu0 %1836
    %v1839 = vmul.f32 %v1821, %v1837
    %v1840 = vld [vmem:[#allocation2 + $0x4] sm:$0x1]
    %v1841 = vld [vmem:[#allocation2 + $0xc] sm:$0x1]
    %v1842 = vld [vmem:[#allocation2 + $0x14] sm:$0x1]
    %v1843 = vld [vmem:[#allocation2 + $0x1c] sm:$0x1]
    %v1844 = vld [vmem:[#allocation2 + $0x24] sm:$0x1]
    %v1845 = vld [vmem:[#allocation2 + $0x2c] sm:$0x1]
    %v1846 = vld [vmem:[#allocation2 + $0x34] sm:$0x1]
    %v1847 = vld [vmem:[#allocation2 + $0x3c] sm:$0x1]
    %v1848 = vld [vmem:[#allocation5 + $0x4] sm:$0x1]
    %v1849 = vld [vmem:[#allocation5 + $0xc] sm:$0x1]
    %v1850 = vld [vmem:[#allocation5 + $0x14] sm:$0x1]
    %v1851 = vld [vmem:[#allocation5 + $0x1c] sm:$0x1]
    %v1852 = vld [vmem:[#allocation5 + $0x24] sm:$0x1]
    %v1853 = vld [vmem:[#allocation5 + $0x2c] sm:$0x1]
    %v1854 = vld [vmem:[#allocation5 + $0x34] sm:$0x1]
    %v1855 = vld [vmem:[#allocation5 + $0x3c] sm:$0x1]
    %v1864 = vrot.slane %v1849, 7
    %v1865 = vsel %vm220, %v1864, %v1848
    %v1866 = vrot.slane %v1850, 6
    %v1867 = vsel %vm223, %v1866, %v1865
    %v1868 = vrot.slane %v1851, 5
    %v1869 = vsel %vm226, %v1868, %v1867
    %v1870 = vrot.slane %v1852, 4
    %v1871 = vsel %vm229, %v1870, %v1869
    %v1872 = vrot.slane %v1853, 3
    %v1873 = vsel %vm232, %v1872, %v1871
    %v1874 = vrot.slane %v1854, 2
    %v1875 = vsel %vm235, %v1874, %v1873
    %v1876 = vrot.slane %v1855, 1
    %v1877 = vsel %vm238, %v1876, %v1875
    %v1878 = vsel %vm240, %v1877, 0
    %1880 = vmatprep.subr.mxu0 0.0
    %1881 = vmatpush1.msra.mxu0 %v186
    %1882 = vmatprep.subr.mxu0 0.0
    %1883 = vmatpush1.msra.mxu0 %v187
    %1884 = vmatprep.subr.mxu0 0.0
    %1885 = vmatpush1.msra.mxu0 0.0
    %1886 = vmatprep.subr.mxu0 0.0
    %1887 = vmatpush1.msra.mxu0 0.0
    %1888 = vmatprep.subr.mxu0 0.0
    %1889 = vmatpush1.msra.mxu0 0.0
    %1890 = vmatprep.subr.mxu0 0.0
    %1891 = vmatpush1.msra.mxu0 0.0
    %1892 = vmatprep.subr.mxu0 0.0
    %1893 = vmatpush1.msra.mxu0 0.0
    %1894 = vmatprep.subr.mxu0 0.0
    %1895 = vmatpush1.msra.mxu0 0.0
    %1896 = vmatprep.subr.mxu0 0.0
    %1897 = vmatpush1.msra.mxu0 0.0
    %1898 = vmatprep.subr.mxu0 0.0
    %1899 = vmatpush1.msra.mxu0 0.0
    %1900 = vmatprep.subr.mxu0 0.0
    %1901 = vmatpush1.msra.mxu0 0.0
    %1902 = vmatprep.subr.mxu0 0.0
    %1903 = vmatpush1.msra.mxu0 0.0
    %1904 = vmatprep.subr.mxu0 0.0
    %1905 = vmatpush1.msra.mxu0 0.0
    %1906 = vmatprep.subr.mxu0 0.0
    %1907 = vmatpush1.msra.mxu0 0.0
    %1908 = vmatprep.subr.mxu0 0.0
    %1909 = vmatpush1.msra.mxu0 0.0
    %1910 = vmatprep.subr.mxu0 0.0
    %1911 = vmatpush1.msra.mxu0 0.0
    %1912 = vmatprep.subr.mxu0 0.0
    %1913 = vmatpush1.msra.mxu0 0.0
    %1914 = vmatprep.subr.mxu0 0.0
    %1915 = vmatpush1.msra.mxu0 0.0
    %1916 = vmatprep.subr.mxu0 0.0
    %1917 = vmatpush1.msra.mxu0 0.0
    %1918 = vmatprep.subr.mxu0 0.0
    %1919 = vmatpush1.msra.mxu0 0.0
    %1920 = vmatprep.subr.mxu0 0.0
    %1921 = vmatpush1.msra.mxu0 0.0
    %1922 = vmatprep.subr.mxu0 0.0
    %1923 = vmatpush1.msra.mxu0 0.0
    %1924 = vmatprep.subr.mxu0 0.0
    %1925 = vmatpush1.msra.mxu0 0.0
    %1926 = vmatprep.subr.mxu0 0.0
    %1927 = vmatpush1.msra.mxu0 0.0
    %1928 = vmatprep.subr.mxu0 0.0
    %1929 = vmatpush1.msra.mxu0 0.0
    %1930 = vmatprep.subr.mxu0 0.0
    %1931 = vmatpush1.msra.mxu0 0.0
    %1932 = vmatprep.subr.mxu0 0.0
    %1933 = vmatpush1.msra.mxu0 0.0
    %1934 = vmatprep.subr.mxu0 0.0
    %1935 = vmatpush1.msra.mxu0 0.0
    %1936 = vmatprep.subr.mxu0 0.0
    %1937 = vmatpush1.msra.mxu0 0.0
    %1938 = vmatprep.subr.mxu0 0.0
    %1939 = vmatpush1.msra.mxu0 0.0
    %1940 = vmatprep.subr.mxu0 0.0
    %1941 = vmatpush1.msra.mxu0 0.0
    %1942 = vmatprep.subr.mxu0 0.0
    %1943 = vmatpush1.msra.mxu0 0.0
    %1944 = vmatprep.mubr.f32.mxu0 0.0
    %1945 = vmatmul.mubr.f32.gmra.mrb[0].mxu0 %v1878
    %v1946 = vpop.f32.mrb[0].mxu0
    %v1947 = vadd.f32 0.0, %v1946
    %v1948 = vpop.f32.mrb[0].mxu0
    %1949 = vdwg.mxu0
    %v1958 = vrot.slane %v1841, 7
    %v1959 = vsel %vm220, %v1958, %v1840
    %v1960 = vrot.slane %v1842, 6
    %v1961 = vsel %vm223, %v1960, %v1959
    %v1962 = vrot.slane %v1843, 5
    %v1963 = vsel %vm226, %v1962, %v1961
    %v1964 = vrot.slane %v1844, 4
    %v1965 = vsel %vm229, %v1964, %v1963
    %v1966 = vrot.slane %v1845, 3
    %v1967 = vsel %vm232, %v1966, %v1965
    %v1968 = vrot.slane %v1846, 2
    %v1969 = vsel %vm235, %v1968, %v1967
    %v1970 = vrot.slane %v1847, 1
    %v1971 = vsel %vm238, %v1970, %v1969
    %v1972 = vsel %vm335, %v1971, 0
    %1974 = vmatprep.subr.mxu0 0.0
    %1975 = vmatpush1.msra.mxu0 %v182
    %1976 = vmatprep.subr.mxu0 0.0
    %1977 = vmatpush1.msra.mxu0 %v183
    %1978 = vmatprep.subr.mxu0 0.0
    %1979 = vmatpush1.msra.mxu0 %v184
    %1980 = vmatprep.subr.mxu0 0.0
    %1981 = vmatpush1.msra.mxu0 %v185
    %1982 = vmatprep.subr.mxu0 0.0
    %1983 = vmatpush1.msra.mxu0 0.0
    %1984 = vmatprep.subr.mxu0 0.0
    %1985 = vmatpush1.msra.mxu0 0.0
    %1986 = vmatprep.subr.mxu0 0.0
    %1987 = vmatpush1.msra.mxu0 0.0
    %1988 = vmatprep.subr.mxu0 0.0
    %1989 = vmatpush1.msra.mxu0 0.0
    %1990 = vmatprep.subr.mxu0 0.0
    %1991 = vmatpush1.msra.mxu0 0.0
    %1992 = vmatprep.subr.mxu0 0.0
    %1993 = vmatpush1.msra.mxu0 0.0
    %1994 = vmatprep.subr.mxu0 0.0
    %1995 = vmatpush1.msra.mxu0 0.0
    %1996 = vmatprep.subr.mxu0 0.0
    %1997 = vmatpush1.msra.mxu0 0.0
    %1998 = vmatprep.subr.mxu0 0.0
    %1999 = vmatpush1.msra.mxu0 0.0
    %2000 = vmatprep.subr.mxu0 0.0
    %2001 = vmatpush1.msra.mxu0 0.0
    %2002 = vmatprep.subr.mxu0 0.0
    %2003 = vmatpush1.msra.mxu0 0.0
    %2004 = vmatprep.subr.mxu0 0.0
    %2005 = vmatpush1.msra.mxu0 0.0
    %2006 = vmatprep.subr.mxu0 0.0
    %2007 = vmatpush1.msra.mxu0 0.0
    %2008 = vmatprep.subr.mxu0 0.0
    %2009 = vmatpush1.msra.mxu0 0.0
    %2010 = vmatprep.subr.mxu0 0.0
    %2011 = vmatpush1.msra.mxu0 0.0
    %2012 = vmatprep.subr.mxu0 0.0
    %2013 = vmatpush1.msra.mxu0 0.0
    %2014 = vmatprep.subr.mxu0 0.0
    %2015 = vmatpush1.msra.mxu0 0.0
    %2016 = vmatprep.subr.mxu0 0.0
    %2017 = vmatpush1.msra.mxu0 0.0
    %2018 = vmatprep.subr.mxu0 0.0
    %2019 = vmatpush1.msra.mxu0 0.0
    %2020 = vmatprep.subr.mxu0 0.0
    %2021 = vmatpush1.msra.mxu0 0.0
    %2022 = vmatprep.subr.mxu0 0.0
    %2023 = vmatpush1.msra.mxu0 0.0
    %2024 = vmatprep.subr.mxu0 0.0
    %2025 = vmatpush1.msra.mxu0 0.0
    %2026 = vmatprep.subr.mxu0 0.0
    %2027 = vmatpush1.msra.mxu0 0.0
    %2028 = vmatprep.subr.mxu0 0.0
    %2029 = vmatpush1.msra.mxu0 0.0
    %2030 = vmatprep.subr.mxu0 0.0
    %2031 = vmatpush1.msra.mxu0 0.0
    %2032 = vmatprep.subr.mxu0 0.0
    %2033 = vmatpush1.msra.mxu0 0.0
    %2034 = vmatprep.subr.mxu0 0.0
    %2035 = vmatpush1.msra.mxu0 0.0
    %2036 = vmatprep.subr.mxu0 0.0
    %2037 = vmatpush1.msra.mxu0 0.0
    %2038 = vmatprep.mubr.f32.mxu0 0.0
    %2039 = vmatmul.mubr.f32.gmra.mrb[0].mxu0 %v1972
    %v2040 = vpop.f32.mrb[0].mxu0
    %v2041 = vadd.f32 %v1947, %v2040
    %v2042 = vpop.f32.mrb[0].mxu0
    %2043 = vdwg.mxu0
    %v2044 = vld [vmem:[#allocation7 + $0x4] sm:$0x1]
    %v2045 = vld [vmem:[#allocation7 + $0xc] sm:$0x1]
    %v2046 = vld [vmem:[#allocation7 + $0x14] sm:$0x1]
    %v2047 = vld [vmem:[#allocation7 + $0x1c] sm:$0x1]
    %v2048 = vld [vmem:[#allocation7 + $0x24] sm:$0x1]
    %v2049 = vld [vmem:[#allocation7 + $0x2c] sm:$0x1]
    %v2050 = vld [vmem:[#allocation7 + $0x34] sm:$0x1]
    %v2051 = vld [vmem:[#allocation7 + $0x3c] sm:$0x1]
    %v2060 = vrot.slane %v2045, 7
    %v2061 = vsel %vm220, %v2060, %v2044
    %v2062 = vrot.slane %v2046, 6
    %v2063 = vsel %vm223, %v2062, %v2061
    %v2064 = vrot.slane %v2047, 5
    %v2065 = vsel %vm226, %v2064, %v2063
    %v2066 = vrot.slane %v2048, 4
    %v2067 = vsel %vm229, %v2066, %v2065
    %v2068 = vrot.slane %v2049, 3
    %v2069 = vsel %vm232, %v2068, %v2067
    %v2070 = vrot.slane %v2050, 2
    %v2071 = vsel %vm235, %v2070, %v2069
    %v2072 = vrot.slane %v2051, 1
    %v2073 = vsel %vm238, %v2072, %v2071
    %v2074 = vsel %vm240, %v2073, 0
    %2076 = vmatprep.subr.mxu0 0.0
    %2077 = vmatpush1.msra.mxu0 %v188
    %2078 = vmatprep.subr.mxu0 0.0
    %2079 = vmatpush1.msra.mxu0 %v189
    %2080 = vmatprep.subr.mxu0 0.0
    %2081 = vmatpush1.msra.mxu0 0.0
    %2082 = vmatprep.subr.mxu0 0.0
    %2083 = vmatpush1.msra.mxu0 0.0
    %2084 = vmatprep.subr.mxu0 0.0
    %2085 = vmatpush1.msra.mxu0 0.0
    %2086 = vmatprep.subr.mxu0 0.0
    %2087 = vmatpush1.msra.mxu0 0.0
    %2088 = vmatprep.subr.mxu0 0.0
    %2089 = vmatpush1.msra.mxu0 0.0
    %2090 = vmatprep.subr.mxu0 0.0
    %2091 = vmatpush1.msra.mxu0 0.0
    %2092 = vmatprep.subr.mxu0 0.0
    %2093 = vmatpush1.msra.mxu0 0.0
    %2094 = vmatprep.subr.mxu0 0.0
    %2095 = vmatpush1.msra.mxu0 0.0
    %2096 = vmatprep.subr.mxu0 0.0
    %2097 = vmatpush1.msra.mxu0 0.0
    %2098 = vmatprep.subr.mxu0 0.0
    %2099 = vmatpush1.msra.mxu0 0.0
    %2100 = vmatprep.subr.mxu0 0.0
    %2101 = vmatpush1.msra.mxu0 0.0
    %2102 = vmatprep.subr.mxu0 0.0
    %2103 = vmatpush1.msra.mxu0 0.0
    %2104 = vmatprep.subr.mxu0 0.0
    %2105 = vmatpush1.msra.mxu0 0.0
    %2106 = vmatprep.subr.mxu0 0.0
    %2107 = vmatpush1.msra.mxu0 0.0
    %2108 = vmatprep.subr.mxu0 0.0
    %2109 = vmatpush1.msra.mxu0 0.0
    %2110 = vmatprep.subr.mxu0 0.0
    %2111 = vmatpush1.msra.mxu0 0.0
    %2112 = vmatprep.subr.mxu0 0.0
    %2113 = vmatpush1.msra.mxu0 0.0
    %2114 = vmatprep.subr.mxu0 0.0
    %2115 = vmatpush1.msra.mxu0 0.0
    %2116 = vmatprep.subr.mxu0 0.0
    %2117 = vmatpush1.msra.mxu0 0.0
    %2118 = vmatprep.subr.mxu0 0.0
    %2119 = vmatpush1.msra.mxu0 0.0
    %2120 = vmatprep.subr.mxu0 0.0
    %2121 = vmatpush1.msra.mxu0 0.0
    %2122 = vmatprep.subr.mxu0 0.0
    %2123 = vmatpush1.msra.mxu0 0.0
    %2124 = vmatprep.subr.mxu0 0.0
    %2125 = vmatpush1.msra.mxu0 0.0
    %2126 = vmatprep.subr.mxu0 0.0
    %2127 = vmatpush1.msra.mxu0 0.0
    %2128 = vmatprep.subr.mxu0 0.0
    %2129 = vmatpush1.msra.mxu0 0.0
    %2130 = vmatprep.subr.mxu0 0.0
    %2131 = vmatpush1.msra.mxu0 0.0
    %2132 = vmatprep.subr.mxu0 0.0
    %2133 = vmatpush1.msra.mxu0 0.0
    %2134 = vmatprep.subr.mxu0 0.0
    %2135 = vmatpush1.msra.mxu0 0.0
    %2136 = vmatprep.subr.mxu0 0.0
    %2137 = vmatpush1.msra.mxu0 0.0
    %2138 = vmatprep.subr.mxu0 0.0
    %2139 = vmatpush1.msra.mxu0 0.0
    %2140 = vmatprep.mubr.f32.mxu0 0.0
    %2141 = vmatmul.mubr.f32.gmra.mrb[0].mxu0 %v2074
    %v2142 = vpop.f32.mrb[0].mxu0
    %v2143 = vadd.f32 0.0, %v2142
    %v2144 = vpop.f32.mrb[0].mxu0
    %2145 = vdwg.mxu0
    %v2146 = vadd.f32 %v2041, %v2143
    %2148 = vrot.lane.b32.xlu0 %v1839, 32
    %v2149 = vpop.permute.xlu0 %2148
    %v2150 = vsel %vm335, %v2149, 0
    %2152 = vmatprep.subr.mxu0 0.0
    %2153 = vmatpush1.msra.mxu0 %v190
    %2154 = vmatprep.subr.mxu0 0.0
    %2155 = vmatpush1.msra.mxu0 %v191
    %2156 = vmatprep.subr.mxu0 0.0
    %2157 = vmatpush1.msra.mxu0 %v192
    %2158 = vmatprep.subr.mxu0 0.0
    %2159 = vmatpush1.msra.mxu0 %v193
    %2160 = vmatprep.subr.mxu0 0.0
    %2161 = vmatpush1.msra.mxu0 0.0
    %2162 = vmatprep.subr.mxu0 0.0
    %2163 = vmatpush1.msra.mxu0 0.0
    %2164 = vmatprep.subr.mxu0 0.0
    %2165 = vmatpush1.msra.mxu0 0.0
    %2166 = vmatprep.subr.mxu0 0.0
    %2167 = vmatpush1.msra.mxu0 0.0
    %2168 = vmatprep.subr.mxu0 0.0
    %2169 = vmatpush1.msra.mxu0 0.0
    %2170 = vmatprep.subr.mxu0 0.0
    %2171 = vmatpush1.msra.mxu0 0.0
    %2172 = vmatprep.subr.mxu0 0.0
    %2173 = vmatpush1.msra.mxu0 0.0
    %2174 = vmatprep.subr.mxu0 0.0
    %2175 = vmatpush1.msra.mxu0 0.0
    %2176 = vmatprep.subr.mxu0 0.0
    %2177 = vmatpush1.msra.mxu0 0.0
    %2178 = vmatprep.subr.mxu0 0.0
    %2179 = vmatpush1.msra.mxu0 0.0
    %2180 = vmatprep.subr.mxu0 0.0
    %2181 = vmatpush1.msra.mxu0 0.0
    %2182 = vmatprep.subr.mxu0 0.0
    %2183 = vmatpush1.msra.mxu0 0.0
    %2184 = vmatprep.subr.mxu0 0.0
    %2185 = vmatpush1.msra.mxu0 0.0
    %2186 = vmatprep.subr.mxu0 0.0
    %2187 = vmatpush1.msra.mxu0 0.0
    %2188 = vmatprep.subr.mxu0 0.0
    %2189 = vmatpush1.msra.mxu0 0.0
    %2190 = vmatprep.subr.mxu0 0.0
    %2191 = vmatpush1.msra.mxu0 0.0
    %2192 = vmatprep.subr.mxu0 0.0
    %2193 = vmatpush1.msra.mxu0 0.0
    %2194 = vmatprep.subr.mxu0 0.0
    %2195 = vmatpush1.msra.mxu0 0.0
    %2196 = vmatprep.subr.mxu0 0.0
    %2197 = vmatpush1.msra.mxu0 0.0
    %2198 = vmatprep.subr.mxu0 0.0
    %2199 = vmatpush1.msra.mxu0 0.0
    %2200 = vmatprep.subr.mxu0 0.0
    %2201 = vmatpush1.msra.mxu0 0.0
    %2202 = vmatprep.subr.mxu0 0.0
    %2203 = vmatpush1.msra.mxu0 0.0
    %2204 = vmatprep.subr.mxu0 0.0
    %2205 = vmatpush1.msra.mxu0 0.0
    %2206 = vmatprep.subr.mxu0 0.0
    %2207 = vmatpush1.msra.mxu0 0.0
    %2208 = vmatprep.subr.mxu0 0.0
    %2209 = vmatpush1.msra.mxu0 0.0
    %2210 = vmatprep.subr.mxu0 0.0
    %2211 = vmatpush1.msra.mxu0 0.0
    %2212 = vmatprep.subr.mxu0 0.0
    %2213 = vmatpush1.msra.mxu0 0.0
    %2214 = vmatprep.subr.mxu0 0.0
    %2215 = vmatpush1.msra.mxu0 0.0
    %2216 = vmatprep.mubr.f32.mxu0 0.0
    %2217 = vmatmul.mubr.f32.gmra.mrb[0].mxu0 %v2150
    %v2218 = vpop.f32.mrb[0].mxu0
    %v2219 = vadd.f32 0.0, %v2218
    %v2220 = vpop.f32.mrb[0].mxu0
    %2221 = vdwg.mxu0
    %v2222 = vadd.f32 %v2146, %v2219
    %v2223 = vadd.f32 %v2222, %v589
    %v2224 = vsub.f32 0.0, %v2223
    %v2225 = vmul.f32 %v2224, 1.442695
    %v2226 = vpow.pop %v2225
    %v2227 = vadd.f32 %v2226, 1.0
    %v2228 = vrcp.pop %v2227
    %v2229 = vmul.f32 1.0, %v2228
    %v2230 = vtanh.pop %v2223
    %v2231 = vmul.f32 %v2229, %v1833
    %2233 = vrot.lane.b32.xlu0 %v2230, 64
    %v2234 = vpop.permute.xlu0 %2233
    %v2236 = vmul.f32 %v2229, %v2234
    %2238 = vrot.lane.b32.xlu0 %v2236, 32
    %v2239 = vpop.permute.xlu0 %2238
    %v2241 = vadd.f32 %v2231, %v2239
    %v2242 = vtanh.pop %v2241
    %2244 = vrot.lane.b32.xlu0 %v2242, 64
    %v2245 = vpop.permute.xlu0 %2244
    %v2247 = vmul.f32 %v2229, %v2245
    %v2248 = vld [vmem:[#allocation2 + $0x5] sm:$0x1]
    %v2249 = vld [vmem:[#allocation2 + $0xd] sm:$0x1]
    %v2250 = vld [vmem:[#allocation2 + $0x15] sm:$0x1]
    %v2251 = vld [vmem:[#allocation2 + $0x1d] sm:$0x1]
    %v2252 = vld [vmem:[#allocation2 + $0x25] sm:$0x1]
    %v2253 = vld [vmem:[#allocation2 + $0x2d] sm:$0x1]
    %v2254 = vld [vmem:[#allocation2 + $0x35] sm:$0x1]
    %v2255 = vld [vmem:[#allocation2 + $0x3d] sm:$0x1]
    %v2256 = vld [vmem:[#allocation5 + $0x5] sm:$0x1]
    %v2257 = vld [vmem:[#allocation5 + $0xd] sm:$0x1]
    %v2258 = vld [vmem:[#allocation5 + $0x15] sm:$0x1]
    %v2259 = vld [vmem:[#allocation5 + $0x1d] sm:$0x1]
    %v2260 = vld [vmem:[#allocation5 + $0x25] sm:$0x1]
    %v2261 = vld [vmem:[#allocation5 + $0x2d] sm:$0x1]
    %v2262 = vld [vmem:[#allocation5 + $0x35] sm:$0x1]
    %v2263 = vld [vmem:[#allocation5 + $0x3d] sm:$0x1]
    %v2272 = vrot.slane %v2257, 7
    %v2273 = vsel %vm220, %v2272, %v2256
    %v2274 = vrot.slane %v2258, 6
    %v2275 = vsel %vm223, %v2274, %v2273
    %v2276 = vrot.slane %v2259, 5
    %v2277 = vsel %vm226, %v2276, %v2275
    %v2278 = vrot.slane %v2260, 4
    %v2279 = vsel %vm229, %v2278, %v2277
    %v2280 = vrot.slane %v2261, 3
    %v2281 = vsel %vm232, %v2280, %v2279
    %v2282 = vrot.slane %v2262, 2
    %v2283 = vsel %vm235, %v2282, %v2281
    %v2284 = vrot.slane %v2263, 1
    %v2285 = vsel %vm238, %v2284, %v2283
    %v2286 = vsel %vm240, %v2285, 0
    %2288 = vmatprep.subr.mxu0 0.0
    %2289 = vmatpush1.msra.mxu0 %v186
    %2290 = vmatprep.subr.mxu0 0.0
    %2291 = vmatpush1.msra.mxu0 %v187
    %2292 = vmatprep.subr.mxu0 0.0
    %2293 = vmatpush1.msra.mxu0 0.0
    %2294 = vmatprep.subr.mxu0 0.0
    %2295 = vmatpush1.msra.mxu0 0.0
    %2296 = vmatprep.subr.mxu0 0.0
    %2297 = vmatpush1.msra.mxu0 0.0
    %2298 = vmatprep.subr.mxu0 0.0
    %2299 = vmatpush1.msra.mxu0 0.0
    %2300 = vmatprep.subr.mxu0 0.0
    %2301 = vmatpush1.msra.mxu0 0.0
    %2302 = vmatprep.subr.mxu0 0.0
    %2303 = vmatpush1.msra.mxu0 0.0
    %2304 = vmatprep.subr.mxu0 0.0
    %2305 = vmatpush1.msra.mxu0 0.0
    %2306 = vmatprep.subr.mxu0 0.0
    %2307 = vmatpush1.msra.mxu0 0.0
    %2308 = vmatprep.subr.mxu0 0.0
    %2309 = vmatpush1.msra.mxu0 0.0
    %2310 = vmatprep.subr.mxu0 0.0
    %2311 = vmatpush1.msra.mxu0 0.0
    %2312 = vmatprep.subr.mxu0 0.0
    %2313 = vmatpush1.msra.mxu0 0.0
    %2314 = vmatprep.subr.mxu0 0.0
    %2315 = vmatpush1.msra.mxu0 0.0
    %2316 = vmatprep.subr.mxu0 0.0
    %2317 = vmatpush1.msra.mxu0 0.0
    %2318 = vmatprep.subr.mxu0 0.0
    %2319 = vmatpush1.msra.mxu0 0.0
    %2320 = vmatprep.subr.mxu0 0.0
    %2321 = vmatpush1.msra.mxu0 0.0
    %2322 = vmatprep.subr.mxu0 0.0
    %2323 = vmatpush1.msra.mxu0 0.0
    %2324 = vmatprep.subr.mxu0 0.0
    %2325 = vmatpush1.msra.mxu0 0.0
    %2326 = vmatprep.subr.mxu0 0.0
    %2327 = vmatpush1.msra.mxu0 0.0
    %2328 = vmatprep.subr.mxu0 0.0
    %2329 = vmatpush1.msra.mxu0 0.0
    %2330 = vmatprep.subr.mxu0 0.0
    %2331 = vmatpush1.msra.mxu0 0.0
    %2332 = vmatprep.subr.mxu0 0.0
    %2333 = vmatpush1.msra.mxu0 0.0
    %2334 = vmatprep.subr.mxu0 0.0
    %2335 = vmatpush1.msra.mxu0 0.0
    %2336 = vmatprep.subr.mxu0 0.0
    %2337 = vmatpush1.msra.mxu0 0.0
    %2338 = vmatprep.subr.mxu0 0.0
    %2339 = vmatpush1.msra.mxu0 0.0
    %2340 = vmatprep.subr.mxu0 0.0
    %2341 = vmatpush1.msra.mxu0 0.0
    %2342 = vmatprep.subr.mxu0 0.0
    %2343 = vmatpush1.msra.mxu0 0.0
    %2344 = vmatprep.subr.mxu0 0.0
    %2345 = vmatpush1.msra.mxu0 0.0
    %2346 = vmatprep.subr.mxu0 0.0
    %2347 = vmatpush1.msra.mxu0 0.0
    %2348 = vmatprep.subr.mxu0 0.0
    %2349 = vmatpush1.msra.mxu0 0.0
    %2350 = vmatprep.subr.mxu0 0.0
    %2351 = vmatpush1.msra.mxu0 0.0
    %2352 = vmatprep.mubr.f32.mxu0 0.0
    %2353 = vmatmul.mubr.f32.gmra.mrb[0].mxu0 %v2286
    %v2354 = vpop.f32.mrb[0].mxu0
    %v2355 = vadd.f32 0.0, %v2354
    %v2356 = vpop.f32.mrb[0].mxu0
    %2357 = vdwg.mxu0
    %v2366 = vrot.slane %v2249, 7
    %v2367 = vsel %vm220, %v2366, %v2248
    %v2368 = vrot.slane %v2250, 6
    %v2369 = vsel %vm223, %v2368, %v2367
    %v2370 = vrot.slane %v2251, 5
    %v2371 = vsel %vm226, %v2370, %v2369
    %v2372 = vrot.slane %v2252, 4
    %v2373 = vsel %vm229, %v2372, %v2371
    %v2374 = vrot.slane %v2253, 3
    %v2375 = vsel %vm232, %v2374, %v2373
    %v2376 = vrot.slane %v2254, 2
    %v2377 = vsel %vm235, %v2376, %v2375
    %v2378 = vrot.slane %v2255, 1
    %v2379 = vsel %vm238, %v2378, %v2377
    %v2380 = vsel %vm335, %v2379, 0
    %2382 = vmatprep.subr.mxu0 0.0
    %2383 = vmatpush1.msra.mxu0 %v182
    %2384 = vmatprep.subr.mxu0 0.0
    %2385 = vmatpush1.msra.mxu0 %v183
    %2386 = vmatprep.subr.mxu0 0.0
    %2387 = vmatpush1.msra.mxu0 %v184
    %2388 = vmatprep.subr.mxu0 0.0
    %2389 = vmatpush1.msra.mxu0 %v185
    %2390 = vmatprep.subr.mxu0 0.0
    %2391 = vmatpush1.msra.mxu0 0.0
    %2392 = vmatprep.subr.mxu0 0.0
    %2393 = vmatpush1.msra.mxu0 0.0
    %2394 = vmatprep.subr.mxu0 0.0
    %2395 = vmatpush1.msra.mxu0 0.0
    %2396 = vmatprep.subr.mxu0 0.0
    %2397 = vmatpush1.msra.mxu0 0.0
    %2398 = vmatprep.subr.mxu0 0.0
    %2399 = vmatpush1.msra.mxu0 0.0
    %2400 = vmatprep.subr.mxu0 0.0
    %2401 = vmatpush1.msra.mxu0 0.0
    %2402 = vmatprep.subr.mxu0 0.0
    %2403 = vmatpush1.msra.mxu0 0.0
    %2404 = vmatprep.subr.mxu0 0.0
    %2405 = vmatpush1.msra.mxu0 0.0
    %2406 = vmatprep.subr.mxu0 0.0
    %2407 = vmatpush1.msra.mxu0 0.0
    %2408 = vmatprep.subr.mxu0 0.0
    %2409 = vmatpush1.msra.mxu0 0.0
    %2410 = vmatprep.subr.mxu0 0.0
    %2411 = vmatpush1.msra.mxu0 0.0
    %2412 = vmatprep.subr.mxu0 0.0
    %2413 = vmatpush1.msra.mxu0 0.0
    %2414 = vmatprep.subr.mxu0 0.0
    %2415 = vmatpush1.msra.mxu0 0.0
    %2416 = vmatprep.subr.mxu0 0.0
    %2417 = vmatpush1.msra.mxu0 0.0
    %2418 = vmatprep.subr.mxu0 0.0
    %2419 = vmatpush1.msra.mxu0 0.0
    %2420 = vmatprep.subr.mxu0 0.0
    %2421 = vmatpush1.msra.mxu0 0.0
    %2422 = vmatprep.subr.mxu0 0.0
    %2423 = vmatpush1.msra.mxu0 0.0
    %2424 = vmatprep.subr.mxu0 0.0
    %2425 = vmatpush1.msra.mxu0 0.0
    %2426 = vmatprep.subr.mxu0 0.0
    %2427 = vmatpush1.msra.mxu0 0.0
    %2428 = vmatprep.subr.mxu0 0.0
    %2429 = vmatpush1.msra.mxu0 0.0
    %2430 = vmatprep.subr.mxu0 0.0
    %2431 = vmatpush1.msra.mxu0 0.0
    %2432 = vmatprep.subr.mxu0 0.0
    %2433 = vmatpush1.msra.mxu0 0.0
    %2434 = vmatprep.subr.mxu0 0.0
    %2435 = vmatpush1.msra.mxu0 0.0
    %2436 = vmatprep.subr.mxu0 0.0
    %2437 = vmatpush1.msra.mxu0 0.0
    %2438 = vmatprep.subr.mxu0 0.0
    %2439 = vmatpush1.msra.mxu0 0.0
    %2440 = vmatprep.subr.mxu0 0.0
    %2441 = vmatpush1.msra.mxu0 0.0
    %2442 = vmatprep.subr.mxu0 0.0
    %2443 = vmatpush1.msra.mxu0 0.0
    %2444 = vmatprep.subr.mxu0 0.0
    %2445 = vmatpush1.msra.mxu0 0.0
    %2446 = vmatprep.mubr.f32.mxu0 0.0
    %2447 = vmatmul.mubr.f32.gmra.mrb[0].mxu0 %v2380
    %v2448 = vpop.f32.mrb[0].mxu0
    %v2449 = vadd.f32 %v2355, %v2448
    %v2450 = vpop.f32.mrb[0].mxu0
    %2451 = vdwg.mxu0
    %v2452 = vld [vmem:[#allocation7 + $0x5] sm:$0x1]
    %v2453 = vld [vmem:[#allocation7 + $0xd] sm:$0x1]
    %v2454 = vld [vmem:[#allocation7 + $0x15] sm:$0x1]
    %v2455 = vld [vmem:[#allocation7 + $0x1d] sm:$0x1]
    %v2456 = vld [vmem:[#allocation7 + $0x25] sm:$0x1]
    %v2457 = vld [vmem:[#allocation7 + $0x2d] sm:$0x1]
    %v2458 = vld [vmem:[#allocation7 + $0x35] sm:$0x1]
    %v2459 = vld [vmem:[#allocation7 + $0x3d] sm:$0x1]
    %v2468 = vrot.slane %v2453, 7
    %v2469 = vsel %vm220, %v2468, %v2452
    %v2470 = vrot.slane %v2454, 6
    %v2471 = vsel %vm223, %v2470, %v2469
    %v2472 = vrot.slane %v2455, 5
    %v2473 = vsel %vm226, %v2472, %v2471
    %v2474 = vrot.slane %v2456, 4
    %v2475 = vsel %vm229, %v2474, %v2473
    %v2476 = vrot.slane %v2457, 3
    %v2477 = vsel %vm232, %v2476, %v2475
    %v2478 = vrot.slane %v2458, 2
    %v2479 = vsel %vm235, %v2478, %v2477
    %v2480 = vrot.slane %v2459, 1
    %v2481 = vsel %vm238, %v2480, %v2479
    %v2482 = vsel %vm240, %v2481, 0
    %2484 = vmatprep.subr.mxu0 0.0
    %2485 = vmatpush1.msra.mxu0 %v188
    %2486 = vmatprep.subr.mxu0 0.0
    %2487 = vmatpush1.msra.mxu0 %v189
    %2488 = vmatprep.subr.mxu0 0.0
    %2489 = vmatpush1.msra.mxu0 0.0
    %2490 = vmatprep.subr.mxu0 0.0
    %2491 = vmatpush1.msra.mxu0 0.0
    %2492 = vmatprep.subr.mxu0 0.0
    %2493 = vmatpush1.msra.mxu0 0.0
    %2494 = vmatprep.subr.mxu0 0.0
    %2495 = vmatpush1.msra.mxu0 0.0
    %2496 = vmatprep.subr.mxu0 0.0
    %2497 = vmatpush1.msra.mxu0 0.0
    %2498 = vmatprep.subr.mxu0 0.0
    %2499 = vmatpush1.msra.mxu0 0.0
    %2500 = vmatprep.subr.mxu0 0.0
    %2501 = vmatpush1.msra.mxu0 0.0
    %2502 = vmatprep.subr.mxu0 0.0
    %2503 = vmatpush1.msra.mxu0 0.0
    %2504 = vmatprep.subr.mxu0 0.0
    %2505 = vmatpush1.msra.mxu0 0.0
    %2506 = vmatprep.subr.mxu0 0.0
    %2507 = vmatpush1.msra.mxu0 0.0
    %2508 = vmatprep.subr.mxu0 0.0
    %2509 = vmatpush1.msra.mxu0 0.0
    %2510 = vmatprep.subr.mxu0 0.0
    %2511 = vmatpush1.msra.mxu0 0.0
    %2512 = vmatprep.subr.mxu0 0.0
    %2513 = vmatpush1.msra.mxu0 0.0
    %2514 = vmatprep.subr.mxu0 0.0
    %2515 = vmatpush1.msra.mxu0 0.0
    %2516 = vmatprep.subr.mxu0 0.0
    %2517 = vmatpush1.msra.mxu0 0.0
    %2518 = vmatprep.subr.mxu0 0.0
    %2519 = vmatpush1.msra.mxu0 0.0
    %2520 = vmatprep.subr.mxu0 0.0
    %2521 = vmatpush1.msra.mxu0 0.0
    %2522 = vmatprep.subr.mxu0 0.0
    %2523 = vmatpush1.msra.mxu0 0.0
    %2524 = vmatprep.subr.mxu0 0.0
    %2525 = vmatpush1.msra.mxu0 0.0
    %2526 = vmatprep.subr.mxu0 0.0
    %2527 = vmatpush1.msra.mxu0 0.0
    %2528 = vmatprep.subr.mxu0 0.0
    %2529 = vmatpush1.msra.mxu0 0.0
    %2530 = vmatprep.subr.mxu0 0.0
    %2531 = vmatpush1.msra.mxu0 0.0
    %2532 = vmatprep.subr.mxu0 0.0
    %2533 = vmatpush1.msra.mxu0 0.0
    %2534 = vmatprep.subr.mxu0 0.0
    %2535 = vmatpush1.msra.mxu0 0.0
    %2536 = vmatprep.subr.mxu0 0.0
    %2537 = vmatpush1.msra.mxu0 0.0
    %2538 = vmatprep.subr.mxu0 0.0
    %2539 = vmatpush1.msra.mxu0 0.0
    %2540 = vmatprep.subr.mxu0 0.0
    %2541 = vmatpush1.msra.mxu0 0.0
    %2542 = vmatprep.subr.mxu0 0.0
    %2543 = vmatpush1.msra.mxu0 0.0
    %2544 = vmatprep.subr.mxu0 0.0
    %2545 = vmatpush1.msra.mxu0 0.0
    %2546 = vmatprep.subr.mxu0 0.0
    %2547 = vmatpush1.msra.mxu0 0.0
    %2548 = vmatprep.mubr.f32.mxu0 0.0
    %2549 = vmatmul.mubr.f32.gmra.mrb[0].mxu0 %v2482
    %v2550 = vpop.f32.mrb[0].mxu0
    %v2551 = vadd.f32 0.0, %v2550
    %v2552 = vpop.f32.mrb[0].mxu0
    %2553 = vdwg.mxu0
    %v2554 = vadd.f32 %v2449, %v2551
    %2556 = vrot.lane.b32.xlu0 %v2247, 32
    %v2557 = vpop.permute.xlu0 %2556
    %v2558 = vsel %vm335, %v2557, 0
    %2560 = vmatprep.subr.mxu0 0.0
    %2561 = vmatpush1.msra.mxu0 %v190
    %2562 = vmatprep.subr.mxu0 0.0
    %2563 = vmatpush1.msra.mxu0 %v191
    %2564 = vmatprep.subr.mxu0 0.0
    %2565 = vmatpush1.msra.mxu0 %v192
    %2566 = vmatprep.subr.mxu0 0.0
    %2567 = vmatpush1.msra.mxu0 %v193
    %2568 = vmatprep.subr.mxu0 0.0
    %2569 = vmatpush1.msra.mxu0 0.0
    %2570 = vmatprep.subr.mxu0 0.0
    %2571 = vmatpush1.msra.mxu0 0.0
    %2572 = vmatprep.subr.mxu0 0.0
    %2573 = vmatpush1.msra.mxu0 0.0
    %2574 = vmatprep.subr.mxu0 0.0
    %2575 = vmatpush1.msra.mxu0 0.0
    %2576 = vmatprep.subr.mxu0 0.0
    %2577 = vmatpush1.msra.mxu0 0.0
    %2578 = vmatprep.subr.mxu0 0.0
    %2579 = vmatpush1.msra.mxu0 0.0
    %2580 = vmatprep.subr.mxu0 0.0
    %2581 = vmatpush1.msra.mxu0 0.0
    %2582 = vmatprep.subr.mxu0 0.0
    %2583 = vmatpush1.msra.mxu0 0.0
    %2584 = vmatprep.subr.mxu0 0.0
    %2585 = vmatpush1.msra.mxu0 0.0
    %2586 = vmatprep.subr.mxu0 0.0
    %2587 = vmatpush1.msra.mxu0 0.0
    %2588 = vmatprep.subr.mxu0 0.0
    %2589 = vmatpush1.msra.mxu0 0.0
    %2590 = vmatprep.subr.mxu0 0.0
    %2591 = vmatpush1.msra.mxu0 0.0
    %2592 = vmatprep.subr.mxu0 0.0
    %2593 = vmatpush1.msra.mxu0 0.0
    %2594 = vmatprep.subr.mxu0 0.0
    %2595 = vmatpush1.msra.mxu0 0.0
    %2596 = vmatprep.subr.mxu0 0.0
    %2597 = vmatpush1.msra.mxu0 0.0
    %2598 = vmatprep.subr.mxu0 0.0
    %2599 = vmatpush1.msra.mxu0 0.0
    %2600 = vmatprep.subr.mxu0 0.0
    %2601 = vmatpush1.msra.mxu0 0.0
    %2602 = vmatprep.subr.mxu0 0.0
    %2603 = vmatpush1.msra.mxu0 0.0
    %2604 = vmatprep.subr.mxu0 0.0
    %2605 = vmatpush1.msra.mxu0 0.0
    %2606 = vmatprep.subr.mxu0 0.0
    %2607 = vmatpush1.msra.mxu0 0.0
    %2608 = vmatprep.subr.mxu0 0.0
    %2609 = vmatpush1.msra.mxu0 0.0
    %2610 = vmatprep.subr.mxu0 0.0
    %2611 = vmatpush1.msra.mxu0 0.0
    %2612 = vmatprep.subr.mxu0 0.0
    %2613 = vmatpush1.msra.mxu0 0.0
    %2614 = vmatprep.subr.mxu0 0.0
    %2615 = vmatpush1.msra.mxu0 0.0
    %2616 = vmatprep.subr.mxu0 0.0
    %2617 = vmatpush1.msra.mxu0 0.0
    %2618 = vmatprep.subr.mxu0 0.0
    %2619 = vmatpush1.msra.mxu0 0.0
    %2620 = vmatprep.subr.mxu0 0.0
    %2621 = vmatpush1.msra.mxu0 0.0
    %2622 = vmatprep.subr.mxu0 0.0
    %2623 = vmatpush1.msra.mxu0 0.0
    %2624 = vmatprep.mubr.f32.mxu0 0.0
    %2625 = vmatmul.mubr.f32.gmra.mrb[0].mxu0 %v2558
    %v2626 = vpop.f32.mrb[0].mxu0
    %v2627 = vadd.f32 0.0, %v2626
    %v2628 = vpop.f32.mrb[0].mxu0
    %2629 = vdwg.mxu0
    %v2630 = vadd.f32 %v2554, %v2627
    %v2631 = vadd.f32 %v2630, %v589
    %v2632 = vsub.f32 0.0, %v2631
    %v2633 = vmul.f32 %v2632, 1.442695
    %v2634 = vpow.pop %v2633
    %v2635 = vadd.f32 %v2634, 1.0
    %v2636 = vrcp.pop %v2635
    %v2637 = vmul.f32 1.0, %v2636
    %v2638 = vtanh.pop %v2631
    %v2639 = vmul.f32 %v2637, %v2241
    %2641 = vrot.lane.b32.xlu0 %v2638, 64
    %v2642 = vpop.permute.xlu0 %2641
    %v2644 = vmul.f32 %v2637, %v2642
    %2646 = vrot.lane.b32.xlu0 %v2644, 32
    %v2647 = vpop.permute.xlu0 %2646
    %v2649 = vadd.f32 %v2639, %v2647
    %v2650 = vtanh.pop %v2649
    %2652 = vrot.lane.b32.xlu0 %v2650, 64
    %v2653 = vpop.permute.xlu0 %2652
    %v2655 = vmul.f32 %v2637, %v2653
    %v2656 = vld [vmem:[#allocation2 + $0x6] sm:$0x1]
    %v2657 = vld [vmem:[#allocation2 + $0xe] sm:$0x1]
    %v2658 = vld [vmem:[#allocation2 + $0x16] sm:$0x1]
    %v2659 = vld [vmem:[#allocation2 + $0x1e] sm:$0x1]
    %v2660 = vld [vmem:[#allocation2 + $0x26] sm:$0x1]
    %v2661 = vld [vmem:[#allocation2 + $0x2e] sm:$0x1]
    %v2662 = vld [vmem:[#allocation2 + $0x36] sm:$0x1]
    %v2663 = vld [vmem:[#allocation2 + $0x3e] sm:$0x1]
    %v2664 = vld [vmem:[#allocation5 + $0x6] sm:$0x1]
    %v2665 = vld [vmem:[#allocation5 + $0xe] sm:$0x1]
    %v2666 = vld [vmem:[#allocation5 + $0x16] sm:$0x1]
    %v2667 = vld [vmem:[#allocation5 + $0x1e] sm:$0x1]
    %v2668 = vld [vmem:[#allocation5 + $0x26] sm:$0x1]
    %v2669 = vld [vmem:[#allocation5 + $0x2e] sm:$0x1]
    %v2670 = vld [vmem:[#allocation5 + $0x36] sm:$0x1]
    %v2671 = vld [vmem:[#allocation5 + $0x3e] sm:$0x1]
    %v2680 = vrot.slane %v2665, 7
    %v2681 = vsel %vm220, %v2680, %v2664
    %v2682 = vrot.slane %v2666, 6
    %v2683 = vsel %vm223, %v2682, %v2681
    %v2684 = vrot.slane %v2667, 5
    %v2685 = vsel %vm226, %v2684, %v2683
    %v2686 = vrot.slane %v2668, 4
    %v2687 = vsel %vm229, %v2686, %v2685
    %v2688 = vrot.slane %v2669, 3
    %v2689 = vsel %vm232, %v2688, %v2687
    %v2690 = vrot.slane %v2670, 2
    %v2691 = vsel %vm235, %v2690, %v2689
    %v2692 = vrot.slane %v2671, 1
    %v2693 = vsel %vm238, %v2692, %v2691
    %v2694 = vsel %vm240, %v2693, 0
    %2696 = vmatprep.subr.mxu0 0.0
    %2697 = vmatpush1.msra.mxu0 %v186
    %2698 = vmatprep.subr.mxu0 0.0
    %2699 = vmatpush1.msra.mxu0 %v187
    %2700 = vmatprep.subr.mxu0 0.0
    %2701 = vmatpush1.msra.mxu0 0.0
    %2702 = vmatprep.subr.mxu0 0.0
    %2703 = vmatpush1.msra.mxu0 0.0
    %2704 = vmatprep.subr.mxu0 0.0
    %2705 = vmatpush1.msra.mxu0 0.0
    %2706 = vmatprep.subr.mxu0 0.0
    %2707 = vmatpush1.msra.mxu0 0.0
    %2708 = vmatprep.subr.mxu0 0.0
    %2709 = vmatpush1.msra.mxu0 0.0
    %2710 = vmatprep.subr.mxu0 0.0
    %2711 = vmatpush1.msra.mxu0 0.0
    %2712 = vmatprep.subr.mxu0 0.0
    %2713 = vmatpush1.msra.mxu0 0.0
    %2714 = vmatprep.subr.mxu0 0.0
    %2715 = vmatpush1.msra.mxu0 0.0
    %2716 = vmatprep.subr.mxu0 0.0
    %2717 = vmatpush1.msra.mxu0 0.0
    %2718 = vmatprep.subr.mxu0 0.0
    %2719 = vmatpush1.msra.mxu0 0.0
    %2720 = vmatprep.subr.mxu0 0.0
    %2721 = vmatpush1.msra.mxu0 0.0
    %2722 = vmatprep.subr.mxu0 0.0
    %2723 = vmatpush1.msra.mxu0 0.0
    %2724 = vmatprep.subr.mxu0 0.0
    %2725 = vmatpush1.msra.mxu0 0.0
    %2726 = vmatprep.subr.mxu0 0.0
    %2727 = vmatpush1.msra.mxu0 0.0
    %2728 = vmatprep.subr.mxu0 0.0
    %2729 = vmatpush1.msra.mxu0 0.0
    %2730 = vmatprep.subr.mxu0 0.0
    %2731 = vmatpush1.msra.mxu0 0.0
    %2732 = vmatprep.subr.mxu0 0.0
    %2733 = vmatpush1.msra.mxu0 0.0
    %2734 = vmatprep.subr.mxu0 0.0
    %2735 = vmatpush1.msra.mxu0 0.0
    %2736 = vmatprep.subr.mxu0 0.0
    %2737 = vmatpush1.msra.mxu0 0.0
    %2738 = vmatprep.subr.mxu0 0.0
    %2739 = vmatpush1.msra.mxu0 0.0
    %2740 = vmatprep.subr.mxu0 0.0
    %2741 = vmatpush1.msra.mxu0 0.0
    %2742 = vmatprep.subr.mxu0 0.0
    %2743 = vmatpush1.msra.mxu0 0.0
    %2744 = vmatprep.subr.mxu0 0.0
    %2745 = vmatpush1.msra.mxu0 0.0
    %2746 = vmatprep.subr.mxu0 0.0
    %2747 = vmatpush1.msra.mxu0 0.0
    %2748 = vmatprep.subr.mxu0 0.0
    %2749 = vmatpush1.msra.mxu0 0.0
    %2750 = vmatprep.subr.mxu0 0.0
    %2751 = vmatpush1.msra.mxu0 0.0
    %2752 = vmatprep.subr.mxu0 0.0
    %2753 = vmatpush1.msra.mxu0 0.0
    %2754 = vmatprep.subr.mxu0 0.0
    %2755 = vmatpush1.msra.mxu0 0.0
    %2756 = vmatprep.subr.mxu0 0.0
    %2757 = vmatpush1.msra.mxu0 0.0
    %2758 = vmatprep.subr.mxu0 0.0
    %2759 = vmatpush1.msra.mxu0 0.0
    %2760 = vmatprep.mubr.f32.mxu0 0.0
    %2761 = vmatmul.mubr.f32.gmra.mrb[0].mxu0 %v2694
    %v2762 = vpop.f32.mrb[0].mxu0
    %v2763 = vadd.f32 0.0, %v2762
    %v2764 = vpop.f32.mrb[0].mxu0
    %2765 = vdwg.mxu0
    %v2774 = vrot.slane %v2657, 7
    %v2775 = vsel %vm220, %v2774, %v2656
    %v2776 = vrot.slane %v2658, 6
    %v2777 = vsel %vm223, %v2776, %v2775
    %v2778 = vrot.slane %v2659, 5
    %v2779 = vsel %vm226, %v2778, %v2777
    %v2780 = vrot.slane %v2660, 4
    %v2781 = vsel %vm229, %v2780, %v2779
    %v2782 = vrot.slane %v2661, 3
    %v2783 = vsel %vm232, %v2782, %v2781
    %v2784 = vrot.slane %v2662, 2
    %v2785 = vsel %vm235, %v2784, %v2783
    %v2786 = vrot.slane %v2663, 1
    %v2787 = vsel %vm238, %v2786, %v2785
    %v2788 = vsel %vm335, %v2787, 0
    %2790 = vmatprep.subr.mxu0 0.0
    %2791 = vmatpush1.msra.mxu0 %v182
    %2792 = vmatprep.subr.mxu0 0.0
    %2793 = vmatpush1.msra.mxu0 %v183
    %2794 = vmatprep.subr.mxu0 0.0
    %2795 = vmatpush1.msra.mxu0 %v184
    %2796 = vmatprep.subr.mxu0 0.0
    %2797 = vmatpush1.msra.mxu0 %v185
    %2798 = vmatprep.subr.mxu0 0.0
    %2799 = vmatpush1.msra.mxu0 0.0
    %2800 = vmatprep.subr.mxu0 0.0
    %2801 = vmatpush1.msra.mxu0 0.0
    %2802 = vmatprep.subr.mxu0 0.0
    %2803 = vmatpush1.msra.mxu0 0.0
    %2804 = vmatprep.subr.mxu0 0.0
    %2805 = vmatpush1.msra.mxu0 0.0
    %2806 = vmatprep.subr.mxu0 0.0
    %2807 = vmatpush1.msra.mxu0 0.0
    %2808 = vmatprep.subr.mxu0 0.0
    %2809 = vmatpush1.msra.mxu0 0.0
    %2810 = vmatprep.subr.mxu0 0.0
    %2811 = vmatpush1.msra.mxu0 0.0
    %2812 = vmatprep.subr.mxu0 0.0
    %2813 = vmatpush1.msra.mxu0 0.0
    %2814 = vmatprep.subr.mxu0 0.0
    %2815 = vmatpush1.msra.mxu0 0.0
    %2816 = vmatprep.subr.mxu0 0.0
    %2817 = vmatpush1.msra.mxu0 0.0
    %2818 = vmatprep.subr.mxu0 0.0
    %2819 = vmatpush1.msra.mxu0 0.0
    %2820 = vmatprep.subr.mxu0 0.0
    %2821 = vmatpush1.msra.mxu0 0.0
    %2822 = vmatprep.subr.mxu0 0.0
    %2823 = vmatpush1.msra.mxu0 0.0
    %2824 = vmatprep.subr.mxu0 0.0
    %2825 = vmatpush1.msra.mxu0 0.0
    %2826 = vmatprep.subr.mxu0 0.0
    %2827 = vmatpush1.msra.mxu0 0.0
    %2828 = vmatprep.subr.mxu0 0.0
    %2829 = vmatpush1.msra.mxu0 0.0
    %2830 = vmatprep.subr.mxu0 0.0
    %2831 = vmatpush1.msra.mxu0 0.0
    %2832 = vmatprep.subr.mxu0 0.0
    %2833 = vmatpush1.msra.mxu0 0.0
    %2834 = vmatprep.subr.mxu0 0.0
    %2835 = vmatpush1.msra.mxu0 0.0
    %2836 = vmatprep.subr.mxu0 0.0
    %2837 = vmatpush1.msra.mxu0 0.0
    %2838 = vmatprep.subr.mxu0 0.0
    %2839 = vmatpush1.msra.mxu0 0.0
    %2840 = vmatprep.subr.mxu0 0.0
    %2841 = vmatpush1.msra.mxu0 0.0
    %2842 = vmatprep.subr.mxu0 0.0
    %2843 = vmatpush1.msra.mxu0 0.0
    %2844 = vmatprep.subr.mxu0 0.0
    %2845 = vmatpush1.msra.mxu0 0.0
    %2846 = vmatprep.subr.mxu0 0.0
    %2847 = vmatpush1.msra.mxu0 0.0
    %2848 = vmatprep.subr.mxu0 0.0
    %2849 = vmatpush1.msra.mxu0 0.0
    %2850 = vmatprep.subr.mxu0 0.0
    %2851 = vmatpush1.msra.mxu0 0.0
    %2852 = vmatprep.subr.mxu0 0.0
    %2853 = vmatpush1.msra.mxu0 0.0
    %2854 = vmatprep.mubr.f32.mxu0 0.0
    %2855 = vmatmul.mubr.f32.gmra.mrb[0].mxu0 %v2788
    %v2856 = vpop.f32.mrb[0].mxu0
    %v2857 = vadd.f32 %v2763, %v2856
    %v2858 = vpop.f32.mrb[0].mxu0
    %2859 = vdwg.mxu0
    %v2860 = vld [vmem:[#allocation7 + $0x6] sm:$0x1]
    %v2861 = vld [vmem:[#allocation7 + $0xe] sm:$0x1]
    %v2862 = vld [vmem:[#allocation7 + $0x16] sm:$0x1]
    %v2863 = vld [vmem:[#allocation7 + $0x1e] sm:$0x1]
    %v2864 = vld [vmem:[#allocation7 + $0x26] sm:$0x1]
    %v2865 = vld [vmem:[#allocation7 + $0x2e] sm:$0x1]
    %v2866 = vld [vmem:[#allocation7 + $0x36] sm:$0x1]
    %v2867 = vld [vmem:[#allocation7 + $0x3e] sm:$0x1]
    %v2876 = vrot.slane %v2861, 7
    %v2877 = vsel %vm220, %v2876, %v2860
    %v2878 = vrot.slane %v2862, 6
    %v2879 = vsel %vm223, %v2878, %v2877
    %v2880 = vrot.slane %v2863, 5
    %v2881 = vsel %vm226, %v2880, %v2879
    %v2882 = vrot.slane %v2864, 4
    %v2883 = vsel %vm229, %v2882, %v2881
    %v2884 = vrot.slane %v2865, 3
    %v2885 = vsel %vm232, %v2884, %v2883
    %v2886 = vrot.slane %v2866, 2
    %v2887 = vsel %vm235, %v2886, %v2885
    %v2888 = vrot.slane %v2867, 1
    %v2889 = vsel %vm238, %v2888, %v2887
    %v2890 = vsel %vm240, %v2889, 0
    %2892 = vmatprep.subr.mxu0 0.0
    %2893 = vmatpush1.msra.mxu0 %v188
    %2894 = vmatprep.subr.mxu0 0.0
    %2895 = vmatpush1.msra.mxu0 %v189
    %2896 = vmatprep.subr.mxu0 0.0
    %2897 = vmatpush1.msra.mxu0 0.0
    %2898 = vmatprep.subr.mxu0 0.0
    %2899 = vmatpush1.msra.mxu0 0.0
    %2900 = vmatprep.subr.mxu0 0.0
    %2901 = vmatpush1.msra.mxu0 0.0
    %2902 = vmatprep.subr.mxu0 0.0
    %2903 = vmatpush1.msra.mxu0 0.0
    %2904 = vmatprep.subr.mxu0 0.0
    %2905 = vmatpush1.msra.mxu0 0.0
    %2906 = vmatprep.subr.mxu0 0.0
    %2907 = vmatpush1.msra.mxu0 0.0
    %2908 = vmatprep.subr.mxu0 0.0
    %2909 = vmatpush1.msra.mxu0 0.0
    %2910 = vmatprep.subr.mxu0 0.0
    %2911 = vmatpush1.msra.mxu0 0.0
    %2912 = vmatprep.subr.mxu0 0.0
    %2913 = vmatpush1.msra.mxu0 0.0
    %2914 = vmatprep.subr.mxu0 0.0
    %2915 = vmatpush1.msra.mxu0 0.0
    %2916 = vmatprep.subr.mxu0 0.0
    %2917 = vmatpush1.msra.mxu0 0.0
    %2918 = vmatprep.subr.mxu0 0.0
    %2919 = vmatpush1.msra.mxu0 0.0
    %2920 = vmatprep.subr.mxu0 0.0
    %2921 = vmatpush1.msra.mxu0 0.0
    %2922 = vmatprep.subr.mxu0 0.0
    %2923 = vmatpush1.msra.mxu0 0.0
    %2924 = vmatprep.subr.mxu0 0.0
    %2925 = vmatpush1.msra.mxu0 0.0
    %2926 = vmatprep.subr.mxu0 0.0
    %2927 = vmatpush1.msra.mxu0 0.0
    %2928 = vmatprep.subr.mxu0 0.0
    %2929 = vmatpush1.msra.mxu0 0.0
    %2930 = vmatprep.subr.mxu0 0.0
    %2931 = vmatpush1.msra.mxu0 0.0
    %2932 = vmatprep.subr.mxu0 0.0
    %2933 = vmatpush1.msra.mxu0 0.0
    %2934 = vmatprep.subr.mxu0 0.0
    %2935 = vmatpush1.msra.mxu0 0.0
    %2936 = vmatprep.subr.mxu0 0.0
    %2937 = vmatpush1.msra.mxu0 0.0
    %2938 = vmatprep.subr.mxu0 0.0
    %2939 = vmatpush1.msra.mxu0 0.0
    %2940 = vmatprep.subr.mxu0 0.0
    %2941 = vmatpush1.msra.mxu0 0.0
    %2942 = vmatprep.subr.mxu0 0.0
    %2943 = vmatpush1.msra.mxu0 0.0
    %2944 = vmatprep.subr.mxu0 0.0
    %2945 = vmatpush1.msra.mxu0 0.0
    %2946 = vmatprep.subr.mxu0 0.0
    %2947 = vmatpush1.msra.mxu0 0.0
    %2948 = vmatprep.subr.mxu0 0.0
    %2949 = vmatpush1.msra.mxu0 0.0
    %2950 = vmatprep.subr.mxu0 0.0
    %2951 = vmatpush1.msra.mxu0 0.0
    %2952 = vmatprep.subr.mxu0 0.0
    %2953 = vmatpush1.msra.mxu0 0.0
    %2954 = vmatprep.subr.mxu0 0.0
    %2955 = vmatpush1.msra.mxu0 0.0
    %2956 = vmatprep.mubr.f32.mxu0 0.0
    %2957 = vmatmul.mubr.f32.gmra.mrb[0].mxu0 %v2890
    %v2958 = vpop.f32.mrb[0].mxu0
    %v2959 = vadd.f32 0.0, %v2958
    %v2960 = vpop.f32.mrb[0].mxu0
    %2961 = vdwg.mxu0
    %v2962 = vadd.f32 %v2857, %v2959
    %2964 = vrot.lane.b32.xlu0 %v2655, 32
    %v2965 = vpop.permute.xlu0 %2964
    %v2966 = vsel %vm335, %v2965, 0
    %2968 = vmatprep.subr.mxu0 0.0
    %2969 = vmatpush1.msra.mxu0 %v190
    %2970 = vmatprep.subr.mxu0 0.0
    %2971 = vmatpush1.msra.mxu0 %v191
    %2972 = vmatprep.subr.mxu0 0.0
    %2973 = vmatpush1.msra.mxu0 %v192
    %2974 = vmatprep.subr.mxu0 0.0
    %2975 = vmatpush1.msra.mxu0 %v193
    %2976 = vmatprep.subr.mxu0 0.0
    %2977 = vmatpush1.msra.mxu0 0.0
    %2978 = vmatprep.subr.mxu0 0.0
    %2979 = vmatpush1.msra.mxu0 0.0
    %2980 = vmatprep.subr.mxu0 0.0
    %2981 = vmatpush1.msra.mxu0 0.0
    %2982 = vmatprep.subr.mxu0 0.0
    %2983 = vmatpush1.msra.mxu0 0.0
    %2984 = vmatprep.subr.mxu0 0.0
    %2985 = vmatpush1.msra.mxu0 0.0
    %2986 = vmatprep.subr.mxu0 0.0
    %2987 = vmatpush1.msra.mxu0 0.0
    %2988 = vmatprep.subr.mxu0 0.0
    %2989 = vmatpush1.msra.mxu0 0.0
    %2990 = vmatprep.subr.mxu0 0.0
    %2991 = vmatpush1.msra.mxu0 0.0
    %2992 = vmatprep.subr.mxu0 0.0
    %2993 = vmatpush1.msra.mxu0 0.0
    %2994 = vmatprep.subr.mxu0 0.0
    %2995 = vmatpush1.msra.mxu0 0.0
    %2996 = vmatprep.subr.mxu0 0.0
    %2997 = vmatpush1.msra.mxu0 0.0
    %2998 = vmatprep.subr.mxu0 0.0
    %2999 = vmatpush1.msra.mxu0 0.0
    %3000 = vmatprep.subr.mxu0 0.0
    %3001 = vmatpush1.msra.mxu0 0.0
    %3002 = vmatprep.subr.mxu0 0.0
    %3003 = vmatpush1.msra.mxu0 0.0
    %3004 = vmatprep.subr.mxu0 0.0
    %3005 = vmatpush1.msra.mxu0 0.0
    %3006 = vmatprep.subr.mxu0 0.0
    %3007 = vmatpush1.msra.mxu0 0.0
    %3008 = vmatprep.subr.mxu0 0.0
    %3009 = vmatpush1.msra.mxu0 0.0
    %3010 = vmatprep.subr.mxu0 0.0
    %3011 = vmatpush1.msra.mxu0 0.0
    %3012 = vmatprep.subr.mxu0 0.0
    %3013 = vmatpush1.msra.mxu0 0.0
    %3014 = vmatprep.subr.mxu0 0.0
    %3015 = vmatpush1.msra.mxu0 0.0
    %3016 = vmatprep.subr.mxu0 0.0
    %3017 = vmatpush1.msra.mxu0 0.0
    %3018 = vmatprep.subr.mxu0 0.0
    %3019 = vmatpush1.msra.mxu0 0.0
    %3020 = vmatprep.subr.mxu0 0.0
    %3021 = vmatpush1.msra.mxu0 0.0
    %3022 = vmatprep.subr.mxu0 0.0
    %3023 = vmatpush1.msra.mxu0 0.0
    %3024 = vmatprep.subr.mxu0 0.0
    %3025 = vmatpush1.msra.mxu0 0.0
    %3026 = vmatprep.subr.mxu0 0.0
    %3027 = vmatpush1.msra.mxu0 0.0
    %3028 = vmatprep.subr.mxu0 0.0
    %3029 = vmatpush1.msra.mxu0 0.0
    %3030 = vmatprep.subr.mxu0 0.0
    %3031 = vmatpush1.msra.mxu0 0.0
    %3032 = vmatprep.mubr.f32.mxu0 0.0
    %3033 = vmatmul.mubr.f32.gmra.mrb[0].mxu0 %v2966
    %v3034 = vpop.f32.mrb[0].mxu0
    %v3035 = vadd.f32 0.0, %v3034
    %v3036 = vpop.f32.mrb[0].mxu0
    %3037 = vdwg.mxu0
    %v3038 = vadd.f32 %v2962, %v3035
    %v3039 = vadd.f32 %v3038, %v589
    %v3040 = vsub.f32 0.0, %v3039
    %v3041 = vmul.f32 %v3040, 1.442695
    %v3042 = vpow.pop %v3041
    %v3043 = vadd.f32 %v3042, 1.0
    %v3044 = vrcp.pop %v3043
    %v3045 = vmul.f32 1.0, %v3044
    %v3046 = vtanh.pop %v3039
    %v3047 = vmul.f32 %v3045, %v2649
    %3049 = vrot.lane.b32.xlu0 %v3046, 64
    %v3050 = vpop.permute.xlu0 %3049
    %v3052 = vmul.f32 %v3045, %v3050
    %3054 = vrot.lane.b32.xlu0 %v3052, 32
    %v3055 = vpop.permute.xlu0 %3054
    %v3057 = vadd.f32 %v3047, %v3055
    %v3058 = vtanh.pop %v3057
    %3060 = vrot.lane.b32.xlu0 %v3058, 64
    %v3061 = vpop.permute.xlu0 %3060
    %v3063 = vmul.f32 %v3045, %v3061
    %v3064 = vld [vmem:[#allocation2 + $0x7] sm:$0x1]
    %v3065 = vld [vmem:[#allocation2 + $0xf] sm:$0x1]
    %v3066 = vld [vmem:[#allocation2 + $0x17] sm:$0x1]
    %v3067 = vld [vmem:[#allocation2 + $0x1f] sm:$0x1]
    %v3068 = vld [vmem:[#allocation2 + $0x27] sm:$0x1]
    %v3069 = vld [vmem:[#allocation2 + $0x2f] sm:$0x1]
    %v3070 = vld [vmem:[#allocation2 + $0x37] sm:$0x1]
    %v3071 = vld [vmem:[#allocation2 + $0x3f] sm:$0x1]
    %v3072 = vld [vmem:[#allocation5 + $0x7] sm:$0x1]
    %v3073 = vld [vmem:[#allocation5 + $0xf] sm:$0x1]
    %v3074 = vld [vmem:[#allocation5 + $0x17] sm:$0x1]
    %v3075 = vld [vmem:[#allocation5 + $0x1f] sm:$0x1]
    %v3076 = vld [vmem:[#allocation5 + $0x27] sm:$0x1]
    %v3077 = vld [vmem:[#allocation5 + $0x2f] sm:$0x1]
    %v3078 = vld [vmem:[#allocation5 + $0x37] sm:$0x1]
    %v3079 = vld [vmem:[#allocation5 + $0x3f] sm:$0x1]
    %v3088 = vrot.slane %v3073, 7
    %v3089 = vsel %vm220, %v3088, %v3072
    %v3090 = vrot.slane %v3074, 6
    %v3091 = vsel %vm223, %v3090, %v3089
    %v3092 = vrot.slane %v3075, 5
    %v3093 = vsel %vm226, %v3092, %v3091
    %v3094 = vrot.slane %v3076, 4
    %v3095 = vsel %vm229, %v3094, %v3093
    %v3096 = vrot.slane %v3077, 3
    %v3097 = vsel %vm232, %v3096, %v3095
    %v3098 = vrot.slane %v3078, 2
    %v3099 = vsel %vm235, %v3098, %v3097
    %v3100 = vrot.slane %v3079, 1
    %v3101 = vsel %vm238, %v3100, %v3099
    %v3102 = vsel %vm240, %v3101, 0
    %3104 = vmatprep.subr.mxu0 0.0
    %3105 = vmatpush1.msra.mxu0 %v186
    %3106 = vmatprep.subr.mxu0 0.0
    %3107 = vmatpush1.msra.mxu0 %v187
    %3108 = vmatprep.subr.mxu0 0.0
    %3109 = vmatpush1.msra.mxu0 0.0
    %3110 = vmatprep.subr.mxu0 0.0
    %3111 = vmatpush1.msra.mxu0 0.0
    %3112 = vmatprep.subr.mxu0 0.0
    %3113 = vmatpush1.msra.mxu0 0.0
    %3114 = vmatprep.subr.mxu0 0.0
    %3115 = vmatpush1.msra.mxu0 0.0
    %3116 = vmatprep.subr.mxu0 0.0
    %3117 = vmatpush1.msra.mxu0 0.0
    %3118 = vmatprep.subr.mxu0 0.0
    %3119 = vmatpush1.msra.mxu0 0.0
    %3120 = vmatprep.subr.mxu0 0.0
    %3121 = vmatpush1.msra.mxu0 0.0
    %3122 = vmatprep.subr.mxu0 0.0
    %3123 = vmatpush1.msra.mxu0 0.0
    %3124 = vmatprep.subr.mxu0 0.0
    %3125 = vmatpush1.msra.mxu0 0.0
    %3126 = vmatprep.subr.mxu0 0.0
    %3127 = vmatpush1.msra.mxu0 0.0
    %3128 = vmatprep.subr.mxu0 0.0
    %3129 = vmatpush1.msra.mxu0 0.0
    %3130 = vmatprep.subr.mxu0 0.0
    %3131 = vmatpush1.msra.mxu0 0.0
    %3132 = vmatprep.subr.mxu0 0.0
    %3133 = vmatpush1.msra.mxu0 0.0
    %3134 = vmatprep.subr.mxu0 0.0
    %3135 = vmatpush1.msra.mxu0 0.0
    %3136 = vmatprep.subr.mxu0 0.0
    %3137 = vmatpush1.msra.mxu0 0.0
    %3138 = vmatprep.subr.mxu0 0.0
    %3139 = vmatpush1.msra.mxu0 0.0
    %3140 = vmatprep.subr.mxu0 0.0
    %3141 = vmatpush1.msra.mxu0 0.0
    %3142 = vmatprep.subr.mxu0 0.0
    %3143 = vmatpush1.msra.mxu0 0.0
    %3144 = vmatprep.subr.mxu0 0.0
    %3145 = vmatpush1.msra.mxu0 0.0
    %3146 = vmatprep.subr.mxu0 0.0
    %3147 = vmatpush1.msra.mxu0 0.0
    %3148 = vmatprep.subr.mxu0 0.0
    %3149 = vmatpush1.msra.mxu0 0.0
    %3150 = vmatprep.subr.mxu0 0.0
    %3151 = vmatpush1.msra.mxu0 0.0
    %3152 = vmatprep.subr.mxu0 0.0
    %3153 = vmatpush1.msra.mxu0 0.0
    %3154 = vmatprep.subr.mxu0 0.0
    %3155 = vmatpush1.msra.mxu0 0.0
    %3156 = vmatprep.subr.mxu0 0.0
    %3157 = vmatpush1.msra.mxu0 0.0
    %3158 = vmatprep.subr.mxu0 0.0
    %3159 = vmatpush1.msra.mxu0 0.0
    %3160 = vmatprep.subr.mxu0 0.0
    %3161 = vmatpush1.msra.mxu0 0.0
    %3162 = vmatprep.subr.mxu0 0.0
    %3163 = vmatpush1.msra.mxu0 0.0
    %3164 = vmatprep.subr.mxu0 0.0
    %3165 = vmatpush1.msra.mxu0 0.0
    %3166 = vmatprep.subr.mxu0 0.0
    %3167 = vmatpush1.msra.mxu0 0.0
    %3168 = vmatprep.mubr.f32.mxu0 0.0
    %3169 = vmatmul.mubr.f32.gmra.mrb[0].mxu0 %v3102
    %v3170 = vpop.f32.mrb[0].mxu0
    %v3171 = vadd.f32 0.0, %v3170
    %v3172 = vpop.f32.mrb[0].mxu0
    %3173 = vdwg.mxu0
    %v3182 = vrot.slane %v3065, 7
    %v3183 = vsel %vm220, %v3182, %v3064
    %v3184 = vrot.slane %v3066, 6
    %v3185 = vsel %vm223, %v3184, %v3183
    %v3186 = vrot.slane %v3067, 5
    %v3187 = vsel %vm226, %v3186, %v3185
    %v3188 = vrot.slane %v3068, 4
    %v3189 = vsel %vm229, %v3188, %v3187
    %v3190 = vrot.slane %v3069, 3
    %v3191 = vsel %vm232, %v3190, %v3189
    %v3192 = vrot.slane %v3070, 2
    %v3193 = vsel %vm235, %v3192, %v3191
    %v3194 = vrot.slane %v3071, 1
    %v3195 = vsel %vm238, %v3194, %v3193
    %v3196 = vsel %vm335, %v3195, 0
    %3198 = vmatprep.subr.mxu0 0.0
    %3199 = vmatpush1.msra.mxu0 %v182
    %3200 = vmatprep.subr.mxu0 0.0
    %3201 = vmatpush1.msra.mxu0 %v183
    %3202 = vmatprep.subr.mxu0 0.0
    %3203 = vmatpush1.msra.mxu0 %v184
    %3204 = vmatprep.subr.mxu0 0.0
    %3205 = vmatpush1.msra.mxu0 %v185
    %3206 = vmatprep.subr.mxu0 0.0
    %3207 = vmatpush1.msra.mxu0 0.0
    %3208 = vmatprep.subr.mxu0 0.0
    %3209 = vmatpush1.msra.mxu0 0.0
    %3210 = vmatprep.subr.mxu0 0.0
    %3211 = vmatpush1.msra.mxu0 0.0
    %3212 = vmatprep.subr.mxu0 0.0
    %3213 = vmatpush1.msra.mxu0 0.0
    %3214 = vmatprep.subr.mxu0 0.0
    %3215 = vmatpush1.msra.mxu0 0.0
    %3216 = vmatprep.subr.mxu0 0.0
    %3217 = vmatpush1.msra.mxu0 0.0
    %3218 = vmatprep.subr.mxu0 0.0
    %3219 = vmatpush1.msra.mxu0 0.0
    %3220 = vmatprep.subr.mxu0 0.0
    %3221 = vmatpush1.msra.mxu0 0.0
    %3222 = vmatprep.subr.mxu0 0.0
    %3223 = vmatpush1.msra.mxu0 0.0
    %3224 = vmatprep.subr.mxu0 0.0
    %3225 = vmatpush1.msra.mxu0 0.0
    %3226 = vmatprep.subr.mxu0 0.0
    %3227 = vmatpush1.msra.mxu0 0.0
    %3228 = vmatprep.subr.mxu0 0.0
    %3229 = vmatpush1.msra.mxu0 0.0
    %3230 = vmatprep.subr.mxu0 0.0
    %3231 = vmatpush1.msra.mxu0 0.0
    %3232 = vmatprep.subr.mxu0 0.0
    %3233 = vmatpush1.msra.mxu0 0.0
    %3234 = vmatprep.subr.mxu0 0.0
    %3235 = vmatpush1.msra.mxu0 0.0
    %3236 = vmatprep.subr.mxu0 0.0
    %3237 = vmatpush1.msra.mxu0 0.0
    %3238 = vmatprep.subr.mxu0 0.0
    %3239 = vmatpush1.msra.mxu0 0.0
    %3240 = vmatprep.subr.mxu0 0.0
    %3241 = vmatpush1.msra.mxu0 0.0
    %3242 = vmatprep.subr.mxu0 0.0
    %3243 = vmatpush1.msra.mxu0 0.0
    %3244 = vmatprep.subr.mxu0 0.0
    %3245 = vmatpush1.msra.mxu0 0.0
    %3246 = vmatprep.subr.mxu0 0.0
    %3247 = vmatpush1.msra.mxu0 0.0
    %3248 = vmatprep.subr.mxu0 0.0
    %3249 = vmatpush1.msra.mxu0 0.0
    %3250 = vmatprep.subr.mxu0 0.0
    %3251 = vmatpush1.msra.mxu0 0.0
    %3252 = vmatprep.subr.mxu0 0.0
    %3253 = vmatpush1.msra.mxu0 0.0
    %3254 = vmatprep.subr.mxu0 0.0
    %3255 = vmatpush1.msra.mxu0 0.0
    %3256 = vmatprep.subr.mxu0 0.0
    %3257 = vmatpush1.msra.mxu0 0.0
    %3258 = vmatprep.subr.mxu0 0.0
    %3259 = vmatpush1.msra.mxu0 0.0
    %3260 = vmatprep.subr.mxu0 0.0
    %3261 = vmatpush1.msra.mxu0 0.0
    %3262 = vmatprep.mubr.f32.mxu0 0.0
    %3263 = vmatmul.mubr.f32.gmra.mrb[0].mxu0 %v3196
    %v3264 = vpop.f32.mrb[0].mxu0
    %v3265 = vadd.f32 %v3171, %v3264
    %v3266 = vpop.f32.mrb[0].mxu0
    %3267 = vdwg.mxu0
    %v3268 = vld [vmem:[#allocation7 + $0x7] sm:$0x1]
    %v3269 = vld [vmem:[#allocation7 + $0xf] sm:$0x1]
    %v3270 = vld [vmem:[#allocation7 + $0x17] sm:$0x1]
    %v3271 = vld [vmem:[#allocation7 + $0x1f] sm:$0x1]
    %v3272 = vld [vmem:[#allocation7 + $0x27] sm:$0x1]
    %v3273 = vld [vmem:[#allocation7 + $0x2f] sm:$0x1]
    %v3274 = vld [vmem:[#allocation7 + $0x37] sm:$0x1]
    %v3275 = vld [vmem:[#allocation7 + $0x3f] sm:$0x1]
    %v3284 = vrot.slane %v3269, 7
    %v3285 = vsel %vm220, %v3284, %v3268
    %v3286 = vrot.slane %v3270, 6
    %v3287 = vsel %vm223, %v3286, %v3285
    %v3288 = vrot.slane %v3271, 5
    %v3289 = vsel %vm226, %v3288, %v3287
    %v3290 = vrot.slane %v3272, 4
    %v3291 = vsel %vm229, %v3290, %v3289
    %v3292 = vrot.slane %v3273, 3
    %v3293 = vsel %vm232, %v3292, %v3291
    %v3294 = vrot.slane %v3274, 2
    %v3295 = vsel %vm235, %v3294, %v3293
    %v3296 = vrot.slane %v3275, 1
    %v3297 = vsel %vm238, %v3296, %v3295
    %v3298 = vsel %vm240, %v3297, 0
    %3300 = vmatprep.subr.mxu0 0.0
    %3301 = vmatpush1.msra.mxu0 %v188
    %3302 = vmatprep.subr.mxu0 0.0
    %3303 = vmatpush1.msra.mxu0 %v189
    %3304 = vmatprep.subr.mxu0 0.0
    %3305 = vmatpush1.msra.mxu0 0.0
    %3306 = vmatprep.subr.mxu0 0.0
    %3307 = vmatpush1.msra.mxu0 0.0
    %3308 = vmatprep.subr.mxu0 0.0
    %3309 = vmatpush1.msra.mxu0 0.0
    %3310 = vmatprep.subr.mxu0 0.0
    %3311 = vmatpush1.msra.mxu0 0.0
    %3312 = vmatprep.subr.mxu0 0.0
    %3313 = vmatpush1.msra.mxu0 0.0
    %3314 = vmatprep.subr.mxu0 0.0
    %3315 = vmatpush1.msra.mxu0 0.0
    %3316 = vmatprep.subr.mxu0 0.0
    %3317 = vmatpush1.msra.mxu0 0.0
    %3318 = vmatprep.subr.mxu0 0.0
    %3319 = vmatpush1.msra.mxu0 0.0
    %3320 = vmatprep.subr.mxu0 0.0
    %3321 = vmatpush1.msra.mxu0 0.0
    %3322 = vmatprep.subr.mxu0 0.0
    %3323 = vmatpush1.msra.mxu0 0.0
    %3324 = vmatprep.subr.mxu0 0.0
    %3325 = vmatpush1.msra.mxu0 0.0
    %3326 = vmatprep.subr.mxu0 0.0
    %3327 = vmatpush1.msra.mxu0 0.0
    %3328 = vmatprep.subr.mxu0 0.0
    %3329 = vmatpush1.msra.mxu0 0.0
    %3330 = vmatprep.subr.mxu0 0.0
    %3331 = vmatpush1.msra.mxu0 0.0
    %3332 = vmatprep.subr.mxu0 0.0
    %3333 = vmatpush1.msra.mxu0 0.0
    %3334 = vmatprep.subr.mxu0 0.0
    %3335 = vmatpush1.msra.mxu0 0.0
    %3336 = vmatprep.subr.mxu0 0.0
    %3337 = vmatpush1.msra.mxu0 0.0
    %3338 = vmatprep.subr.mxu0 0.0
    %3339 = vmatpush1.msra.mxu0 0.0
    %3340 = vmatprep.subr.mxu0 0.0
    %3341 = vmatpush1.msra.mxu0 0.0
    %3342 = vmatprep.subr.mxu0 0.0
    %3343 = vmatpush1.msra.mxu0 0.0
    %3344 = vmatprep.subr.mxu0 0.0
    %3345 = vmatpush1.msra.mxu0 0.0
    %3346 = vmatprep.subr.mxu0 0.0
    %3347 = vmatpush1.msra.mxu0 0.0
    %3348 = vmatprep.subr.mxu0 0.0
    %3349 = vmatpush1.msra.mxu0 0.0
    %3350 = vmatprep.subr.mxu0 0.0
    %3351 = vmatpush1.msra.mxu0 0.0
    %3352 = vmatprep.subr.mxu0 0.0
    %3353 = vmatpush1.msra.mxu0 0.0
    %3354 = vmatprep.subr.mxu0 0.0
    %3355 = vmatpush1.msra.mxu0 0.0
    %3356 = vmatprep.subr.mxu0 0.0
    %3357 = vmatpush1.msra.mxu0 0.0
    %3358 = vmatprep.subr.mxu0 0.0
    %3359 = vmatpush1.msra.mxu0 0.0
    %3360 = vmatprep.subr.mxu0 0.0
    %3361 = vmatpush1.msra.mxu0 0.0
    %3362 = vmatprep.subr.mxu0 0.0
    %3363 = vmatpush1.msra.mxu0 0.0
    %3364 = vmatprep.mubr.f32.mxu0 0.0
    %3365 = vmatmul.mubr.f32.gmra.mrb[0].mxu0 %v3298
    %v3366 = vpop.f32.mrb[0].mxu0
    %v3367 = vadd.f32 0.0, %v3366
    %v3368 = vpop.f32.mrb[0].mxu0
    %3369 = vdwg.mxu0
    %v3370 = vadd.f32 %v3265, %v3367
    %3372 = vrot.lane.b32.xlu0 %v3063, 32
    %v3373 = vpop.permute.xlu0 %3372
    %v3374 = vsel %vm335, %v3373, 0
    %3376 = vmatprep.subr.mxu0 0.0
    %3377 = vmatpush1.msra.mxu0 %v190
    %3378 = vmatprep.subr.mxu0 0.0
    %3379 = vmatpush1.msra.mxu0 %v191
    %3380 = vmatprep.subr.mxu0 0.0
    %3381 = vmatpush1.msra.mxu0 %v192
    %3382 = vmatprep.subr.mxu0 0.0
    %3383 = vmatpush1.msra.mxu0 %v193
    %3384 = vmatprep.subr.mxu0 0.0
    %3385 = vmatpush1.msra.mxu0 0.0
    %3386 = vmatprep.subr.mxu0 0.0
    %3387 = vmatpush1.msra.mxu0 0.0
    %3388 = vmatprep.subr.mxu0 0.0
    %3389 = vmatpush1.msra.mxu0 0.0
    %3390 = vmatprep.subr.mxu0 0.0
    %3391 = vmatpush1.msra.mxu0 0.0
    %3392 = vmatprep.subr.mxu0 0.0
    %3393 = vmatpush1.msra.mxu0 0.0
    %3394 = vmatprep.subr.mxu0 0.0
    %3395 = vmatpush1.msra.mxu0 0.0
    %3396 = vmatprep.subr.mxu0 0.0
    %3397 = vmatpush1.msra.mxu0 0.0
    %3398 = vmatprep.subr.mxu0 0.0
    %3399 = vmatpush1.msra.mxu0 0.0
    %3400 = vmatprep.subr.mxu0 0.0
    %3401 = vmatpush1.msra.mxu0 0.0
    %3402 = vmatprep.subr.mxu0 0.0
    %3403 = vmatpush1.msra.mxu0 0.0
    %3404 = vmatprep.subr.mxu0 0.0
    %3405 = vmatpush1.msra.mxu0 0.0
    %3406 = vmatprep.subr.mxu0 0.0
    %3407 = vmatpush1.msra.mxu0 0.0
    %3408 = vmatprep.subr.mxu0 0.0
    %3409 = vmatpush1.msra.mxu0 0.0
    %3410 = vmatprep.subr.mxu0 0.0
    %3411 = vmatpush1.msra.mxu0 0.0
    %3412 = vmatprep.subr.mxu0 0.0
    %3413 = vmatpush1.msra.mxu0 0.0
    %3414 = vmatprep.subr.mxu0 0.0
    %3415 = vmatpush1.msra.mxu0 0.0
    %3416 = vmatprep.subr.mxu0 0.0
    %3417 = vmatpush1.msra.mxu0 0.0
    %3418 = vmatprep.subr.mxu0 0.0
    %3419 = vmatpush1.msra.mxu0 0.0
    %3420 = vmatprep.subr.mxu0 0.0
    %3421 = vmatpush1.msra.mxu0 0.0
    %3422 = vmatprep.subr.mxu0 0.0
    %3423 = vmatpush1.msra.mxu0 0.0
    %3424 = vmatprep.subr.mxu0 0.0
    %3425 = vmatpush1.msra.mxu0 0.0
    %3426 = vmatprep.subr.mxu0 0.0
    %3427 = vmatpush1.msra.mxu0 0.0
    %3428 = vmatprep.subr.mxu0 0.0
    %3429 = vmatpush1.msra.mxu0 0.0
    %3430 = vmatprep.subr.mxu0 0.0
    %3431 = vmatpush1.msra.mxu0 0.0
    %3432 = vmatprep.subr.mxu0 0.0
    %3433 = vmatpush1.msra.mxu0 0.0
    %3434 = vmatprep.subr.mxu0 0.0
    %3435 = vmatpush1.msra.mxu0 0.0
    %3436 = vmatprep.subr.mxu0 0.0
    %3437 = vmatpush1.msra.mxu0 0.0
    %3438 = vmatprep.subr.mxu0 0.0
    %3439 = vmatpush1.msra.mxu0 0.0
    %3440 = vmatprep.mubr.f32.mxu0 0.0
    %3441 = vmatmul.mubr.f32.gmra.mrb[0].mxu0 %v3374
    %v3442 = vpop.f32.mrb[0].mxu0
    %v3443 = vadd.f32 0.0, %v3442
    %v3444 = vpop.f32.mrb[0].mxu0
    %3445 = vdwg.mxu0
    %v3446 = vadd.f32 %v3370, %v3443
    %v3447 = vadd.f32 %v3446, %v589
    %v3448 = vsub.f32 0.0, %v3447
    %v3449 = vmul.f32 %v3448, 1.442695
    %v3450 = vpow.pop %v3449
    %v3451 = vadd.f32 %v3450, 1.0
    %v3452 = vrcp.pop %v3451
    %v3453 = vmul.f32 1.0, %v3452
    %v3454 = vtanh.pop %v3447
    %v3455 = vmul.f32 %v3453, %v3057
    %3457 = vrot.lane.b32.xlu0 %v3454, 64
    %v3458 = vpop.permute.xlu0 %3457
    %v3460 = vmul.f32 %v3453, %v3458
    %3462 = vrot.lane.b32.xlu0 %v3460, 32
    %v3463 = vpop.permute.xlu0 %3462
    %v3465 = vadd.f32 %v3455, %v3463
    %v3466 = vtanh.pop %v3465
    %3468 = vrot.lane.b32.xlu0 %v3466, 64
    %v3469 = vpop.permute.xlu0 %3468
    %v3471 = vmul.f32 %v3453, %v3469
    %v3472 = vld [vmem:[%s9] sm:$0xff]
    %v3473 = vld [vmem:[%s9 + $0x8] sm:$0xff]
    %v3474 = vld [vmem:[%s9 + $0x10] sm:$0xff]
    %v3475 = vld [vmem:[%s9 + $0x18] sm:$0xff]
    %v3476 = vld [vmem:[#allocation8] sm:$0xff]
    %v3477 = vld [vmem:[#allocation16] sm:$0xff]
    %v3478 = vld [vmem:[#allocation16 + $0x8] sm:$0xff]
    %v3479 = vld [vmem:[#allocation16 + $0x10] sm:$0xff]
    %v3480 = vld [vmem:[#allocation16 + $0x18] sm:$0xff]
    %v3482 = vsel %vm335, %v3476, 0
    %3484 = vmatprep.subr.mxu0 0.0
    %3485 = vmatpush1.msra.mxu0 %v3477
    %3486 = vmatprep.subr.mxu0 0.0
    %3487 = vmatpush1.msra.mxu0 %v3478
    %3488 = vmatprep.subr.mxu0 0.0
    %3489 = vmatpush1.msra.mxu0 %v3479
    %3490 = vmatprep.subr.mxu0 0.0
    %3491 = vmatpush1.msra.mxu0 %v3480
    %3492 = vmatprep.subr.mxu0 0.0
    %3493 = vmatpush1.msra.mxu0 0.0
    %3494 = vmatprep.subr.mxu0 0.0
    %3495 = vmatpush1.msra.mxu0 0.0
    %3496 = vmatprep.subr.mxu0 0.0
    %3497 = vmatpush1.msra.mxu0 0.0
    %3498 = vmatprep.subr.mxu0 0.0
    %3499 = vmatpush1.msra.mxu0 0.0
    %3500 = vmatprep.subr.mxu0 0.0
    %3501 = vmatpush1.msra.mxu0 0.0
    %3502 = vmatprep.subr.mxu0 0.0
    %3503 = vmatpush1.msra.mxu0 0.0
    %3504 = vmatprep.subr.mxu0 0.0
    %3505 = vmatpush1.msra.mxu0 0.0
    %3506 = vmatprep.subr.mxu0 0.0
    %3507 = vmatpush1.msra.mxu0 0.0
    %3508 = vmatprep.subr.mxu0 0.0
    %3509 = vmatpush1.msra.mxu0 0.0
    %3510 = vmatprep.subr.mxu0 0.0
    %3511 = vmatpush1.msra.mxu0 0.0
    %3512 = vmatprep.subr.mxu0 0.0
    %3513 = vmatpush1.msra.mxu0 0.0
    %3514 = vmatprep.subr.mxu0 0.0
    %3515 = vmatpush1.msra.mxu0 0.0
    %3516 = vmatprep.subr.mxu0 0.0
    %3517 = vmatpush1.msra.mxu0 0.0
    %3518 = vmatprep.subr.mxu0 0.0
    %3519 = vmatpush1.msra.mxu0 0.0
    %3520 = vmatprep.subr.mxu0 0.0
    %3521 = vmatpush1.msra.mxu0 0.0
    %3522 = vmatprep.subr.mxu0 0.0
    %3523 = vmatpush1.msra.mxu0 0.0
    %3524 = vmatprep.subr.mxu0 0.0
    %3525 = vmatpush1.msra.mxu0 0.0
    %3526 = vmatprep.subr.mxu0 0.0
    %3527 = vmatpush1.msra.mxu0 0.0
    %3528 = vmatprep.subr.mxu0 0.0
    %3529 = vmatpush1.msra.mxu0 0.0
    %3530 = vmatprep.subr.mxu0 0.0
    %3531 = vmatpush1.msra.mxu0 0.0
    %3532 = vmatprep.subr.mxu0 0.0
    %3533 = vmatpush1.msra.mxu0 0.0
    %3534 = vmatprep.subr.mxu0 0.0
    %3535 = vmatpush1.msra.mxu0 0.0
    %3536 = vmatprep.subr.mxu0 0.0
    %3537 = vmatpush1.msra.mxu0 0.0
    %3538 = vmatprep.subr.mxu0 0.0
    %3539 = vmatpush1.msra.mxu0 0.0
    %3540 = vmatprep.subr.mxu0 0.0
    %3541 = vmatpush1.msra.mxu0 0.0
    %3542 = vmatprep.subr.mxu0 0.0
    %3543 = vmatpush1.msra.mxu0 0.0
    %3544 = vmatprep.subr.mxu0 0.0
    %3545 = vmatpush1.msra.mxu0 0.0
    %3546 = vmatprep.subr.mxu0 0.0
    %3547 = vmatpush1.msra.mxu0 0.0
    %3548 = vmatprep.mubr.f32.mxu0 0.0
    %3549 = vmatmul.mubr.f32.gmra.mrb[0].mxu0 %v3482
    %v3550 = vpop.f32.mrb[0].mxu0
    %v3551 = vadd.f32 0.0, %v3550
    %v3552 = vpop.f32.mrb[0].mxu0
    %3553 = vdwg.mxu0
    %3555 = vrot.lane.b32.xlu0 %v3471, 32
    %v3556 = vpop.permute.xlu0 %3555
    %v3557 = vsel %vm335, %v3556, 0
    %3559 = vmatprep.subr.mxu0 0.0
    %3560 = vmatpush1.msra.mxu0 %v3472
    %3561 = vmatprep.subr.mxu0 0.0
    %3562 = vmatpush1.msra.mxu0 %v3473
    %3563 = vmatprep.subr.mxu0 0.0
    %3564 = vmatpush1.msra.mxu0 %v3474
    %3565 = vmatprep.subr.mxu0 0.0
    %3566 = vmatpush1.msra.mxu0 %v3475
    %3567 = vmatprep.subr.mxu0 0.0
    %3568 = vmatpush1.msra.mxu0 0.0
    %3569 = vmatprep.subr.mxu0 0.0
    %3570 = vmatpush1.msra.mxu0 0.0
    %3571 = vmatprep.subr.mxu0 0.0
    %3572 = vmatpush1.msra.mxu0 0.0
    %3573 = vmatprep.subr.mxu0 0.0
    %3574 = vmatpush1.msra.mxu0 0.0
    %3575 = vmatprep.subr.mxu0 0.0
    %3576 = vmatpush1.msra.mxu0 0.0
    %3577 = vmatprep.subr.mxu0 0.0
    %3578 = vmatpush1.msra.mxu0 0.0
    %3579 = vmatprep.subr.mxu0 0.0
    %3580 = vmatpush1.msra.mxu0 0.0
    %3581 = vmatprep.subr.mxu0 0.0
    %3582 = vmatpush1.msra.mxu0 0.0
    %3583 = vmatprep.subr.mxu0 0.0
    %3584 = vmatpush1.msra.mxu0 0.0
    %3585 = vmatprep.subr.mxu0 0.0
    %3586 = vmatpush1.msra.mxu0 0.0
    %3587 = vmatprep.subr.mxu0 0.0
    %3588 = vmatpush1.msra.mxu0 0.0
    %3589 = vmatprep.subr.mxu0 0.0
    %3590 = vmatpush1.msra.mxu0 0.0
    %3591 = vmatprep.subr.mxu0 0.0
    %3592 = vmatpush1.msra.mxu0 0.0
    %3593 = vmatprep.subr.mxu0 0.0
    %3594 = vmatpush1.msra.mxu0 0.0
    %3595 = vmatprep.subr.mxu0 0.0
    %3596 = vmatpush1.msra.mxu0 0.0
    %3597 = vmatprep.subr.mxu0 0.0
    %3598 = vmatpush1.msra.mxu0 0.0
    %3599 = vmatprep.subr.mxu0 0.0
    %3600 = vmatpush1.msra.mxu0 0.0
    %3601 = vmatprep.subr.mxu0 0.0
    %3602 = vmatpush1.msra.mxu0 0.0
    %3603 = vmatprep.subr.mxu0 0.0
    %3604 = vmatpush1.msra.mxu0 0.0
    %3605 = vmatprep.subr.mxu0 0.0
    %3606 = vmatpush1.msra.mxu0 0.0
    %3607 = vmatprep.subr.mxu0 0.0
    %3608 = vmatpush1.msra.mxu0 0.0
    %3609 = vmatprep.subr.mxu0 0.0
    %3610 = vmatpush1.msra.mxu0 0.0
    %3611 = vmatprep.subr.mxu0 0.0
    %3612 = vmatpush1.msra.mxu0 0.0
    %3613 = vmatprep.subr.mxu0 0.0
    %3614 = vmatpush1.msra.mxu0 0.0
    %3615 = vmatprep.subr.mxu0 0.0
    %3616 = vmatpush1.msra.mxu0 0.0
    %3617 = vmatprep.subr.mxu0 0.0
    %3618 = vmatpush1.msra.mxu0 0.0
    %3619 = vmatprep.subr.mxu0 0.0
    %3620 = vmatpush1.msra.mxu0 0.0
    %3621 = vmatprep.subr.mxu0 0.0
    %3622 = vmatpush1.msra.mxu0 0.0
    %3623 = vmatprep.mubr.f32.mxu0 0.0
    %3624 = vmatmul.mubr.f32.gmra.mrb[0].mxu0 %v3557
    %v3625 = vpop.f32.mrb[0].mxu0
    %v3626 = vadd.f32 %v3551, %v3625
    %v3627 = vpop.f32.mrb[0].mxu0
    %3628 = vdwg.mxu0
    %v3629 = vld [vmem:[%s11] sm:$0x1]
    %v3631 = vlaneseq
    %v3632 = vshrl.u32 %v3631, 7
    %v3633 = vsub.s32 0, %v3632
    %v3634 = vrot.slane %v3629, %v3633
    %v3636 = vadd.f32 %v3626, %v3634
    %v3637 = vmax.f32 %v3636, 0.0
    %v3638 = vld [vmem:[#allocation17] sm:$0xff]
    %v3639 = vld [vmem:[#allocation17 + $0x8] sm:$0xff]
    %v3640 = vld [vmem:[#allocation17 + $0x10] sm:$0xff]
    %v3641 = vld [vmem:[#allocation17 + $0x18] sm:$0xff]
    %v3642 = vld [vmem:[%s13] sm:$0x1]
    %v3644 = vlaneseq
    %v3645 = vshrl.u32 %v3644, 7
    %v3646 = vsub.s32 0, %v3645
    %v3647 = vrot.slane %v3642, %v3646
    %v3650 = vsel %vm335, %v3637, 0
    %3652 = vmatprep.subr.mxu0 0.0
    %3653 = vmatpush1.msra.mxu0 %v3638
    %3654 = vmatprep.subr.mxu0 0.0
    %3655 = vmatpush1.msra.mxu0 %v3639
    %3656 = vmatprep.subr.mxu0 0.0
    %3657 = vmatpush1.msra.mxu0 %v3640
    %3658 = vmatprep.subr.mxu0 0.0
    %3659 = vmatpush1.msra.mxu0 %v3641
    %3660 = vmatprep.subr.mxu0 0.0
    %3661 = vmatpush1.msra.mxu0 0.0
    %3662 = vmatprep.subr.mxu0 0.0
    %3663 = vmatpush1.msra.mxu0 0.0
    %3664 = vmatprep.subr.mxu0 0.0
    %3665 = vmatpush1.msra.mxu0 0.0
    %3666 = vmatprep.subr.mxu0 0.0
    %3667 = vmatpush1.msra.mxu0 0.0
    %3668 = vmatprep.subr.mxu0 0.0
    %3669 = vmatpush1.msra.mxu0 0.0
    %3670 = vmatprep.subr.mxu0 0.0
    %3671 = vmatpush1.msra.mxu0 0.0
    %3672 = vmatprep.subr.mxu0 0.0
    %3673 = vmatpush1.msra.mxu0 0.0
    %3674 = vmatprep.subr.mxu0 0.0
    %3675 = vmatpush1.msra.mxu0 0.0
    %3676 = vmatprep.subr.mxu0 0.0
    %3677 = vmatpush1.msra.mxu0 0.0
    %3678 = vmatprep.subr.mxu0 0.0
    %3679 = vmatpush1.msra.mxu0 0.0
    %3680 = vmatprep.subr.mxu0 0.0
    %3681 = vmatpush1.msra.mxu0 0.0
    %3682 = vmatprep.subr.mxu0 0.0
    %3683 = vmatpush1.msra.mxu0 0.0
    %3684 = vmatprep.subr.mxu0 0.0
    %3685 = vmatpush1.msra.mxu0 0.0
    %3686 = vmatprep.subr.mxu0 0.0
    %3687 = vmatpush1.msra.mxu0 0.0
    %3688 = vmatprep.subr.mxu0 0.0
    %3689 = vmatpush1.msra.mxu0 0.0
    %3690 = vmatprep.subr.mxu0 0.0
    %3691 = vmatpush1.msra.mxu0 0.0
    %3692 = vmatprep.subr.mxu0 0.0
    %3693 = vmatpush1.msra.mxu0 0.0
    %3694 = vmatprep.subr.mxu0 0.0
    %3695 = vmatpush1.msra.mxu0 0.0
    %3696 = vmatprep.subr.mxu0 0.0
    %3697 = vmatpush1.msra.mxu0 0.0
    %3698 = vmatprep.subr.mxu0 0.0
    %3699 = vmatpush1.msra.mxu0 0.0
    %3700 = vmatprep.subr.mxu0 0.0
    %3701 = vmatpush1.msra.mxu0 0.0
    %3702 = vmatprep.subr.mxu0 0.0
    %3703 = vmatpush1.msra.mxu0 0.0
    %3704 = vmatprep.subr.mxu0 0.0
    %3705 = vmatpush1.msra.mxu0 0.0
    %3706 = vmatprep.subr.mxu0 0.0
    %3707 = vmatpush1.msra.mxu0 0.0
    %3708 = vmatprep.subr.mxu0 0.0
    %3709 = vmatpush1.msra.mxu0 0.0
    %3710 = vmatprep.subr.mxu0 0.0
    %3711 = vmatpush1.msra.mxu0 0.0
    %3712 = vmatprep.subr.mxu0 0.0
    %3713 = vmatpush1.msra.mxu0 0.0
    %3714 = vmatprep.subr.mxu0 0.0
    %3715 = vmatpush1.msra.mxu0 0.0
    %3716 = vmatprep.mubr.f32.mxu0 0.0
    %3717 = vmatmul.mubr.f32.gmra.mrb[0].mxu0 %v3650
    %v3718 = vpop.f32.mrb[0].mxu0
    %v3719 = vadd.f32 %v3647, %v3718
    %v3720 = vpop.f32.mrb[0].mxu0
    %3721 = vdwg.mxu0
    %3722 = vst.msk [vmem:[#allocation19] sm:$0xff] %vm335, %v3719
    // Predicated region
    $region98: #{tpu_custom_call.1} parent=1 // pred_check
      _
    $region99: #{tpu_custom_call.1} parent=1 // pred_check_branch
      %3724 = sbr.rel (0) target = $region101
    $region100: #{tpu_custom_call.1} parent=1 // pred_region
      %s3726 = ssub.s32 128, 128
      %3727 = vsyncadd [#allocation4], %s3726
      %s3729 = sshll.u32 [#allocation19], 4
      %s3730 = int_to_ptr.vmem [resolvable:$true] %s3729
      %3732 = dma.vmem_to_hbm [thread:$0]  %s3730, 128, %s14, [#allocation4]
    $region101: #{tpu_custom_call.1} parent=1 // pred_fallthru
      _
    // Predicated region
    $region102: #{tpu_custom_call.1} parent=1 // pred_check
      _
    $region103: #{tpu_custom_call.1} parent=1 // pred_check_branch
      %3734 = sbr.rel (0) target = $region105
    $region104: #{tpu_custom_call.1} parent=1 // pred_region
      %3735 = dma.done [#allocation4], 128
    $region105: #{tpu_custom_call.1} parent=1 // pred_fallthru
      _
    %3736 = vsyncpa [#allocation3], 1
    %3737 = vsyncpa [#allocation6], 1
    %3738 = vsyncpa [#allocation9], 1
    %3739 = vsyncpa [#allocation12], 1
    %3740 = vsyncpa [#allocation15], 1
    %3741 = vsyncpa [#allocation18], 1
    %3742 = vsyncpa [#allocation4], 1

</llo_original>
